<compile_context>
chip_gen: v6e
topology: v6e:2x2x1
jax: 0.10.0
libtpu: 0.0.40
codegen_flags: <defaults>
</compile_context>

<pallas_src>
import functools
import math

import jax
import jax.numpy as jnp
from jax.experimental import pallas as pl
from jax.experimental.pallas import tpu as pltpu
from jax.scipy.linalg import expm  # reference check only

_LN2 = 0.6931471805599453
S_MAX = 20       # cap on squarings (per-matrix and per-tile clamps are consistent)
BN = 256         # batch (lane) tile; multiple of 128.  Keep >= 2 tiles on v7x so the
                 # "parallel" axis shards across both TensorCores.
_FACT_INV = [1.0 / math.factorial(k) for k in range(13)]  # degree-12 Taylor coeffs


def _bmm_lane(a, b, hidden):
    """Batched (H, H) matmul with the batch on the lane axis.

    a, b: (C, H, H, BN) f32.  c[ci,i,k,n] = sum_j a[ci,i,j,n]*b[ci,j,k,n], unrolled as H
    lane-dense broadcast-FMAs on the VPU (no tiny masked MXU matmuls).
    """
    out = a[:, :, 0:1, :] * b[:, 0:1, :, :]
    for j in range(1, hidden):
        out = out + a[:, :, j:j + 1, :] * b[:, j:j + 1, :, :]
    return out


def _proj_expm_kernel(nsq_ref, a_ref, dxt_ref, out_ref, *, channels, hidden, s_max):
    """nsq: (n_tiles,) i32 in SMEM (scalar prefetch) = per-tile squaring trip count.
    a:   (C*H*H, K) f32  skew-symmetrized, permuted A (resident across the grid).
    dxt: (K, BN)    f32  dX^T tile (batch on lanes).
    out: (C, H, H, BN) f32.
    """
    C, H = channels, hidden
    bn = dxt_ref.shape[-1]

    # ---- projection on the MXU: (C*H*H, K) @ (K, BN); batch lands on the lane axis ----
    # (K kept un-tiled / resident; for very large input_size add a K grid axis with a
    #  VMEM f32 accumulator.)
    p = jnp.dot(a_ref[...], dxt_ref[...], preferred_element_type=jnp.float32)
    m = p.reshape(C, H, H, bn)              # aligned sublane split (H*H multiple of 8)

    # ---- scaling: s = ceil(log2(max(||AX||_1, 1))) per matrix, exact 2^-s factor ----
    colsum = jnp.sum(jnp.abs(m), axis=1, keepdims=True)        # (C,1,H,bn) sum over rows
    onorm = jnp.max(colsum, axis=2, keepdims=True)             # (C,1,1,bn) max over cols
    s = jnp.clip(jnp.ceil(jnp.log(jnp.maximum(onorm, 1.0)) * (1.0 / _LN2)),
                 0.0, float(s_max))
    s_int = s.astype(jnp.int32)
    # exact power of two via exponent bits: f32 with exponent field (127 - s) is 2^-s
    scale = pltpu.bitcast((127 - s_int) << 23, jnp.float32)
    msc = m * scale                                            # ||msc||_1 <= 1

    # ---- identity from two iota compares (no div/mod), once per tile ----
    row = jax.lax.broadcasted_iota(jnp.int32, (1, H, H, bn), 1)
    col = jax.lax.broadcasted_iota(jnp.int32, (1, H, H, bn), 2)
    eye = jnp.where(row == col, jnp.float32(1.0), jnp.float32(0.0))

    # ---- degree-12 Taylor of exp(msc), Paterson-Stockmeyer: 5 lane-batched matmuls ----
    c = _FACT_INV
    m2 = _bmm_lane(msc, msc, H)
    m3 = _bmm_lane(m2, msc, H)
    m4 = _bmm_lane(m2, m2, H)
    b0 = c[0] * eye + c[1] * msc + c[2] * m2 + c[3] * m3
    b1 = c[4] * eye + c[5] * msc + c[6] * m2 + c[7] * m3
    b2 = c[8] * eye + c[9] * msc + c[10] * m2 + c[11] * m3 + c[12] * m4
    acc = b0 + _bmm_lane(m4, b1 + _bmm_lane(m4, b2, H), H)

    # ---- undo the scaling: square each matrix exactly s times.  Trip count is the
    #      prefetched per-TILE bound; per-matrix exactness via the predicated update.
    #      The result is carried as a value; out_ref is written exactly once. ----
    n_sq = nsq_ref[pl.program_id(0)]

    def sq_body(t, cur):
        sq = _bmm_lane(cur, cur, H)
        return jnp.where(t < s_int, sq, cur)

    res = jax.lax.fori_loop(0, n_sq, sq_body, acc)
    out_ref[...] = res


def prepare_params(A):
    """One-time, parameter-sized prep (cacheable per weight update).

    A: (input_size, channels, H, H) raw Lie-algebra parameter.
    Returns (A_sp, a_norm1, (K, C, H)) where
      A_sp    : (C*H*H, K) f32 skew-symmetrized, kernel-layout A
      a_norm1 : (K, C)     f32 per-(k, c) induced 1-norms for the Hoelder bound
    """
    A = A.astype(jnp.float32)
    K, C, H, H2 = A.shape
    assert H == H2
    A_skew = (A - jnp.swapaxes(A, -1, -2)) * 0.5                  # (K, C, H, H)
    A_sp = jnp.transpose(A_skew, (1, 2, 3, 0)).reshape(C * H * H, K)
    a_norm1 = jnp.max(jnp.sum(jnp.abs(A_skew), axis=-2), axis=-1)  # (K, C)
    return A_sp, a_norm1, (K, C, H)


def orthogonal_projection_forward_prepared(dX, A_sp, a_norm1, channels, hidden, *,
                                           bn=BN, s_max=S_MAX, transpose_out=True):
    dX = dX.astype(jnp.float32)
    N, K = dX.shape
    C, H = channels, hidden
    CHH = C * H * H

    # batch (lane) tile: multiple of 128, clamped so tiny N doesn't over-pad
    bn = int(min(bn, max(128, -(-N // 128) * 128)))
    n_tiles = pl.cdiv(N, bn)
    N_pad = n_tiles * bn
    dXT = jnp.pad(dX.T, ((0, 0), (0, N_pad - N)))                 # (K, N_pad), pad -> I

    # per-tile squaring bound via Hoelder: ||AX[n,c]||_1 <= sum_k |dX[n,k]|*||A_skew[k,c]||_1
    bound_n = jnp.max(jnp.abs(dX) @ a_norm1, axis=-1)             # (N,)
    s_n = jnp.clip(jnp.ceil(jnp.log(jnp.maximum(bound_n, 1.0)) * (1.0 / _LN2)),
                   0.0, float(s_max))
    s_pad = jnp.pad(s_n, (0, N_pad - N))                          # padded rows -> 0
    n_sq = jnp.max(s_pad.reshape(n_tiles, bn), axis=-1).astype(jnp.int32)   # (n_tiles,)

    kernel = functools.partial(_proj_expm_kernel, channels=C, hidden=H, s_max=s_max)

    # VMEM budget: double-buffered dXT & out tiles, resident A, ~10 live (C,H,H,bn) temps
    tile_bytes = 4 * CHH * bn
    vmem_est = 12 * tile_bytes + 8 * K * bn + 8 * CHH * K + (2 << 20)
    vmem_limit = int(min(max(vmem_est, 32 << 20), 64 << 20))      # 64 MiB = v7x physical

    out_t = pl.pallas_call(
        kernel,
        out_shape=jax.ShapeDtypeStruct((C, H, H, N_pad), jnp.float32),
        grid_spec=pltpu.PrefetchScalarGridSpec(
            num_scalar_prefetch=1,
            grid=(n_tiles,),
            in_specs=[
                pl.BlockSpec((CHH, K), lambda i, nsq: (0, 0)),    # A: fetched once, resident
                pl.BlockSpec((K, bn), lambda i, nsq: (0, i)),     # dX^T batch tile
            ],
            out_specs=pl.BlockSpec((C, H, H, bn), lambda i, nsq: (0, 0, 0, i)),
        ),
        compiler_params=pltpu.CompilerParams(
            dimension_semantics=("parallel",),
            vmem_limit_bytes=vmem_limit),
    )(n_sq, A_sp, dXT)

    if not transpose_out:
        return out_t                                               # lane-dense (C,H,H,N_pad)
    # layout plumbing back to the module's (N, C, H, H)
    return jnp.transpose(out_t, (3, 0, 1, 2))[:N]


def orthogonal_projection_forward(dX, A, *, bn=BN, s_max=S_MAX):
    """dX: (N, input_size) f32; A: (input_size, channels, H, H) f32 (raw Lie-algebra param).

    Returns (N, channels, H, H) f32 == matrix_exp(einsum('nk,kcij', dX, (A - A.mT)/2)),
    i.e. the PyTorch module's forward.
    """
    A_sp, a_norm1, (K, C, H) = prepare_params(A)
    assert dX.shape[1] == K
    return orthogonal_projection_forward_prepared(dX, A_sp, a_norm1, C, H,
                                                  bn=bn, s_max=s_max)


if __name__ == "__main__":
    N, input_size, channels, hidden_size = 4, 8, 2, 8

    key = jax.random.PRNGKey(0)
    k_a, k_x = jax.random.split(key)

    # deterministic parameter init mirroring orthogonal_lie_init_(A, normal(std=1)):
    # A[k, c] = (triu(G, 1) - triu(G, 1)^T) / sqrt(2),  G ~ N(0, 1)
    G = jax.random.normal(k_a, (input_size, channels, hidden_size, hidden_size),
                          dtype=jnp.float32)
    upper = jnp.triu(G, 1)
    A = (upper - jnp.swapaxes(upper, -1, -2)) / jnp.sqrt(jnp.float32(2.0))

    dX = jax.random.normal(k_x, (N, input_size), dtype=jnp.float32)

    out = jax.block_until_ready(orthogonal_projection_forward(dX, A))

    # pure-JAX reference for correctness
    A_skew_ref = (A - jnp.swapaxes(A, -1, -2)) * 0.5
    AX = jnp.einsum('nk,kcij->ncij', dX, A_skew_ref)
    ref = jax.vmap(expm)(AX.reshape(-1, hidden_size, hidden_size))
    ref = ref.reshape(N, channels, hidden_size, hidden_size)

    assert out.shape == (N, channels, hidden_size, hidden_size)
    err = float(jnp.max(jnp.abs(out - ref)))
    assert err < 1e-3, f"max abs err {err}"
    print("KERNEL_OK")
</pallas_src>

<mosaic_0001>
module attributes {stable_mosaic.version = 11 : i64} {
  func.func @_proj_expm_kernel(%arg0: i32, %arg1: memref<1xi32, #tpu.memory_space<smem>>, %arg2: memref<128x8xf32, #tpu.memory_space<vmem>>, %arg3: memref<8x128xf32, #tpu.memory_space<vmem>>, %arg4: memref<2x8x8x128xf32, #tpu.memory_space<vmem>>) attributes {dimension_semantics = [#tpu.dimension_semantics<parallel>], iteration_bounds = array<i64: 1>, scalar_prefetch = 1 : i64, scratch_operands = 0 : i64, tpu.core_type = #tpu.core_type<tc>, window_params = [{pipeline_mode = #tpu.pipeline_mode<synchronous>, transform_indices = @transform_0, window_bounds = array<i64: 128, 8>}, {transform_indices = @transform_1, window_bounds = array<i64: 8, 128>}, {transform_indices = @transform_2, window_bounds = array<i64: 2, 8, 8, 128>}]} {
    %c0 = arith.constant 0 : index
    %c0_0 = arith.constant 0 : index
    %0 = vector.load %arg2[%c0, %c0_0] : memref<128x8xf32, #tpu.memory_space<vmem>>, vector<128x8xf32>
    %c0_1 = arith.constant 0 : index
    %c0_2 = arith.constant 0 : index
    %1 = vector.load %arg3[%c0_1, %c0_2] : memref<8x128xf32, #tpu.memory_space<vmem>>, vector<8x128xf32>
    %cst = arith.constant dense<0.000000e+00> : vector<128x128xf32>
    %2 = tpu.matmul %0, %1, %cst {dimension_numbers = #tpu.dot_dimension_numbers<[1], [0], [0], [1], [0, 0, 1, 1], [], []>} : vector<128x8xf32>, vector<8x128xf32>, vector<128x128xf32> -> vector<128x128xf32>
    %3 = vector.shape_cast %2 : vector<128x128xf32> to vector<2x8x8x128xf32>
    %4 = math.absf %3 : vector<2x8x8x128xf32>
    %cst_3 = arith.constant dense<0.000000e+00> : vector<2x8x128xf32>
    %5 = vector.multi_reduction <add>, %4, %cst_3 [1] : vector<2x8x8x128xf32> to vector<2x8x128xf32>
    %6 = vector.shape_cast %5 : vector<2x8x128xf32> to vector<2x1x8x128xf32>
    %cst_4 = arith.constant dense<0xFF800000> : vector<2x1x128xf32>
    %7 = vector.multi_reduction <maximumf>, %6, %cst_4 [2] : vector<2x1x8x128xf32> to vector<2x1x128xf32>
    %8 = vector.shape_cast %7 : vector<2x1x128xf32> to vector<2x1x1x128xf32>
    %cst_5 = arith.constant 1.000000e+00 : f32
    %9 = vector.broadcast %cst_5 : f32 to vector<2x1x1x128xf32>
    %10 = arith.maximumf %8, %9 : vector<2x1x1x128xf32>
    %11 = math.log %10 : vector<2x1x1x128xf32>
    %cst_6 = arith.constant 1.44269502 : f32
    %12 = vector.broadcast %cst_6 : f32 to vector<2x1x1x128xf32>
    %13 = arith.mulf %11, %12 : vector<2x1x1x128xf32>
    %14 = math.ceil %13 : vector<2x1x1x128xf32>
    %cst_7 = arith.constant 0.000000e+00 : f32
    %cst_8 = arith.constant 2.000000e+01 : f32
    %15 = vector.broadcast %cst_7 : f32 to vector<2x1x1x128xf32>
    %16 = arith.maximumf %15, %14 : vector<2x1x1x128xf32>
    %17 = vector.broadcast %cst_8 : f32 to vector<2x1x1x128xf32>
    %18 = arith.minimumf %17, %16 : vector<2x1x1x128xf32>
    %19 = arith.fptosi %18 : vector<2x1x1x128xf32> to vector<2x1x1x128xi32>
    %c127_i32 = arith.constant 127 : i32
    %20 = vector.broadcast %c127_i32 : i32 to vector<2x1x1x128xi32>
    %21 = arith.subi %20, %19 : vector<2x1x1x128xi32>
    %c23_i32 = arith.constant 23 : i32
    %22 = vector.broadcast %c23_i32 : i32 to vector<2x1x1x128xi32>
    %23 = arith.shli %21, %22 : vector<2x1x1x128xi32>
    %24 = tpu.bitcast %23 : vector<2x1x1x128xi32> -> vector<2x1x1x128xf32>
    %25 = vector.broadcast %24 : vector<2x1x1x128xf32> to vector<2x8x8x128xf32>
    %26 = arith.mulf %3, %25 : vector<2x8x8x128xf32>
    %27 = tpu.iota {dimensions = array<i32: 1>} : vector<1x8x8x128xi32>
    %28 = tpu.iota {dimensions = array<i32: 2>} : vector<1x8x8x128xi32>
    %29 = arith.cmpi eq, %27, %28 : vector<1x8x8x128xi32>
    %cst_9 = arith.constant 1.000000e+00 : f32
    %cst_10 = arith.constant 0.000000e+00 : f32
    %30 = vector.broadcast %cst_9 : f32 to vector<1x8x8x128xf32>
    %31 = vector.broadcast %cst_10 : f32 to vector<1x8x8x128xf32>
    %32 = arith.select %29, %30, %31 : vector<1x8x8x128xi1>, vector<1x8x8x128xf32>
    %33 = vector.extract_strided_slice %26 {offsets = [0, 0, 0, 0], sizes = [2, 8, 1, 128], strides = [1, 1, 1, 1]} : vector<2x8x8x128xf32> to vector<2x8x1x128xf32>
    %34 = vector.extract_strided_slice %26 {offsets = [0, 0, 0, 0], sizes = [2, 1, 8, 128], strides = [1, 1, 1, 1]} : vector<2x8x8x128xf32> to vector<2x1x8x128xf32>
    %35 = vector.broadcast %33 : vector<2x8x1x128xf32> to vector<2x8x8x128xf32>
    %36 = vector.broadcast %34 : vector<2x1x8x128xf32> to vector<2x8x8x128xf32>
    %37 = arith.mulf %35, %36 : vector<2x8x8x128xf32>
    %38 = vector.extract_strided_slice %26 {offsets = [0, 0, 1, 0], sizes = [2, 8, 1, 128], strides = [1, 1, 1, 1]} : vector<2x8x8x128xf32> to vector<2x8x1x128xf32>
    %39 = vector.extract_strided_slice %26 {offsets = [0, 1, 0, 0], sizes = [2, 1, 8, 128], strides = [1, 1, 1, 1]} : vector<2x8x8x128xf32> to vector<2x1x8x128xf32>
    %40 = vector.broadcast %38 : vector<2x8x1x128xf32> to vector<2x8x8x128xf32>
    %41 = vector.broadcast %39 : vector<2x1x8x128xf32> to vector<2x8x8x128xf32>
    %42 = arith.mulf %40, %41 : vector<2x8x8x128xf32>
    %43 = arith.addf %37, %42 : vector<2x8x8x128xf32>
    %44 = vector.extract_strided_slice %26 {offsets = [0, 0, 2, 0], sizes = [2, 8, 1, 128], strides = [1, 1, 1, 1]} : vector<2x8x8x128xf32> to vector<2x8x1x128xf32>
    %45 = vector.extract_strided_slice %26 {offsets = [0, 2, 0, 0], sizes = [2, 1, 8, 128], strides = [1, 1, 1, 1]} : vector<2x8x8x128xf32> to vector<2x1x8x128xf32>
    %46 = vector.broadcast %44 : vector<2x8x1x128xf32> to vector<2x8x8x128xf32>
    %47 = vector.broadcast %45 : vector<2x1x8x128xf32> to vector<2x8x8x128xf32>
    %48 = arith.mulf %46, %47 : vector<2x8x8x128xf32>
    %49 = arith.addf %43, %48 : vector<2x8x8x128xf32>
    %50 = vector.extract_strided_slice %26 {offsets = [0, 0, 3, 0], sizes = [2, 8, 1, 128], strides = [1, 1, 1, 1]} : vector<2x8x8x128xf32> to vector<2x8x1x128xf32>
    %51 = vector.extract_strided_slice %26 {offsets = [0, 3, 0, 0], sizes = [2, 1, 8, 128], strides = [1, 1, 1, 1]} : vector<2x8x8x128xf32> to vector<2x1x8x128xf32>
    %52 = vector.broadcast %50 : vector<2x8x1x128xf32> to vector<2x8x8x128xf32>
    %53 = vector.broadcast %51 : vector<2x1x8x128xf32> to vector<2x8x8x128xf32>
    %54 = arith.mulf %52, %53 : vector<2x8x8x128xf32>
    %55 = arith.addf %49, %54 : vector<2x8x8x128xf32>
    %56 = vector.extract_strided_slice %26 {offsets = [0, 0, 4, 0], sizes = [2, 8, 1, 128], strides = [1, 1, 1, 1]} : vector<2x8x8x128xf32> to vector<2x8x1x128xf32>
    %57 = vector.extract_strided_slice %26 {offsets = [0, 4, 0, 0], sizes = [2, 1, 8, 128], strides = [1, 1, 1, 1]} : vector<2x8x8x128xf32> to vector<2x1x8x128xf32>
    %58 = vector.broadcast %56 : vector<2x8x1x128xf32> to vector<2x8x8x128xf32>
    %59 = vector.broadcast %57 : vector<2x1x8x128xf32> to vector<2x8x8x128xf32>
    %60 = arith.mulf %58, %59 : vector<2x8x8x128xf32>
    %61 = arith.addf %55, %60 : vector<2x8x8x128xf32>
    %62 = vector.extract_strided_slice %26 {offsets = [0, 0, 5, 0], sizes = [2, 8, 1, 128], strides = [1, 1, 1, 1]} : vector<2x8x8x128xf32> to vector<2x8x1x128xf32>
    %63 = vector.extract_strided_slice %26 {offsets = [0, 5, 0, 0], sizes = [2, 1, 8, 128], strides = [1, 1, 1, 1]} : vector<2x8x8x128xf32> to vector<2x1x8x128xf32>
    %64 = vector.broadcast %62 : vector<2x8x1x128xf32> to vector<2x8x8x128xf32>
    %65 = vector.broadcast %63 : vector<2x1x8x128xf32> to vector<2x8x8x128xf32>
    %66 = arith.mulf %64, %65 : vector<2x8x8x128xf32>
    %67 = arith.addf %61, %66 : vector<2x8x8x128xf32>
    %68 = vector.extract_strided_slice %26 {offsets = [0, 0, 6, 0], sizes = [2, 8, 1, 128], strides = [1, 1, 1, 1]} : vector<2x8x8x128xf32> to vector<2x8x1x128xf32>
    %69 = vector.extract_strided_slice %26 {offsets = [0, 6, 0, 0], sizes = [2, 1, 8, 128], strides = [1, 1, 1, 1]} : vector<2x8x8x128xf32> to vector<2x1x8x128xf32>
    %70 = vector.broadcast %68 : vector<2x8x1x128xf32> to vector<2x8x8x128xf32>
    %71 = vector.broadcast %69 : vector<2x1x8x128xf32> to vector<2x8x8x128xf32>
    %72 = arith.mulf %70, %71 : vector<2x8x8x128xf32>
    %73 = arith.addf %67, %72 : vector<2x8x8x128xf32>
    %74 = vector.extract_strided_slice %26 {offsets = [0, 0, 7, 0], sizes = [2, 8, 1, 128], strides = [1, 1, 1, 1]} : vector<2x8x8x128xf32> to vector<2x8x1x128xf32>
    %75 = vector.extract_strided_slice %26 {offsets = [0, 7, 0, 0], sizes = [2, 1, 8, 128], strides = [1, 1, 1, 1]} : vector<2x8x8x128xf32> to vector<2x1x8x128xf32>
    %76 = vector.broadcast %74 : vector<2x8x1x128xf32> to vector<2x8x8x128xf32>
    %77 = vector.broadcast %75 : vector<2x1x8x128xf32> to vector<2x8x8x128xf32>
    %78 = arith.mulf %76, %77 : vector<2x8x8x128xf32>
    %79 = arith.addf %73, %78 : vector<2x8x8x128xf32>
    %80 = vector.extract_strided_slice %79 {offsets = [0, 0, 0, 0], sizes = [2, 8, 1, 128], strides = [1, 1, 1, 1]} : vector<2x8x8x128xf32> to vector<2x8x1x128xf32>
    %81 = vector.extract_strided_slice %26 {offsets = [0, 0, 0, 0], sizes = [2, 1, 8, 128], strides = [1, 1, 1, 1]} : vector<2x8x8x128xf32> to vector<2x1x8x128xf32>
    %82 = vector.broadcast %80 : vector<2x8x1x128xf32> to vector<2x8x8x128xf32>
    %83 = vector.broadcast %81 : vector<2x1x8x128xf32> to vector<2x8x8x128xf32>
    %84 = arith.mulf %82, %83 : vector<2x8x8x128xf32>
    %85 = vector.extract_strided_slice %79 {offsets = [0, 0, 1, 0], sizes = [2, 8, 1, 128], strides = [1, 1, 1, 1]} : vector<2x8x8x128xf32> to vector<2x8x1x128xf32>
    %86 = vector.extract_strided_slice %26 {offsets = [0, 1, 0, 0], sizes = [2, 1, 8, 128], strides = [1, 1, 1, 1]} : vector<2x8x8x128xf32> to vector<2x1x8x128xf32>
    %87 = vector.broadcast %85 : vector<2x8x1x128xf32> to vector<2x8x8x128xf32>
    %88 = vector.broadcast %86 : vector<2x1x8x128xf32> to vector<2x8x8x128xf32>
    %89 = arith.mulf %87, %88 : vector<2x8x8x128xf32>
    %90 = arith.addf %84, %89 : vector<2x8x8x128xf32>
    %91 = vector.extract_strided_slice %79 {offsets = [0, 0, 2, 0], sizes = [2, 8, 1, 128], strides = [1, 1, 1, 1]} : vector<2x8x8x128xf32> to vector<2x8x1x128xf32>
    %92 = vector.extract_strided_slice %26 {offsets = [0, 2, 0, 0], sizes = [2, 1, 8, 128], strides = [1, 1, 1, 1]} : vector<2x8x8x128xf32> to vector<2x1x8x128xf32>
    %93 = vector.broadcast %91 : vector<2x8x1x128xf32> to vector<2x8x8x128xf32>
    %94 = vector.broadcast %92 : vector<2x1x8x128xf32> to vector<2x8x8x128xf32>
    %95 = arith.mulf %93, %94 : vector<2x8x8x128xf32>
    %96 = arith.addf %90, %95 : vector<2x8x8x128xf32>
    %97 = vector.extract_strided_slice %79 {offsets = [0, 0, 3, 0], sizes = [2, 8, 1, 128], strides = [1, 1, 1, 1]} : vector<2x8x8x128xf32> to vector<2x8x1x128xf32>
    %98 = vector.extract_strided_slice %26 {offsets = [0, 3, 0, 0], sizes = [2, 1, 8, 128], strides = [1, 1, 1, 1]} : vector<2x8x8x128xf32> to vector<2x1x8x128xf32>
    %99 = vector.broadcast %97 : vector<2x8x1x128xf32> to vector<2x8x8x128xf32>
    %100 = vector.broadcast %98 : vector<2x1x8x128xf32> to vector<2x8x8x128xf32>
    %101 = arith.mulf %99, %100 : vector<2x8x8x128xf32>
    %102 = arith.addf %96, %101 : vector<2x8x8x128xf32>
    %103 = vector.extract_strided_slice %79 {offsets = [0, 0, 4, 0], sizes = [2, 8, 1, 128], strides = [1, 1, 1, 1]} : vector<2x8x8x128xf32> to vector<2x8x1x128xf32>
    %104 = vector.extract_strided_slice %26 {offsets = [0, 4, 0, 0], sizes = [2, 1, 8, 128], strides = [1, 1, 1, 1]} : vector<2x8x8x128xf32> to vector<2x1x8x128xf32>
    %105 = vector.broadcast %103 : vector<2x8x1x128xf32> to vector<2x8x8x128xf32>
    %106 = vector.broadcast %104 : vector<2x1x8x128xf32> to vector<2x8x8x128xf32>
    %107 = arith.mulf %105, %106 : vector<2x8x8x128xf32>
    %108 = arith.addf %102, %107 : vector<2x8x8x128xf32>
    %109 = vector.extract_strided_slice %79 {offsets = [0, 0, 5, 0], sizes = [2, 8, 1, 128], strides = [1, 1, 1, 1]} : vector<2x8x8x128xf32> to vector<2x8x1x128xf32>
    %110 = vector.extract_strided_slice %26 {offsets = [0, 5, 0, 0], sizes = [2, 1, 8, 128], strides = [1, 1, 1, 1]} : vector<2x8x8x128xf32> to vector<2x1x8x128xf32>
    %111 = vector.broadcast %109 : vector<2x8x1x128xf32> to vector<2x8x8x128xf32>
    %112 = vector.broadcast %110 : vector<2x1x8x128xf32> to vector<2x8x8x128xf32>
    %113 = arith.mulf %111, %112 : vector<2x8x8x128xf32>
    %114 = arith.addf %108, %113 : vector<2x8x8x128xf32>
    %115 = vector.extract_strided_slice %79 {offsets = [0, 0, 6, 0], sizes = [2, 8, 1, 128], strides = [1, 1, 1, 1]} : vector<2x8x8x128xf32> to vector<2x8x1x128xf32>
    %116 = vector.extract_strided_slice %26 {offsets = [0, 6, 0, 0], sizes = [2, 1, 8, 128], strides = [1, 1, 1, 1]} : vector<2x8x8x128xf32> to vector<2x1x8x128xf32>
    %117 = vector.broadcast %115 : vector<2x8x1x128xf32> to vector<2x8x8x128xf32>
    %118 = vector.broadcast %116 : vector<2x1x8x128xf32> to vector<2x8x8x128xf32>
    %119 = arith.mulf %117, %118 : vector<2x8x8x128xf32>
    %120 = arith.addf %114, %119 : vector<2x8x8x128xf32>
    %121 = vector.extract_strided_slice %79 {offsets = [0, 0, 7, 0], sizes = [2, 8, 1, 128], strides = [1, 1, 1, 1]} : vector<2x8x8x128xf32> to vector<2x8x1x128xf32>
    %122 = vector.extract_strided_slice %26 {offsets = [0, 7, 0, 0], sizes = [2, 1, 8, 128], strides = [1, 1, 1, 1]} : vector<2x8x8x128xf32> to vector<2x1x8x128xf32>
    %123 = vector.broadcast %121 : vector<2x8x1x128xf32> to vector<2x8x8x128xf32>
    %124 = vector.broadcast %122 : vector<2x1x8x128xf32> to vector<2x8x8x128xf32>
    %125 = arith.mulf %123, %124 : vector<2x8x8x128xf32>
    %126 = arith.addf %120, %125 : vector<2x8x8x128xf32>
    %127 = vector.extract_strided_slice %79 {offsets = [0, 0, 0, 0], sizes = [2, 8, 1, 128], strides = [1, 1, 1, 1]} : vector<2x8x8x128xf32> to vector<2x8x1x128xf32>
    %128 = vector.extract_strided_slice %79 {offsets = [0, 0, 0, 0], sizes = [2, 1, 8, 128], strides = [1, 1, 1, 1]} : vector<2x8x8x128xf32> to vector<2x1x8x128xf32>
    %129 = vector.broadcast %127 : vector<2x8x1x128xf32> to vector<2x8x8x128xf32>
    %130 = vector.broadcast %128 : vector<2x1x8x128xf32> to vector<2x8x8x128xf32>
    %131 = arith.mulf %129, %130 : vector<2x8x8x128xf32>
    %132 = vector.extract_strided_slice %79 {offsets = [0, 0, 1, 0], sizes = [2, 8, 1, 128], strides = [1, 1, 1, 1]} : vector<2x8x8x128xf32> to vector<2x8x1x128xf32>
    %133 = vector.extract_strided_slice %79 {offsets = [0, 1, 0, 0], sizes = [2, 1, 8, 128], strides = [1, 1, 1, 1]} : vector<2x8x8x128xf32> to vector<2x1x8x128xf32>
    %134 = vector.broadcast %132 : vector<2x8x1x128xf32> to vector<2x8x8x128xf32>
    %135 = vector.broadcast %133 : vector<2x1x8x128xf32> to vector<2x8x8x128xf32>
    %136 = arith.mulf %134, %135 : vector<2x8x8x128xf32>
    %137 = arith.addf %131, %136 : vector<2x8x8x128xf32>
    %138 = vector.extract_strided_slice %79 {offsets = [0, 0, 2, 0], sizes = [2, 8, 1, 128], strides = [1, 1, 1, 1]} : vector<2x8x8x128xf32> to vector<2x8x1x128xf32>
    %139 = vector.extract_strided_slice %79 {offsets = [0, 2, 0, 0], sizes = [2, 1, 8, 128], strides = [1, 1, 1, 1]} : vector<2x8x8x128xf32> to vector<2x1x8x128xf32>
    %140 = vector.broadcast %138 : vector<2x8x1x128xf32> to vector<2x8x8x128xf32>
    %141 = vector.broadcast %139 : vector<2x1x8x128xf32> to vector<2x8x8x128xf32>
    %142 = arith.mulf %140, %141 : vector<2x8x8x128xf32>
    %143 = arith.addf %137, %142 : vector<2x8x8x128xf32>
    %144 = vector.extract_strided_slice %79 {offsets = [0, 0, 3, 0], sizes = [2, 8, 1, 128], strides = [1, 1, 1, 1]} : vector<2x8x8x128xf32> to vector<2x8x1x128xf32>
    %145 = vector.extract_strided_slice %79 {offsets = [0, 3, 0, 0], sizes = [2, 1, 8, 128], strides = [1, 1, 1, 1]} : vector<2x8x8x128xf32> to vector<2x1x8x128xf32>
    %146 = vector.broadcast %144 : vector<2x8x1x128xf32> to vector<2x8x8x128xf32>
    %147 = vector.broadcast %145 : vector<2x1x8x128xf32> to vector<2x8x8x128xf32>
    %148 = arith.mulf %146, %147 : vector<2x8x8x128xf32>
    %149 = arith.addf %143, %148 : vector<2x8x8x128xf32>
    %150 = vector.extract_strided_slice %79 {offsets = [0, 0, 4, 0], sizes = [2, 8, 1, 128], strides = [1, 1, 1, 1]} : vector<2x8x8x128xf32> to vector<2x8x1x128xf32>
    %151 = vector.extract_strided_slice %79 {offsets = [0, 4, 0, 0], sizes = [2, 1, 8, 128], strides = [1, 1, 1, 1]} : vector<2x8x8x128xf32> to vector<2x1x8x128xf32>
    %152 = vector.broadcast %150 : vector<2x8x1x128xf32> to vector<2x8x8x128xf32>
    %153 = vector.broadcast %151 : vector<2x1x8x128xf32> to vector<2x8x8x128xf32>
    %154 = arith.mulf %152, %153 : vector<2x8x8x128xf32>
    %155 = arith.addf %149, %154 : vector<2x8x8x128xf32>
    %156 = vector.extract_strided_slice %79 {offsets = [0, 0, 5, 0], sizes = [2, 8, 1, 128], strides = [1, 1, 1, 1]} : vector<2x8x8x128xf32> to vector<2x8x1x128xf32>
    %157 = vector.extract_strided_slice %79 {offsets = [0, 5, 0, 0], sizes = [2, 1, 8, 128], strides = [1, 1, 1, 1]} : vector<2x8x8x128xf32> to vector<2x1x8x128xf32>
    %158 = vector.broadcast %156 : vector<2x8x1x128xf32> to vector<2x8x8x128xf32>
    %159 = vector.broadcast %157 : vector<2x1x8x128xf32> to vector<2x8x8x128xf32>
    %160 = arith.mulf %158, %159 : vector<2x8x8x128xf32>
    %161 = arith.addf %155, %160 : vector<2x8x8x128xf32>
    %162 = vector.extract_strided_slice %79 {offsets = [0, 0, 6, 0], sizes = [2, 8, 1, 128], strides = [1, 1, 1, 1]} : vector<2x8x8x128xf32> to vector<2x8x1x128xf32>
    %163 = vector.extract_strided_slice %79 {offsets = [0, 6, 0, 0], sizes = [2, 1, 8, 128], strides = [1, 1, 1, 1]} : vector<2x8x8x128xf32> to vector<2x1x8x128xf32>
    %164 = vector.broadcast %162 : vector<2x8x1x128xf32> to vector<2x8x8x128xf32>
    %165 = vector.broadcast %163 : vector<2x1x8x128xf32> to vector<2x8x8x128xf32>
    %166 = arith.mulf %164, %165 : vector<2x8x8x128xf32>
    %167 = arith.addf %161, %166 : vector<2x8x8x128xf32>
    %168 = vector.extract_strided_slice %79 {offsets = [0, 0, 7, 0], sizes = [2, 8, 1, 128], strides = [1, 1, 1, 1]} : vector<2x8x8x128xf32> to vector<2x8x1x128xf32>
    %169 = vector.extract_strided_slice %79 {offsets = [0, 7, 0, 0], sizes = [2, 1, 8, 128], strides = [1, 1, 1, 1]} : vector<2x8x8x128xf32> to vector<2x1x8x128xf32>
    %170 = vector.broadcast %168 : vector<2x8x1x128xf32> to vector<2x8x8x128xf32>
    %171 = vector.broadcast %169 : vector<2x1x8x128xf32> to vector<2x8x8x128xf32>
    %172 = arith.mulf %170, %171 : vector<2x8x8x128xf32>
    %173 = arith.addf %167, %172 : vector<2x8x8x128xf32>
    %cst_11 = arith.constant 1.000000e+00 : f32
    %174 = vector.broadcast %cst_11 : f32 to vector<1x8x8x128xf32>
    %175 = arith.mulf %174, %32 : vector<1x8x8x128xf32>
    %cst_12 = arith.constant 1.000000e+00 : f32
    %176 = vector.broadcast %cst_12 : f32 to vector<2x8x8x128xf32>
    %177 = arith.mulf %176, %26 : vector<2x8x8x128xf32>
    %178 = vector.broadcast %175 : vector<1x8x8x128xf32> to vector<2x8x8x128xf32>
    %179 = arith.addf %178, %177 : vector<2x8x8x128xf32>
    %cst_13 = arith.constant 5.000000e-01 : f32
    %180 = vector.broadcast %cst_13 : f32 to vector<2x8x8x128xf32>
    %181 = arith.mulf %180, %79 : vector<2x8x8x128xf32>
    %182 = arith.addf %179, %181 : vector<2x8x8x128xf32>
    %cst_14 = arith.constant 0.166666672 : f32
    %183 = vector.broadcast %cst_14 : f32 to vector<2x8x8x128xf32>
    %184 = arith.mulf %183, %126 : vector<2x8x8x128xf32>
    %185 = arith.addf %182, %184 : vector<2x8x8x128xf32>
    %cst_15 = arith.constant 0.0416666679 : f32
    %186 = vector.broadcast %cst_15 : f32 to vector<1x8x8x128xf32>
    %187 = arith.mulf %186, %32 : vector<1x8x8x128xf32>
    %cst_16 = arith.constant 0.00833333377 : f32
    %188 = vector.broadcast %cst_16 : f32 to vector<2x8x8x128xf32>
    %189 = arith.mulf %188, %26 : vector<2x8x8x128xf32>
    %190 = vector.broadcast %187 : vector<1x8x8x128xf32> to vector<2x8x8x128xf32>
    %191 = arith.addf %190, %189 : vector<2x8x8x128xf32>
    %cst_17 = arith.constant 0.00138888892 : f32
    %192 = vector.broadcast %cst_17 : f32 to vector<2x8x8x128xf32>
    %193 = arith.mulf %192, %79 : vector<2x8x8x128xf32>
    %194 = arith.addf %191, %193 : vector<2x8x8x128xf32>
    %cst_18 = arith.constant 1.98412701E-4 : f32
    %195 = vector.broadcast %cst_18 : f32 to vector<2x8x8x128xf32>
    %196 = arith.mulf %195, %126 : vector<2x8x8x128xf32>
    %197 = arith.addf %194, %196 : vector<2x8x8x128xf32>
    %cst_19 = arith.constant 2.48015876E-5 : f32
    %198 = vector.broadcast %cst_19 : f32 to vector<1x8x8x128xf32>
    %199 = arith.mulf %198, %32 : vector<1x8x8x128xf32>
    %cst_20 = arith.constant 2.75573188E-6 : f32
    %200 = vector.broadcast %cst_20 : f32 to vector<2x8x8x128xf32>
    %201 = arith.mulf %200, %26 : vector<2x8x8x128xf32>
    %202 = vector.broadcast %199 : vector<1x8x8x128xf32> to vector<2x8x8x128xf32>
    %203 = arith.addf %202, %201 : vector<2x8x8x128xf32>
    %cst_21 = arith.constant 2.755732E-7 : f32
    %204 = vector.broadcast %cst_21 : f32 to vector<2x8x8x128xf32>
    %205 = arith.mulf %204, %79 : vector<2x8x8x128xf32>
    %206 = arith.addf %203, %205 : vector<2x8x8x128xf32>
    %cst_22 = arith.constant 2.50521079E-8 : f32
    %207 = vector.broadcast %cst_22 : f32 to vector<2x8x8x128xf32>
    %208 = arith.mulf %207, %126 : vector<2x8x8x128xf32>
    %209 = arith.addf %206, %208 : vector<2x8x8x128xf32>
    %cst_23 = arith.constant 2.08767559E-9 : f32
    %210 = vector.broadcast %cst_23 : f32 to vector<2x8x8x128xf32>
    %211 = arith.mulf %210, %173 : vector<2x8x8x128xf32>
    %212 = arith.addf %209, %211 : vector<2x8x8x128xf32>
    %213 = vector.extract_strided_slice %173 {offsets = [0, 0, 0, 0], sizes = [2, 8, 1, 128], strides = [1, 1, 1, 1]} : vector<2x8x8x128xf32> to vector<2x8x1x128xf32>
    %214 = vector.extract_strided_slice %212 {offsets = [0, 0, 0, 0], sizes = [2, 1, 8, 128], strides = [1, 1, 1, 1]} : vector<2x8x8x128xf32> to vector<2x1x8x128xf32>
    %215 = vector.broadcast %213 : vector<2x8x1x128xf32> to vector<2x8x8x128xf32>
    %216 = vector.broadcast %214 : vector<2x1x8x128xf32> to vector<2x8x8x128xf32>
    %217 = arith.mulf %215, %216 : vector<2x8x8x128xf32>
    %218 = vector.extract_strided_slice %173 {offsets = [0, 0, 1, 0], sizes = [2, 8, 1, 128], strides = [1, 1, 1, 1]} : vector<2x8x8x128xf32> to vector<2x8x1x128xf32>
    %219 = vector.extract_strided_slice %212 {offsets = [0, 1, 0, 0], sizes = [2, 1, 8, 128], strides = [1, 1, 1, 1]} : vector<2x8x8x128xf32> to vector<2x1x8x128xf32>
    %220 = vector.broadcast %218 : vector<2x8x1x128xf32> to vector<2x8x8x128xf32>
    %221 = vector.broadcast %219 : vector<2x1x8x128xf32> to vector<2x8x8x128xf32>
    %222 = arith.mulf %220, %221 : vector<2x8x8x128xf32>
    %223 = arith.addf %217, %222 : vector<2x8x8x128xf32>
    %224 = vector.extract_strided_slice %173 {offsets = [0, 0, 2, 0], sizes = [2, 8, 1, 128], strides = [1, 1, 1, 1]} : vector<2x8x8x128xf32> to vector<2x8x1x128xf32>
    %225 = vector.extract_strided_slice %212 {offsets = [0, 2, 0, 0], sizes = [2, 1, 8, 128], strides = [1, 1, 1, 1]} : vector<2x8x8x128xf32> to vector<2x1x8x128xf32>
    %226 = vector.broadcast %224 : vector<2x8x1x128xf32> to vector<2x8x8x128xf32>
    %227 = vector.broadcast %225 : vector<2x1x8x128xf32> to vector<2x8x8x128xf32>
    %228 = arith.mulf %226, %227 : vector<2x8x8x128xf32>
    %229 = arith.addf %223, %228 : vector<2x8x8x128xf32>
    %230 = vector.extract_strided_slice %173 {offsets = [0, 0, 3, 0], sizes = [2, 8, 1, 128], strides = [1, 1, 1, 1]} : vector<2x8x8x128xf32> to vector<2x8x1x128xf32>
    %231 = vector.extract_strided_slice %212 {offsets = [0, 3, 0, 0], sizes = [2, 1, 8, 128], strides = [1, 1, 1, 1]} : vector<2x8x8x128xf32> to vector<2x1x8x128xf32>
    %232 = vector.broadcast %230 : vector<2x8x1x128xf32> to vector<2x8x8x128xf32>
    %233 = vector.broadcast %231 : vector<2x1x8x128xf32> to vector<2x8x8x128xf32>
    %234 = arith.mulf %232, %233 : vector<2x8x8x128xf32>
    %235 = arith.addf %229, %234 : vector<2x8x8x128xf32>
    %236 = vector.extract_strided_slice %173 {offsets = [0, 0, 4, 0], sizes = [2, 8, 1, 128], strides = [1, 1, 1, 1]} : vector<2x8x8x128xf32> to vector<2x8x1x128xf32>
    %237 = vector.extract_strided_slice %212 {offsets = [0, 4, 0, 0], sizes = [2, 1, 8, 128], strides = [1, 1, 1, 1]} : vector<2x8x8x128xf32> to vector<2x1x8x128xf32>
    %238 = vector.broadcast %236 : vector<2x8x1x128xf32> to vector<2x8x8x128xf32>
    %239 = vector.broadcast %237 : vector<2x1x8x128xf32> to vector<2x8x8x128xf32>
    %240 = arith.mulf %238, %239 : vector<2x8x8x128xf32>
    %241 = arith.addf %235, %240 : vector<2x8x8x128xf32>
    %242 = vector.extract_strided_slice %173 {offsets = [0, 0, 5, 0], sizes = [2, 8, 1, 128], strides = [1, 1, 1, 1]} : vector<2x8x8x128xf32> to vector<2x8x1x128xf32>
    %243 = vector.extract_strided_slice %212 {offsets = [0, 5, 0, 0], sizes = [2, 1, 8, 128], strides = [1, 1, 1, 1]} : vector<2x8x8x128xf32> to vector<2x1x8x128xf32>
    %244 = vector.broadcast %242 : vector<2x8x1x128xf32> to vector<2x8x8x128xf32>
    %245 = vector.broadcast %243 : vector<2x1x8x128xf32> to vector<2x8x8x128xf32>
    %246 = arith.mulf %244, %245 : vector<2x8x8x128xf32>
    %247 = arith.addf %241, %246 : vector<2x8x8x128xf32>
    %248 = vector.extract_strided_slice %173 {offsets = [0, 0, 6, 0], sizes = [2, 8, 1, 128], strides = [1, 1, 1, 1]} : vector<2x8x8x128xf32> to vector<2x8x1x128xf32>
    %249 = vector.extract_strided_slice %212 {offsets = [0, 6, 0, 0], sizes = [2, 1, 8, 128], strides = [1, 1, 1, 1]} : vector<2x8x8x128xf32> to vector<2x1x8x128xf32>
    %250 = vector.broadcast %248 : vector<2x8x1x128xf32> to vector<2x8x8x128xf32>
    %251 = vector.broadcast %249 : vector<2x1x8x128xf32> to vector<2x8x8x128xf32>
    %252 = arith.mulf %250, %251 : vector<2x8x8x128xf32>
    %253 = arith.addf %247, %252 : vector<2x8x8x128xf32>
    %254 = vector.extract_strided_slice %173 {offsets = [0, 0, 7, 0], sizes = [2, 8, 1, 128], strides = [1, 1, 1, 1]} : vector<2x8x8x128xf32> to vector<2x8x1x128xf32>
    %255 = vector.extract_strided_slice %212 {offsets = [0, 7, 0, 0], sizes = [2, 1, 8, 128], strides = [1, 1, 1, 1]} : vector<2x8x8x128xf32> to vector<2x1x8x128xf32>
    %256 = vector.broadcast %254 : vector<2x8x1x128xf32> to vector<2x8x8x128xf32>
    %257 = vector.broadcast %255 : vector<2x1x8x128xf32> to vector<2x8x8x128xf32>
    %258 = arith.mulf %256, %257 : vector<2x8x8x128xf32>
    %259 = arith.addf %253, %258 : vector<2x8x8x128xf32>
    %260 = arith.addf %197, %259 : vector<2x8x8x128xf32>
    %261 = vector.extract_strided_slice %173 {offsets = [0, 0, 0, 0], sizes = [2, 8, 1, 128], strides = [1, 1, 1, 1]} : vector<2x8x8x128xf32> to vector<2x8x1x128xf32>
    %262 = vector.extract_strided_slice %260 {offsets = [0, 0, 0, 0], sizes = [2, 1, 8, 128], strides = [1, 1, 1, 1]} : vector<2x8x8x128xf32> to vector<2x1x8x128xf32>
    %263 = vector.broadcast %261 : vector<2x8x1x128xf32> to vector<2x8x8x128xf32>
    %264 = vector.broadcast %262 : vector<2x1x8x128xf32> to vector<2x8x8x128xf32>
    %265 = arith.mulf %263, %264 : vector<2x8x8x128xf32>
    %266 = vector.extract_strided_slice %173 {offsets = [0, 0, 1, 0], sizes = [2, 8, 1, 128], strides = [1, 1, 1, 1]} : vector<2x8x8x128xf32> to vector<2x8x1x128xf32>
    %267 = vector.extract_strided_slice %260 {offsets = [0, 1, 0, 0], sizes = [2, 1, 8, 128], strides = [1, 1, 1, 1]} : vector<2x8x8x128xf32> to vector<2x1x8x128xf32>
    %268 = vector.broadcast %266 : vector<2x8x1x128xf32> to vector<2x8x8x128xf32>
    %269 = vector.broadcast %267 : vector<2x1x8x128xf32> to vector<2x8x8x128xf32>
    %270 = arith.mulf %268, %269 : vector<2x8x8x128xf32>
    %271 = arith.addf %265, %270 : vector<2x8x8x128xf32>
    %272 = vector.extract_strided_slice %173 {offsets = [0, 0, 2, 0], sizes = [2, 8, 1, 128], strides = [1, 1, 1, 1]} : vector<2x8x8x128xf32> to vector<2x8x1x128xf32>
    %273 = vector.extract_strided_slice %260 {offsets = [0, 2, 0, 0], sizes = [2, 1, 8, 128], strides = [1, 1, 1, 1]} : vector<2x8x8x128xf32> to vector<2x1x8x128xf32>
    %274 = vector.broadcast %272 : vector<2x8x1x128xf32> to vector<2x8x8x128xf32>
    %275 = vector.broadcast %273 : vector<2x1x8x128xf32> to vector<2x8x8x128xf32>
    %276 = arith.mulf %274, %275 : vector<2x8x8x128xf32>
    %277 = arith.addf %271, %276 : vector<2x8x8x128xf32>
    %278 = vector.extract_strided_slice %173 {offsets = [0, 0, 3, 0], sizes = [2, 8, 1, 128], strides = [1, 1, 1, 1]} : vector<2x8x8x128xf32> to vector<2x8x1x128xf32>
    %279 = vector.extract_strided_slice %260 {offsets = [0, 3, 0, 0], sizes = [2, 1, 8, 128], strides = [1, 1, 1, 1]} : vector<2x8x8x128xf32> to vector<2x1x8x128xf32>
    %280 = vector.broadcast %278 : vector<2x8x1x128xf32> to vector<2x8x8x128xf32>
    %281 = vector.broadcast %279 : vector<2x1x8x128xf32> to vector<2x8x8x128xf32>
    %282 = arith.mulf %280, %281 : vector<2x8x8x128xf32>
    %283 = arith.addf %277, %282 : vector<2x8x8x128xf32>
    %284 = vector.extract_strided_slice %173 {offsets = [0, 0, 4, 0], sizes = [2, 8, 1, 128], strides = [1, 1, 1, 1]} : vector<2x8x8x128xf32> to vector<2x8x1x128xf32>
    %285 = vector.extract_strided_slice %260 {offsets = [0, 4, 0, 0], sizes = [2, 1, 8, 128], strides = [1, 1, 1, 1]} : vector<2x8x8x128xf32> to vector<2x1x8x128xf32>
    %286 = vector.broadcast %284 : vector<2x8x1x128xf32> to vector<2x8x8x128xf32>
    %287 = vector.broadcast %285 : vector<2x1x8x128xf32> to vector<2x8x8x128xf32>
    %288 = arith.mulf %286, %287 : vector<2x8x8x128xf32>
    %289 = arith.addf %283, %288 : vector<2x8x8x128xf32>
    %290 = vector.extract_strided_slice %173 {offsets = [0, 0, 5, 0], sizes = [2, 8, 1, 128], strides = [1, 1, 1, 1]} : vector<2x8x8x128xf32> to vector<2x8x1x128xf32>
    %291 = vector.extract_strided_slice %260 {offsets = [0, 5, 0, 0], sizes = [2, 1, 8, 128], strides = [1, 1, 1, 1]} : vector<2x8x8x128xf32> to vector<2x1x8x128xf32>
    %292 = vector.broadcast %290 : vector<2x8x1x128xf32> to vector<2x8x8x128xf32>
    %293 = vector.broadcast %291 : vector<2x1x8x128xf32> to vector<2x8x8x128xf32>
    %294 = arith.mulf %292, %293 : vector<2x8x8x128xf32>
    %295 = arith.addf %289, %294 : vector<2x8x8x128xf32>
    %296 = vector.extract_strided_slice %173 {offsets = [0, 0, 6, 0], sizes = [2, 8, 1, 128], strides = [1, 1, 1, 1]} : vector<2x8x8x128xf32> to vector<2x8x1x128xf32>
    %297 = vector.extract_strided_slice %260 {offsets = [0, 6, 0, 0], sizes = [2, 1, 8, 128], strides = [1, 1, 1, 1]} : vector<2x8x8x128xf32> to vector<2x1x8x128xf32>
    %298 = vector.broadcast %296 : vector<2x8x1x128xf32> to vector<2x8x8x128xf32>
    %299 = vector.broadcast %297 : vector<2x1x8x128xf32> to vector<2x8x8x128xf32>
    %300 = arith.mulf %298, %299 : vector<2x8x8x128xf32>
    %301 = arith.addf %295, %300 : vector<2x8x8x128xf32>
    %302 = vector.extract_strided_slice %173 {offsets = [0, 0, 7, 0], sizes = [2, 8, 1, 128], strides = [1, 1, 1, 1]} : vector<2x8x8x128xf32> to vector<2x8x1x128xf32>
    %303 = vector.extract_strided_slice %260 {offsets = [0, 7, 0, 0], sizes = [2, 1, 8, 128], strides = [1, 1, 1, 1]} : vector<2x8x8x128xf32> to vector<2x1x8x128xf32>
    %304 = vector.broadcast %302 : vector<2x8x1x128xf32> to vector<2x8x8x128xf32>
    %305 = vector.broadcast %303 : vector<2x1x8x128xf32> to vector<2x8x8x128xf32>
    %306 = arith.mulf %304, %305 : vector<2x8x8x128xf32>
    %307 = arith.addf %301, %306 : vector<2x8x8x128xf32>
    %308 = arith.addf %185, %307 : vector<2x8x8x128xf32>
    %309 = arith.index_cast %arg0 : i32 to index
    %310 = memref.load %arg1[%309] : memref<1xi32, #tpu.memory_space<smem>>
    %c0_i32 = arith.constant 0 : i32
    %311 = arith.subi %310, %c0_i32 : i32
    %312 = arith.addi %c0_i32, %311 : i32
    %c1_i32 = arith.constant 1 : i32
    %313 = scf.for %arg5 = %c0_i32 to %312 step %c1_i32 iter_args(%arg6 = %308) -> (vector<2x8x8x128xf32>)  : i32 {
      %315 = vector.extract_strided_slice %arg6 {offsets = [0, 0, 0, 0], sizes = [2, 8, 1, 128], strides = [1, 1, 1, 1]} : vector<2x8x8x128xf32> to vector<2x8x1x128xf32>
      %316 = vector.extract_strided_slice %arg6 {offsets = [0, 0, 0, 0], sizes = [2, 1, 8, 128], strides = [1, 1, 1, 1]} : vector<2x8x8x128xf32> to vector<2x1x8x128xf32>
      %317 = vector.broadcast %315 : vector<2x8x1x128xf32> to vector<2x8x8x128xf32>
      %318 = vector.broadcast %316 : vector<2x1x8x128xf32> to vector<2x8x8x128xf32>
      %319 = arith.mulf %317, %318 : vector<2x8x8x128xf32>
      %320 = vector.extract_strided_slice %arg6 {offsets = [0, 0, 1, 0], sizes = [2, 8, 1, 128], strides = [1, 1, 1, 1]} : vector<2x8x8x128xf32> to vector<2x8x1x128xf32>
      %321 = vector.extract_strided_slice %arg6 {offsets = [0, 1, 0, 0], sizes = [2, 1, 8, 128], strides = [1, 1, 1, 1]} : vector<2x8x8x128xf32> to vector<2x1x8x128xf32>
      %322 = vector.broadcast %320 : vector<2x8x1x128xf32> to vector<2x8x8x128xf32>
      %323 = vector.broadcast %321 : vector<2x1x8x128xf32> to vector<2x8x8x128xf32>
      %324 = arith.mulf %322, %323 : vector<2x8x8x128xf32>
      %325 = arith.addf %319, %324 : vector<2x8x8x128xf32>
      %326 = vector.extract_strided_slice %arg6 {offsets = [0, 0, 2, 0], sizes = [2, 8, 1, 128], strides = [1, 1, 1, 1]} : vector<2x8x8x128xf32> to vector<2x8x1x128xf32>
      %327 = vector.extract_strided_slice %arg6 {offsets = [0, 2, 0, 0], sizes = [2, 1, 8, 128], strides = [1, 1, 1, 1]} : vector<2x8x8x128xf32> to vector<2x1x8x128xf32>
      %328 = vector.broadcast %326 : vector<2x8x1x128xf32> to vector<2x8x8x128xf32>
      %329 = vector.broadcast %327 : vector<2x1x8x128xf32> to vector<2x8x8x128xf32>
      %330 = arith.mulf %328, %329 : vector<2x8x8x128xf32>
      %331 = arith.addf %325, %330 : vector<2x8x8x128xf32>
      %332 = vector.extract_strided_slice %arg6 {offsets = [0, 0, 3, 0], sizes = [2, 8, 1, 128], strides = [1, 1, 1, 1]} : vector<2x8x8x128xf32> to vector<2x8x1x128xf32>
      %333 = vector.extract_strided_slice %arg6 {offsets = [0, 3, 0, 0], sizes = [2, 1, 8, 128], strides = [1, 1, 1, 1]} : vector<2x8x8x128xf32> to vector<2x1x8x128xf32>
      %334 = vector.broadcast %332 : vector<2x8x1x128xf32> to vector<2x8x8x128xf32>
      %335 = vector.broadcast %333 : vector<2x1x8x128xf32> to vector<2x8x8x128xf32>
      %336 = arith.mulf %334, %335 : vector<2x8x8x128xf32>
      %337 = arith.addf %331, %336 : vector<2x8x8x128xf32>
      %338 = vector.extract_strided_slice %arg6 {offsets = [0, 0, 4, 0], sizes = [2, 8, 1, 128], strides = [1, 1, 1, 1]} : vector<2x8x8x128xf32> to vector<2x8x1x128xf32>
      %339 = vector.extract_strided_slice %arg6 {offsets = [0, 4, 0, 0], sizes = [2, 1, 8, 128], strides = [1, 1, 1, 1]} : vector<2x8x8x128xf32> to vector<2x1x8x128xf32>
      %340 = vector.broadcast %338 : vector<2x8x1x128xf32> to vector<2x8x8x128xf32>
      %341 = vector.broadcast %339 : vector<2x1x8x128xf32> to vector<2x8x8x128xf32>
      %342 = arith.mulf %340, %341 : vector<2x8x8x128xf32>
      %343 = arith.addf %337, %342 : vector<2x8x8x128xf32>
      %344 = vector.extract_strided_slice %arg6 {offsets = [0, 0, 5, 0], sizes = [2, 8, 1, 128], strides = [1, 1, 1, 1]} : vector<2x8x8x128xf32> to vector<2x8x1x128xf32>
      %345 = vector.extract_strided_slice %arg6 {offsets = [0, 5, 0, 0], sizes = [2, 1, 8, 128], strides = [1, 1, 1, 1]} : vector<2x8x8x128xf32> to vector<2x1x8x128xf32>
      %346 = vector.broadcast %344 : vector<2x8x1x128xf32> to vector<2x8x8x128xf32>
      %347 = vector.broadcast %345 : vector<2x1x8x128xf32> to vector<2x8x8x128xf32>
      %348 = arith.mulf %346, %347 : vector<2x8x8x128xf32>
      %349 = arith.addf %343, %348 : vector<2x8x8x128xf32>
      %350 = vector.extract_strided_slice %arg6 {offsets = [0, 0, 6, 0], sizes = [2, 8, 1, 128], strides = [1, 1, 1, 1]} : vector<2x8x8x128xf32> to vector<2x8x1x128xf32>
      %351 = vector.extract_strided_slice %arg6 {offsets = [0, 6, 0, 0], sizes = [2, 1, 8, 128], strides = [1, 1, 1, 1]} : vector<2x8x8x128xf32> to vector<2x1x8x128xf32>
      %352 = vector.broadcast %350 : vector<2x8x1x128xf32> to vector<2x8x8x128xf32>
      %353 = vector.broadcast %351 : vector<2x1x8x128xf32> to vector<2x8x8x128xf32>
      %354 = arith.mulf %352, %353 : vector<2x8x8x128xf32>
      %355 = arith.addf %349, %354 : vector<2x8x8x128xf32>
      %356 = vector.extract_strided_slice %arg6 {offsets = [0, 0, 7, 0], sizes = [2, 8, 1, 128], strides = [1, 1, 1, 1]} : vector<2x8x8x128xf32> to vector<2x8x1x128xf32>
      %357 = vector.extract_strided_slice %arg6 {offsets = [0, 7, 0, 0], sizes = [2, 1, 8, 128], strides = [1, 1, 1, 1]} : vector<2x8x8x128xf32> to vector<2x1x8x128xf32>
      %358 = vector.broadcast %356 : vector<2x8x1x128xf32> to vector<2x8x8x128xf32>
      %359 = vector.broadcast %357 : vector<2x1x8x128xf32> to vector<2x8x8x128xf32>
      %360 = arith.mulf %358, %359 : vector<2x8x8x128xf32>
      %361 = arith.addf %355, %360 : vector<2x8x8x128xf32>
      %362 = vector.broadcast %arg5 : i32 to vector<2x1x1x128xi32>
      %363 = arith.cmpi slt, %362, %19 : vector<2x1x1x128xi32>
      %364 = vector.shape_cast %363 : vector<2x1x1x128xi1> to vector<2x1x1x128xi1>
      %365 = vector.broadcast %364 : vector<2x1x1x128xi1> to vector<2x8x8x128xi1>
      %366 = arith.select %365, %361, %arg6 : vector<2x8x8x128xi1>, vector<2x8x8x128xf32>
      scf.yield %366 : vector<2x8x8x128xf32>
    }
    %c0_24 = arith.constant 0 : index
    %c0_25 = arith.constant 0 : index
    %c0_26 = arith.constant 0 : index
    %c0_27 = arith.constant 0 : index
    %314 = vector.load %arg4[%c0_24, %c0_25, %c0_26, %c0_27] : memref<2x8x8x128xf32, #tpu.memory_space<vmem>>, vector<2x8x8x128xf32>
    tpu.vector_store %arg4[%c0_24, %c0_25, %c0_26, %c0_27], %313 {strides = array<i32>} : memref<2x8x8x128xf32, #tpu.memory_space<vmem>>, vector<2x8x8x128xf32>,
    return
  }
  func.func @transform_0(%arg0: i32, %arg1: memref<1xi32, #tpu.memory_space<smem>>) -> (i32, i32) {
    %c0_i32 = arith.constant 0 : i32
    %c0_i32_0 = arith.constant 0 : i32
    %c0_i32_1 = arith.constant 0 : i32
    return %c0_i32, %c0_i32_0 : i32, i32
  }
  func.func @transform_1(%arg0: i32, %arg1: memref<1xi32, #tpu.memory_space<smem>>) -> (i32, i32) {
    %c0_i32 = arith.constant 0 : i32
    %c0_i32_0 = arith.constant 0 : i32
    return %c0_i32, %arg0 : i32, i32
  }
  func.func @transform_2(%arg0: i32, %arg1: memref<1xi32, #tpu.memory_space<smem>>) -> (i32, i32, i32, i32) {
    %c0_i32 = arith.constant 0 : i32
    %c0_i32_0 = arith.constant 0 : i32
    %c0_i32_1 = arith.constant 0 : i32
    %c0_i32_2 = arith.constant 0 : i32
    return %c0_i32, %c0_i32_0, %c0_i32_1, %arg0 : i32, i32, i32, i32
  }
}

</mosaic_0001>

<llo_original>
// kernel: tpu_custom_call.1
$region0: #{tpu_custom_call.1}
  #allocation0 [shape = 'u32[]', space=smem, size = 0x4, offset = 0x4, fixed_abs, tag = 'smem constant byte address 0x4 - core index']
  #allocation1 [shape = 'u32[144,128]{1,0:T(1,128)}', space=vmem, size = 0x12000, scoped, tag = 'internal scratch']
  #allocation2 [shape = 's32[1]{0}', space=sflag, size = 0x4, scoped, tag = 'scoped memory for tpu_custom_call.1']
  #allocation3 [shape = 's32[1]{0:T(128)S(6)}', space=smem, size = 0x200, scoped, tag = 'prefetched SMEM operand 0']
  %s0 = inlined_call_operand.<no memory space> [shape: s32[1], index: 0, kind: input, shape index: {}]
  %s1 = inlined_call_operand.vmem [shape: f32[128,8], index: 1, kind: input, shape index: {}]
  %s2 = inlined_call_operand.vmem [shape: f32[8,128], index: 2, kind: input, shape index: {}]
  %s3 = inlined_call_operand.hbm [shape: f32[2,8,8,128], index: 3, kind: output, shape index: {}]
  %s4 = sld [smem:[#allocation0]]
  $region25: #{tpu_custom_call.1} parent=0
    _
  %s6 = ssub.s32 1, %s4
  %s7 = scalar_select 0, %s6, %s4
  %8 = sst [smem:[#allocation3]] %s0
  $region1: #{tpu_custom_call.1} parent=0
    #allocation4 [shape = 'u8[65536]{0}', space=vmem, size = 0x10000, scoped, tag = 'output window, operand 0, single buffered']
    #allocation5 [shape = 's32[1]{0}', space=sflag, size = 0x4, scoped, tag = 'scoped memory for tpu_custom_call.1']
    %9 = vsyncpa [#allocation5], 0
    // Predicated region
    $region2: #{tpu_custom_call.1} parent=1 // pred_check
      _
    $region3: #{tpu_custom_call.1} parent=1 // pred_check_branch
      %11 = sbr.rel (0) target = $region5
    $region4: #{tpu_custom_call.1} parent=1 // pred_region
      _
    $region5: #{tpu_custom_call.1} parent=1 // pred_fallthru
      _
    // Predicated region
    $region6: #{tpu_custom_call.1} parent=1 // pred_check
      _
    $region7: #{tpu_custom_call.1} parent=1 // pred_check_branch
      %13 = sbr.rel (0) target = $region9
    $region8: #{tpu_custom_call.1} parent=1 // pred_region
      _
    $region9: #{tpu_custom_call.1} parent=1 // pred_fallthru
      _
    %v14 = vld [vmem:[%s1] sm:$0xff]
    %v15 = vld [vmem:[%s1 + $0x8] sm:$0xff]
    %v16 = vld [vmem:[%s1 + $0x10] sm:$0xff]
    %v17 = vld [vmem:[%s1 + $0x18] sm:$0xff]
    %v18 = vld [vmem:[%s1 + $0x20] sm:$0xff]
    %v19 = vld [vmem:[%s1 + $0x28] sm:$0xff]
    %v20 = vld [vmem:[%s1 + $0x30] sm:$0xff]
    %v21 = vld [vmem:[%s1 + $0x38] sm:$0xff]
    %v22 = vld [vmem:[%s1 + $0x40] sm:$0xff]
    %v23 = vld [vmem:[%s1 + $0x48] sm:$0xff]
    %v24 = vld [vmem:[%s1 + $0x50] sm:$0xff]
    %v25 = vld [vmem:[%s1 + $0x58] sm:$0xff]
    %v26 = vld [vmem:[%s1 + $0x60] sm:$0xff]
    %v27 = vld [vmem:[%s1 + $0x68] sm:$0xff]
    %v28 = vld [vmem:[%s1 + $0x70] sm:$0xff]
    %v29 = vld [vmem:[%s1 + $0x78] sm:$0xff]
    %v30 = vld [vmem:[%s2] sm:$0xff]
    %vm31 = vcmask 64512
    %v33 = vsel %vm31, %v14, 0
    %v36 = vsel %vm31, %v15, 0
    %v39 = vsel %vm31, %v16, 0
    %v42 = vsel %vm31, %v17, 0
    %v45 = vsel %vm31, %v18, 0
    %v48 = vsel %vm31, %v19, 0
    %v51 = vsel %vm31, %v20, 0
    %v54 = vsel %vm31, %v21, 0
    %v57 = vsel %vm31, %v22, 0
    %v60 = vsel %vm31, %v23, 0
    %v63 = vsel %vm31, %v24, 0
    %v66 = vsel %vm31, %v25, 0
    %v69 = vsel %vm31, %v26, 0
    %v72 = vsel %vm31, %v27, 0
    %v75 = vsel %vm31, %v28, 0
    %v78 = vsel %vm31, %v29, 0
    %80 = vmatprep.subr.mxu0 0.0
    %81 = vmatpush1.msra.mxu0 0.0
    %82 = vmatprep.subr.mxu0 0.0
    %83 = vmatpush1.msra.mxu0 0.0
    %84 = vmatprep.subr.mxu0 0.0
    %85 = vmatpush1.msra.mxu0 0.0
    %86 = vmatprep.subr.mxu0 0.0
    %87 = vmatpush1.msra.mxu0 0.0
    %88 = vmatprep.subr.mxu0 0.0
    %89 = vmatpush1.msra.mxu0 0.0
    %90 = vmatprep.subr.mxu0 0.0
    %91 = vmatpush1.msra.mxu0 0.0
    %92 = vmatprep.subr.mxu0 0.0
    %93 = vmatpush1.msra.mxu0 0.0
    %94 = vmatprep.subr.mxu0 0.0
    %95 = vmatpush1.msra.mxu0 0.0
    %96 = vmatprep.subr.mxu0 0.0
    %97 = vmatpush1.msra.mxu0 0.0
    %98 = vmatprep.subr.mxu0 0.0
    %99 = vmatpush1.msra.mxu0 0.0
    %100 = vmatprep.subr.mxu0 0.0
    %101 = vmatpush1.msra.mxu0 0.0
    %102 = vmatprep.subr.mxu0 0.0
    %103 = vmatpush1.msra.mxu0 0.0
    %104 = vmatprep.subr.mxu0 0.0
    %105 = vmatpush1.msra.mxu0 0.0
    %106 = vmatprep.subr.mxu0 0.0
    %107 = vmatpush1.msra.mxu0 0.0
    %108 = vmatprep.subr.mxu0 0.0
    %109 = vmatpush1.msra.mxu0 0.0
    %110 = vmatprep.subr.mxu0 0.0
    %111 = vmatpush1.msra.mxu0 %v30
    %112 = vmatprep.subr.mxu0 0.0
    %113 = vmatpush2.msra.mxu0 0.0
    %114 = vmatprep.subr.mxu0 0.0
    %115 = vmatpush2.msra.mxu0 0.0
    %116 = vmatprep.subr.mxu0 0.0
    %117 = vmatpush2.msra.mxu0 0.0
    %118 = vmatprep.subr.mxu0 0.0
    %119 = vmatpush2.msra.mxu0 0.0
    %120 = vmatprep.subr.mxu0 0.0
    %121 = vmatpush2.msra.mxu0 0.0
    %122 = vmatprep.subr.mxu0 0.0
    %123 = vmatpush2.msra.mxu0 0.0
    %124 = vmatprep.subr.mxu0 0.0
    %125 = vmatpush2.msra.mxu0 0.0
    %126 = vmatprep.subr.mxu0 0.0
    %127 = vmatpush2.msra.mxu0 0.0
    %128 = vmatprep.subr.mxu0 0.0
    %129 = vmatpush2.msra.mxu0 0.0
    %130 = vmatprep.subr.mxu0 0.0
    %131 = vmatpush2.msra.mxu0 0.0
    %132 = vmatprep.subr.mxu0 0.0
    %133 = vmatpush2.msra.mxu0 0.0
    %134 = vmatprep.subr.mxu0 0.0
    %135 = vmatpush2.msra.mxu0 0.0
    %136 = vmatprep.subr.mxu0 0.0
    %137 = vmatpush2.msra.mxu0 0.0
    %138 = vmatprep.subr.mxu0 0.0
    %139 = vmatpush2.msra.mxu0 0.0
    %140 = vmatprep.subr.mxu0 0.0
    %141 = vmatpush2.msra.mxu0 0.0
    %142 = vmatprep.subr.mxu0 0.0
    %143 = vmatpush2.msra.mxu0 0.0
    %144 = vmatprep.mubr.f32.mxu0 0.0
    %145 = vmatmul.mubr.f32.gmra.mxu0 %v33
    %v146 = vpop.f32.mrf.mxu0
    %v147 = vadd.f32 0.0, %v146
    %v148 = vpop.f32.mrf.mxu0
    %149 = vmatprep.mubr.f32.mxu0 0.0
    %150 = vmatmul.mubr.f32.gmra.mxu0 %v36
    %v151 = vpop.f32.mrf.mxu0
    %v152 = vadd.f32 0.0, %v151
    %v153 = vpop.f32.mrf.mxu0
    %154 = vmatprep.mubr.f32.mxu0 0.0
    %155 = vmatmul.mubr.f32.gmra.mxu0 %v39
    %v156 = vpop.f32.mrf.mxu0
    %v157 = vadd.f32 0.0, %v156
    %v158 = vpop.f32.mrf.mxu0
    %159 = vmatprep.mubr.f32.mxu0 0.0
    %160 = vmatmul.mubr.f32.gmra.mxu0 %v42
    %v161 = vpop.f32.mrf.mxu0
    %v162 = vadd.f32 0.0, %v161
    %v163 = vpop.f32.mrf.mxu0
    %164 = vmatprep.mubr.f32.mxu0 0.0
    %165 = vmatmul.mubr.f32.gmra.mxu0 %v45
    %v166 = vpop.f32.mrf.mxu0
    %v167 = vadd.f32 0.0, %v166
    %v168 = vpop.f32.mrf.mxu0
    %169 = vmatprep.mubr.f32.mxu0 0.0
    %170 = vmatmul.mubr.f32.gmra.mxu0 %v48
    %v171 = vpop.f32.mrf.mxu0
    %v172 = vadd.f32 0.0, %v171
    %v173 = vpop.f32.mrf.mxu0
    %174 = vmatprep.mubr.f32.mxu0 0.0
    %175 = vmatmul.mubr.f32.gmra.mxu0 %v51
    %v176 = vpop.f32.mrf.mxu0
    %v177 = vadd.f32 0.0, %v176
    %v178 = vpop.f32.mrf.mxu0
    %179 = vmatprep.mubr.f32.mxu0 0.0
    %180 = vmatmul.mubr.f32.gmra.mxu0 %v54
    %v181 = vpop.f32.mrf.mxu0
    %v182 = vadd.f32 0.0, %v181
    %v183 = vpop.f32.mrf.mxu0
    %184 = vmatprep.mubr.f32.mxu0 0.0
    %185 = vmatmul.mubr.f32.gmra.mxu0 %v57
    %v186 = vpop.f32.mrf.mxu0
    %v187 = vadd.f32 0.0, %v186
    %v188 = vpop.f32.mrf.mxu0
    %189 = vmatprep.mubr.f32.mxu0 0.0
    %190 = vmatmul.mubr.f32.gmra.mxu0 %v60
    %v191 = vpop.f32.mrf.mxu0
    %v192 = vadd.f32 0.0, %v191
    %v193 = vpop.f32.mrf.mxu0
    %194 = vmatprep.mubr.f32.mxu0 0.0
    %195 = vmatmul.mubr.f32.gmra.mxu0 %v63
    %v196 = vpop.f32.mrf.mxu0
    %v197 = vadd.f32 0.0, %v196
    %v198 = vpop.f32.mrf.mxu0
    %199 = vmatprep.mubr.f32.mxu0 0.0
    %200 = vmatmul.mubr.f32.gmra.mxu0 %v66
    %v201 = vpop.f32.mrf.mxu0
    %v202 = vadd.f32 0.0, %v201
    %v203 = vpop.f32.mrf.mxu0
    %204 = vmatprep.mubr.f32.mxu0 0.0
    %205 = vmatmul.mubr.f32.gmra.mxu0 %v69
    %v206 = vpop.f32.mrf.mxu0
    %v207 = vadd.f32 0.0, %v206
    %v208 = vpop.f32.mrf.mxu0
    %209 = vmatprep.mubr.f32.mxu0 0.0
    %210 = vmatmul.mubr.f32.gmra.mxu0 %v72
    %v211 = vpop.f32.mrf.mxu0
    %v212 = vadd.f32 0.0, %v211
    %v213 = vpop.f32.mrf.mxu0
    %214 = vmatprep.mubr.f32.mxu0 0.0
    %215 = vmatmul.mubr.f32.gmra.mxu0 %v75
    %v216 = vpop.f32.mrf.mxu0
    %v217 = vadd.f32 0.0, %v216
    %v218 = vpop.f32.mrf.mxu0
    %219 = vmatprep.mubr.f32.mxu0 0.0
    %220 = vmatmul.mubr.f32.gmra.mxu0 %v78
    %v221 = vpop.f32.mrf.mxu0
    %v222 = vadd.f32 0.0, %v221
    %v223 = vpop.f32.mrf.mxu0
    %224 = vdwg.mxu0
    %v225 = vand.u32 2147483647, %v147
    %v226 = vand.u32 2147483647, %v152
    %v227 = vand.u32 2147483647, %v157
    %v228 = vand.u32 2147483647, %v162
    %v229 = vand.u32 2147483647, %v167
    %v230 = vand.u32 2147483647, %v172
    %v231 = vand.u32 2147483647, %v177
    %v232 = vand.u32 2147483647, %v182
    %v233 = vand.u32 2147483647, %v187
    %v234 = vand.u32 2147483647, %v192
    %v235 = vand.u32 2147483647, %v197
    %v236 = vand.u32 2147483647, %v202
    %v237 = vand.u32 2147483647, %v207
    %v238 = vand.u32 2147483647, %v212
    %v239 = vand.u32 2147483647, %v217
    %v240 = vand.u32 2147483647, %v222
    %v241 = vadd.f32 %v225, %v226
    %v242 = vadd.f32 %v241, %v227
    %v243 = vadd.f32 %v242, %v228
    %v244 = vadd.f32 %v243, %v229
    %v245 = vadd.f32 %v244, %v230
    %v246 = vadd.f32 %v245, %v231
    %v247 = vadd.f32 %v246, %v232
    %v248 = vadd.f32 %v233, %v234
    %v249 = vadd.f32 %v248, %v235
    %v250 = vadd.f32 %v249, %v236
    %v251 = vadd.f32 %v250, %v237
    %v252 = vadd.f32 %v251, %v238
    %v253 = vadd.f32 %v252, %v239
    %v254 = vadd.f32 %v253, %v240
    %v255 = vrot.slane %v247, 4
    %v256 = vmax.f32 %v247, %v255
    %v257 = vrot.slane %v256, 2
    %v258 = vmax.f32 %v256, %v257
    %v259 = vrot.slane %v258, 1
    %v260 = vmax.f32 %v258, %v259
    %v261 = vrot.slane %v254, 4
    %v262 = vmax.f32 %v254, %v261
    %v263 = vrot.slane %v262, 2
    %v264 = vmax.f32 %v262, %v263
    %v265 = vrot.slane %v264, 1
    %v266 = vmax.f32 %v264, %v265
    %v267 = vmax.f32 %v260, 1.0
    %v268 = vmax.f32 %v266, 1.0
    %v269 = vlog2.pop %v267
    %v270 = vmul.f32 %v269, 0.6931472
    %v271 = vlog2.pop %v268
    %v272 = vmul.f32 %v271, 0.6931472
    %v273 = vmul.f32 %v270, 1.442695
    %v274 = vmul.f32 %v272, 1.442695
    %v275 = vceil.f32 %v273
    %v276 = vceil.f32 %v274
    %v277 = vmax.f32 %v275, 0.0
    %v278 = vmax.f32 %v276, 0.0
    %v279 = vmin.f32 %v277, 20.0
    %v280 = vmin.f32 %v278, 20.0
    %v281 = vcvt.f32.s32.to.zero.pseudo %v279
    %v282 = vcvt.f32.s32.to.zero.pseudo %v280
    %v283 = vsub.s32 127, %v281
    %v284 = vsub.s32 127, %v282
    %v285 = vshll.u32 %v283, 23
    %v286 = vshll.u32 %v284, 23
    %v289 = vmul.f32 %v147, %v285
    %v290 = vmul.f32 %v152, %v285
    %v291 = vmul.f32 %v157, %v285
    %v292 = vmul.f32 %v162, %v285
    %v293 = vmul.f32 %v167, %v285
    %v294 = vmul.f32 %v172, %v285
    %v295 = vmul.f32 %v177, %v285
    %v296 = vmul.f32 %v182, %v285
    %v297 = vmul.f32 %v187, %v286
    %v298 = vmul.f32 %v192, %v286
    %v299 = vmul.f32 %v197, %v286
    %v300 = vmul.f32 %v202, %v286
    %v301 = vmul.f32 %v207, %v286
    %v302 = vmul.f32 %v212, %v286
    %v303 = vmul.f32 %v217, %v286
    %v304 = vmul.f32 %v222, %v286
    %v305 = vlaneseq
    %v306 = vshrl.u32 %v305, 7
    %vm307 = vcmp.eq.s32.totalorder %v306, 0
    %vm308 = vcmp.eq.s32.totalorder %v306, 1
    %vm309 = vcmp.eq.s32.totalorder %v306, 2
    %vm310 = vcmp.eq.s32.totalorder %v306, 3
    %vm311 = vcmp.eq.s32.totalorder %v306, 4
    %vm312 = vcmp.eq.s32.totalorder %v306, 5
    %vm313 = vcmp.eq.s32.totalorder %v306, 6
    %vm314 = vcmp.eq.s32.totalorder %v306, 7
    %v315 = vsel %vm307, 1.0, 0.0
    %v316 = vsel %vm308, 1.0, 0.0
    %v317 = vsel %vm309, 1.0, 0.0
    %v318 = vsel %vm310, 1.0, 0.0
    %v319 = vsel %vm311, 1.0, 0.0
    %v320 = vsel %vm312, 1.0, 0.0
    %v321 = vsel %vm313, 1.0, 0.0
    %v322 = vsel %vm314, 1.0, 0.0
    %v323 = vlaneseq
    %v324 = vshrl.u32 %v323, 7
    %v325 = vsub.s32 0, %v324
    %v326 = vrot.slane %v289, %v325
    %v327 = vlaneseq
    %v328 = vshrl.u32 %v327, 7
    %v329 = vsub.s32 0, %v328
    %v330 = vrot.slane %v290, %v329
    %v331 = vlaneseq
    %v332 = vshrl.u32 %v331, 7
    %v333 = vsub.s32 0, %v332
    %v334 = vrot.slane %v291, %v333
    %v335 = vlaneseq
    %v336 = vshrl.u32 %v335, 7
    %v337 = vsub.s32 0, %v336
    %v338 = vrot.slane %v292, %v337
    %v339 = vlaneseq
    %v340 = vshrl.u32 %v339, 7
    %v341 = vsub.s32 0, %v340
    %v342 = vrot.slane %v293, %v341
    %v343 = vlaneseq
    %v344 = vshrl.u32 %v343, 7
    %v345 = vsub.s32 0, %v344
    %v346 = vrot.slane %v294, %v345
    %v347 = vlaneseq
    %v348 = vshrl.u32 %v347, 7
    %v349 = vsub.s32 0, %v348
    %v350 = vrot.slane %v295, %v349
    %v351 = vlaneseq
    %v352 = vshrl.u32 %v351, 7
    %v353 = vsub.s32 0, %v352
    %v354 = vrot.slane %v296, %v353
    %v355 = vlaneseq
    %v356 = vshrl.u32 %v355, 7
    %v357 = vsub.s32 0, %v356
    %v358 = vrot.slane %v297, %v357
    %v359 = vlaneseq
    %v360 = vshrl.u32 %v359, 7
    %v361 = vsub.s32 0, %v360
    %v362 = vrot.slane %v298, %v361
    %v363 = vlaneseq
    %v364 = vshrl.u32 %v363, 7
    %v365 = vsub.s32 0, %v364
    %v366 = vrot.slane %v299, %v365
    %v367 = vlaneseq
    %v368 = vshrl.u32 %v367, 7
    %v369 = vsub.s32 0, %v368
    %v370 = vrot.slane %v300, %v369
    %v371 = vlaneseq
    %v372 = vshrl.u32 %v371, 7
    %v373 = vsub.s32 0, %v372
    %v374 = vrot.slane %v301, %v373
    %v375 = vlaneseq
    %v376 = vshrl.u32 %v375, 7
    %v377 = vsub.s32 0, %v376
    %v378 = vrot.slane %v302, %v377
    %v379 = vlaneseq
    %v380 = vshrl.u32 %v379, 7
    %v381 = vsub.s32 0, %v380
    %v382 = vrot.slane %v303, %v381
    %v383 = vlaneseq
    %v384 = vshrl.u32 %v383, 7
    %v385 = vsub.s32 0, %v384
    %v386 = vrot.slane %v304, %v385
    %v387 = vmul.f32 %v326, %v289
    %v388 = vmul.f32 %v330, %v289
    %v389 = vmul.f32 %v334, %v289
    %v390 = vmul.f32 %v338, %v289
    %v391 = vmul.f32 %v342, %v289
    %v392 = vmul.f32 %v346, %v289
    %v393 = vmul.f32 %v350, %v289
    %v394 = vmul.f32 %v354, %v289
    %v395 = vmul.f32 %v358, %v297
    %v396 = vmul.f32 %v362, %v297
    %v397 = vmul.f32 %v366, %v297
    %v398 = vmul.f32 %v370, %v297
    %v399 = vmul.f32 %v374, %v297
    %v400 = vmul.f32 %v378, %v297
    %v401 = vmul.f32 %v382, %v297
    %v402 = vmul.f32 %v386, %v297
    %v403 = vlaneseq
    %v404 = vshrl.u32 %v403, 7
    %v405 = vsub.s32 1, %v404
    %v406 = vrot.slane %v289, %v405
    %v407 = vlaneseq
    %v408 = vshrl.u32 %v407, 7
    %v409 = vsub.s32 1, %v408
    %v410 = vrot.slane %v290, %v409
    %v411 = vlaneseq
    %v412 = vshrl.u32 %v411, 7
    %v413 = vsub.s32 1, %v412
    %v414 = vrot.slane %v291, %v413
    %v415 = vlaneseq
    %v416 = vshrl.u32 %v415, 7
    %v417 = vsub.s32 1, %v416
    %v418 = vrot.slane %v292, %v417
    %v419 = vlaneseq
    %v420 = vshrl.u32 %v419, 7
    %v421 = vsub.s32 1, %v420
    %v422 = vrot.slane %v293, %v421
    %v423 = vlaneseq
    %v424 = vshrl.u32 %v423, 7
    %v425 = vsub.s32 1, %v424
    %v426 = vrot.slane %v294, %v425
    %v427 = vlaneseq
    %v428 = vshrl.u32 %v427, 7
    %v429 = vsub.s32 1, %v428
    %v430 = vrot.slane %v295, %v429
    %v431 = vlaneseq
    %v432 = vshrl.u32 %v431, 7
    %v433 = vsub.s32 1, %v432
    %v434 = vrot.slane %v296, %v433
    %v435 = vlaneseq
    %v436 = vshrl.u32 %v435, 7
    %v437 = vsub.s32 1, %v436
    %v438 = vrot.slane %v297, %v437
    %v439 = vlaneseq
    %v440 = vshrl.u32 %v439, 7
    %v441 = vsub.s32 1, %v440
    %v442 = vrot.slane %v298, %v441
    %v443 = vlaneseq
    %v444 = vshrl.u32 %v443, 7
    %v445 = vsub.s32 1, %v444
    %v446 = vrot.slane %v299, %v445
    %v447 = vlaneseq
    %v448 = vshrl.u32 %v447, 7
    %v449 = vsub.s32 1, %v448
    %v450 = vrot.slane %v300, %v449
    %v451 = vlaneseq
    %v452 = vshrl.u32 %v451, 7
    %v453 = vsub.s32 1, %v452
    %v454 = vrot.slane %v301, %v453
    %v455 = vlaneseq
    %v456 = vshrl.u32 %v455, 7
    %v457 = vsub.s32 1, %v456
    %v458 = vrot.slane %v302, %v457
    %v459 = vlaneseq
    %v460 = vshrl.u32 %v459, 7
    %v461 = vsub.s32 1, %v460
    %v462 = vrot.slane %v303, %v461
    %v463 = vlaneseq
    %v464 = vshrl.u32 %v463, 7
    %v465 = vsub.s32 1, %v464
    %v466 = vrot.slane %v304, %v465
    %v467 = vmul.f32 %v406, %v290
    %v468 = vmul.f32 %v410, %v290
    %v469 = vmul.f32 %v414, %v290
    %v470 = vmul.f32 %v418, %v290
    %v471 = vmul.f32 %v422, %v290
    %v472 = vmul.f32 %v426, %v290
    %v473 = vmul.f32 %v430, %v290
    %v474 = vmul.f32 %v434, %v290
    %v475 = vmul.f32 %v438, %v298
    %v476 = vmul.f32 %v442, %v298
    %v477 = vmul.f32 %v446, %v298
    %v478 = vmul.f32 %v450, %v298
    %v479 = vmul.f32 %v454, %v298
    %v480 = vmul.f32 %v458, %v298
    %v481 = vmul.f32 %v462, %v298
    %v482 = vmul.f32 %v466, %v298
    %v483 = vadd.f32 %v387, %v467
    %v484 = vadd.f32 %v388, %v468
    %v485 = vadd.f32 %v389, %v469
    %v486 = vadd.f32 %v390, %v470
    %v487 = vadd.f32 %v391, %v471
    %v488 = vadd.f32 %v392, %v472
    %v489 = vadd.f32 %v393, %v473
    %v490 = vadd.f32 %v394, %v474
    %v491 = vadd.f32 %v395, %v475
    %v492 = vadd.f32 %v396, %v476
    %v493 = vadd.f32 %v397, %v477
    %v494 = vadd.f32 %v398, %v478
    %v495 = vadd.f32 %v399, %v479
    %v496 = vadd.f32 %v400, %v480
    %v497 = vadd.f32 %v401, %v481
    %v498 = vadd.f32 %v402, %v482
    %v499 = vlaneseq
    %v500 = vshrl.u32 %v499, 7
    %v501 = vsub.s32 2, %v500
    %v502 = vrot.slane %v289, %v501
    %v503 = vlaneseq
    %v504 = vshrl.u32 %v503, 7
    %v505 = vsub.s32 2, %v504
    %v506 = vrot.slane %v290, %v505
    %v507 = vlaneseq
    %v508 = vshrl.u32 %v507, 7
    %v509 = vsub.s32 2, %v508
    %v510 = vrot.slane %v291, %v509
    %v511 = vlaneseq
    %v512 = vshrl.u32 %v511, 7
    %v513 = vsub.s32 2, %v512
    %v514 = vrot.slane %v292, %v513
    %v515 = vlaneseq
    %v516 = vshrl.u32 %v515, 7
    %v517 = vsub.s32 2, %v516
    %v518 = vrot.slane %v293, %v517
    %v519 = vlaneseq
    %v520 = vshrl.u32 %v519, 7
    %v521 = vsub.s32 2, %v520
    %v522 = vrot.slane %v294, %v521
    %v523 = vlaneseq
    %v524 = vshrl.u32 %v523, 7
    %v525 = vsub.s32 2, %v524
    %v526 = vrot.slane %v295, %v525
    %v527 = vlaneseq
    %v528 = vshrl.u32 %v527, 7
    %v529 = vsub.s32 2, %v528
    %v530 = vrot.slane %v296, %v529
    %v531 = vlaneseq
    %v532 = vshrl.u32 %v531, 7
    %v533 = vsub.s32 2, %v532
    %v534 = vrot.slane %v297, %v533
    %v535 = vlaneseq
    %v536 = vshrl.u32 %v535, 7
    %v537 = vsub.s32 2, %v536
    %v538 = vrot.slane %v298, %v537
    %v539 = vlaneseq
    %v540 = vshrl.u32 %v539, 7
    %v541 = vsub.s32 2, %v540
    %v542 = vrot.slane %v299, %v541
    %v543 = vlaneseq
    %v544 = vshrl.u32 %v543, 7
    %v545 = vsub.s32 2, %v544
    %v546 = vrot.slane %v300, %v545
    %v547 = vlaneseq
    %v548 = vshrl.u32 %v547, 7
    %v549 = vsub.s32 2, %v548
    %v550 = vrot.slane %v301, %v549
    %v551 = vlaneseq
    %v552 = vshrl.u32 %v551, 7
    %v553 = vsub.s32 2, %v552
    %v554 = vrot.slane %v302, %v553
    %v555 = vlaneseq
    %v556 = vshrl.u32 %v555, 7
    %v557 = vsub.s32 2, %v556
    %v558 = vrot.slane %v303, %v557
    %v559 = vlaneseq
    %v560 = vshrl.u32 %v559, 7
    %v561 = vsub.s32 2, %v560
    %v562 = vrot.slane %v304, %v561
    %v563 = vmul.f32 %v502, %v291
    %v564 = vmul.f32 %v506, %v291
    %v565 = vmul.f32 %v510, %v291
    %v566 = vmul.f32 %v514, %v291
    %v567 = vmul.f32 %v518, %v291
    %v568 = vmul.f32 %v522, %v291
    %v569 = vmul.f32 %v526, %v291
    %v570 = vmul.f32 %v530, %v291
    %v571 = vmul.f32 %v534, %v299
    %v572 = vmul.f32 %v538, %v299
    %v573 = vmul.f32 %v542, %v299
    %v574 = vmul.f32 %v546, %v299
    %v575 = vmul.f32 %v550, %v299
    %v576 = vmul.f32 %v554, %v299
    %v577 = vmul.f32 %v558, %v299
    %v578 = vmul.f32 %v562, %v299
    %v579 = vadd.f32 %v483, %v563
    %v580 = vadd.f32 %v484, %v564
    %v581 = vadd.f32 %v485, %v565
    %v582 = vadd.f32 %v486, %v566
    %v583 = vadd.f32 %v487, %v567
    %v584 = vadd.f32 %v488, %v568
    %v585 = vadd.f32 %v489, %v569
    %v586 = vadd.f32 %v490, %v570
    %v587 = vadd.f32 %v491, %v571
    %v588 = vadd.f32 %v492, %v572
    %v589 = vadd.f32 %v493, %v573
    %v590 = vadd.f32 %v494, %v574
    %v591 = vadd.f32 %v495, %v575
    %v592 = vadd.f32 %v496, %v576
    %v593 = vadd.f32 %v497, %v577
    %v594 = vadd.f32 %v498, %v578
    %v595 = vlaneseq
    %v596 = vshrl.u32 %v595, 7
    %v597 = vsub.s32 3, %v596
    %v598 = vrot.slane %v289, %v597
    %v599 = vlaneseq
    %v600 = vshrl.u32 %v599, 7
    %v601 = vsub.s32 3, %v600
    %v602 = vrot.slane %v290, %v601
    %v603 = vlaneseq
    %v604 = vshrl.u32 %v603, 7
    %v605 = vsub.s32 3, %v604
    %v606 = vrot.slane %v291, %v605
    %v607 = vlaneseq
    %v608 = vshrl.u32 %v607, 7
    %v609 = vsub.s32 3, %v608
    %v610 = vrot.slane %v292, %v609
    %v611 = vlaneseq
    %v612 = vshrl.u32 %v611, 7
    %v613 = vsub.s32 3, %v612
    %v614 = vrot.slane %v293, %v613
    %v615 = vlaneseq
    %v616 = vshrl.u32 %v615, 7
    %v617 = vsub.s32 3, %v616
    %v618 = vrot.slane %v294, %v617
    %v619 = vlaneseq
    %v620 = vshrl.u32 %v619, 7
    %v621 = vsub.s32 3, %v620
    %v622 = vrot.slane %v295, %v621
    %v623 = vlaneseq
    %v624 = vshrl.u32 %v623, 7
    %v625 = vsub.s32 3, %v624
    %v626 = vrot.slane %v296, %v625
    %v627 = vlaneseq
    %v628 = vshrl.u32 %v627, 7
    %v629 = vsub.s32 3, %v628
    %v630 = vrot.slane %v297, %v629
    %v631 = vlaneseq
    %v632 = vshrl.u32 %v631, 7
    %v633 = vsub.s32 3, %v632
    %v634 = vrot.slane %v298, %v633
    %v635 = vlaneseq
    %v636 = vshrl.u32 %v635, 7
    %v637 = vsub.s32 3, %v636
    %v638 = vrot.slane %v299, %v637
    %v639 = vlaneseq
    %v640 = vshrl.u32 %v639, 7
    %v641 = vsub.s32 3, %v640
    %v642 = vrot.slane %v300, %v641
    %v643 = vlaneseq
    %v644 = vshrl.u32 %v643, 7
    %v645 = vsub.s32 3, %v644
    %v646 = vrot.slane %v301, %v645
    %v647 = vlaneseq
    %v648 = vshrl.u32 %v647, 7
    %v649 = vsub.s32 3, %v648
    %v650 = vrot.slane %v302, %v649
    %v651 = vlaneseq
    %v652 = vshrl.u32 %v651, 7
    %v653 = vsub.s32 3, %v652
    %v654 = vrot.slane %v303, %v653
    %v655 = vlaneseq
    %v656 = vshrl.u32 %v655, 7
    %v657 = vsub.s32 3, %v656
    %v658 = vrot.slane %v304, %v657
    %v659 = vmul.f32 %v598, %v292
    %v660 = vmul.f32 %v602, %v292
    %v661 = vmul.f32 %v606, %v292
    %v662 = vmul.f32 %v610, %v292
    %v663 = vmul.f32 %v614, %v292
    %v664 = vmul.f32 %v618, %v292
    %v665 = vmul.f32 %v622, %v292
    %v666 = vmul.f32 %v626, %v292
    %v667 = vmul.f32 %v630, %v300
    %v668 = vmul.f32 %v634, %v300
    %v669 = vmul.f32 %v638, %v300
    %v670 = vmul.f32 %v642, %v300
    %v671 = vmul.f32 %v646, %v300
    %v672 = vmul.f32 %v650, %v300
    %v673 = vmul.f32 %v654, %v300
    %v674 = vmul.f32 %v658, %v300
    %v675 = vadd.f32 %v579, %v659
    %v676 = vadd.f32 %v580, %v660
    %v677 = vadd.f32 %v581, %v661
    %v678 = vadd.f32 %v582, %v662
    %v679 = vadd.f32 %v583, %v663
    %v680 = vadd.f32 %v584, %v664
    %v681 = vadd.f32 %v585, %v665
    %v682 = vadd.f32 %v586, %v666
    %v683 = vadd.f32 %v587, %v667
    %v684 = vadd.f32 %v588, %v668
    %v685 = vadd.f32 %v589, %v669
    %v686 = vadd.f32 %v590, %v670
    %v687 = vadd.f32 %v591, %v671
    %v688 = vadd.f32 %v592, %v672
    %v689 = vadd.f32 %v593, %v673
    %v690 = vadd.f32 %v594, %v674
    %v691 = vlaneseq
    %v692 = vshrl.u32 %v691, 7
    %v693 = vsub.s32 4, %v692
    %v694 = vrot.slane %v289, %v693
    %v695 = vlaneseq
    %v696 = vshrl.u32 %v695, 7
    %v697 = vsub.s32 4, %v696
    %v698 = vrot.slane %v290, %v697
    %v699 = vlaneseq
    %v700 = vshrl.u32 %v699, 7
    %v701 = vsub.s32 4, %v700
    %v702 = vrot.slane %v291, %v701
    %v703 = vlaneseq
    %v704 = vshrl.u32 %v703, 7
    %v705 = vsub.s32 4, %v704
    %v706 = vrot.slane %v292, %v705
    %v707 = vlaneseq
    %v708 = vshrl.u32 %v707, 7
    %v709 = vsub.s32 4, %v708
    %v710 = vrot.slane %v293, %v709
    %v711 = vlaneseq
    %v712 = vshrl.u32 %v711, 7
    %v713 = vsub.s32 4, %v712
    %v714 = vrot.slane %v294, %v713
    %v715 = vlaneseq
    %v716 = vshrl.u32 %v715, 7
    %v717 = vsub.s32 4, %v716
    %v718 = vrot.slane %v295, %v717
    %v719 = vlaneseq
    %v720 = vshrl.u32 %v719, 7
    %v721 = vsub.s32 4, %v720
    %v722 = vrot.slane %v296, %v721
    %v723 = vlaneseq
    %v724 = vshrl.u32 %v723, 7
    %v725 = vsub.s32 4, %v724
    %v726 = vrot.slane %v297, %v725
    %v727 = vlaneseq
    %v728 = vshrl.u32 %v727, 7
    %v729 = vsub.s32 4, %v728
    %v730 = vrot.slane %v298, %v729
    %v731 = vlaneseq
    %v732 = vshrl.u32 %v731, 7
    %v733 = vsub.s32 4, %v732
    %v734 = vrot.slane %v299, %v733
    %v735 = vlaneseq
    %v736 = vshrl.u32 %v735, 7
    %v737 = vsub.s32 4, %v736
    %v738 = vrot.slane %v300, %v737
    %v739 = vlaneseq
    %v740 = vshrl.u32 %v739, 7
    %v741 = vsub.s32 4, %v740
    %v742 = vrot.slane %v301, %v741
    %v743 = vlaneseq
    %v744 = vshrl.u32 %v743, 7
    %v745 = vsub.s32 4, %v744
    %v746 = vrot.slane %v302, %v745
    %v747 = vlaneseq
    %v748 = vshrl.u32 %v747, 7
    %v749 = vsub.s32 4, %v748
    %v750 = vrot.slane %v303, %v749
    %v751 = vlaneseq
    %v752 = vshrl.u32 %v751, 7
    %v753 = vsub.s32 4, %v752
    %v754 = vrot.slane %v304, %v753
    %v755 = vmul.f32 %v694, %v293
    %v756 = vmul.f32 %v698, %v293
    %v757 = vmul.f32 %v702, %v293
    %v758 = vmul.f32 %v706, %v293
    %v759 = vmul.f32 %v710, %v293
    %v760 = vmul.f32 %v714, %v293
    %v761 = vmul.f32 %v718, %v293
    %v762 = vmul.f32 %v722, %v293
    %v763 = vmul.f32 %v726, %v301
    %v764 = vmul.f32 %v730, %v301
    %v765 = vmul.f32 %v734, %v301
    %v766 = vmul.f32 %v738, %v301
    %v767 = vmul.f32 %v742, %v301
    %v768 = vmul.f32 %v746, %v301
    %v769 = vmul.f32 %v750, %v301
    %v770 = vmul.f32 %v754, %v301
    %v771 = vadd.f32 %v675, %v755
    %v772 = vadd.f32 %v676, %v756
    %v773 = vadd.f32 %v677, %v757
    %v774 = vadd.f32 %v678, %v758
    %v775 = vadd.f32 %v679, %v759
    %v776 = vadd.f32 %v680, %v760
    %v777 = vadd.f32 %v681, %v761
    %v778 = vadd.f32 %v682, %v762
    %v779 = vadd.f32 %v683, %v763
    %v780 = vadd.f32 %v684, %v764
    %v781 = vadd.f32 %v685, %v765
    %v782 = vadd.f32 %v686, %v766
    %v783 = vadd.f32 %v687, %v767
    %v784 = vadd.f32 %v688, %v768
    %v785 = vadd.f32 %v689, %v769
    %v786 = vadd.f32 %v690, %v770
    %v787 = vlaneseq
    %v788 = vshrl.u32 %v787, 7
    %v789 = vsub.s32 5, %v788
    %v790 = vrot.slane %v289, %v789
    %v791 = vlaneseq
    %v792 = vshrl.u32 %v791, 7
    %v793 = vsub.s32 5, %v792
    %v794 = vrot.slane %v290, %v793
    %v795 = vlaneseq
    %v796 = vshrl.u32 %v795, 7
    %v797 = vsub.s32 5, %v796
    %v798 = vrot.slane %v291, %v797
    %v799 = vlaneseq
    %v800 = vshrl.u32 %v799, 7
    %v801 = vsub.s32 5, %v800
    %v802 = vrot.slane %v292, %v801
    %v803 = vlaneseq
    %v804 = vshrl.u32 %v803, 7
    %v805 = vsub.s32 5, %v804
    %v806 = vrot.slane %v293, %v805
    %v807 = vlaneseq
    %v808 = vshrl.u32 %v807, 7
    %v809 = vsub.s32 5, %v808
    %v810 = vrot.slane %v294, %v809
    %v811 = vlaneseq
    %v812 = vshrl.u32 %v811, 7
    %v813 = vsub.s32 5, %v812
    %v814 = vrot.slane %v295, %v813
    %v815 = vlaneseq
    %v816 = vshrl.u32 %v815, 7
    %v817 = vsub.s32 5, %v816
    %v818 = vrot.slane %v296, %v817
    %v819 = vlaneseq
    %v820 = vshrl.u32 %v819, 7
    %v821 = vsub.s32 5, %v820
    %v822 = vrot.slane %v297, %v821
    %v823 = vlaneseq
    %v824 = vshrl.u32 %v823, 7
    %v825 = vsub.s32 5, %v824
    %v826 = vrot.slane %v298, %v825
    %v827 = vlaneseq
    %v828 = vshrl.u32 %v827, 7
    %v829 = vsub.s32 5, %v828
    %v830 = vrot.slane %v299, %v829
    %v831 = vlaneseq
    %v832 = vshrl.u32 %v831, 7
    %v833 = vsub.s32 5, %v832
    %v834 = vrot.slane %v300, %v833
    %v835 = vlaneseq
    %v836 = vshrl.u32 %v835, 7
    %v837 = vsub.s32 5, %v836
    %v838 = vrot.slane %v301, %v837
    %v839 = vlaneseq
    %v840 = vshrl.u32 %v839, 7
    %v841 = vsub.s32 5, %v840
    %v842 = vrot.slane %v302, %v841
    %v843 = vlaneseq
    %v844 = vshrl.u32 %v843, 7
    %v845 = vsub.s32 5, %v844
    %v846 = vrot.slane %v303, %v845
    %v847 = vlaneseq
    %v848 = vshrl.u32 %v847, 7
    %v849 = vsub.s32 5, %v848
    %v850 = vrot.slane %v304, %v849
    %v851 = vmul.f32 %v790, %v294
    %v852 = vmul.f32 %v794, %v294
    %v853 = vmul.f32 %v798, %v294
    %v854 = vmul.f32 %v802, %v294
    %v855 = vmul.f32 %v806, %v294
    %v856 = vmul.f32 %v810, %v294
    %v857 = vmul.f32 %v814, %v294
    %v858 = vmul.f32 %v818, %v294
    %v859 = vmul.f32 %v822, %v302
    %v860 = vmul.f32 %v826, %v302
    %v861 = vmul.f32 %v830, %v302
    %v862 = vmul.f32 %v834, %v302
    %v863 = vmul.f32 %v838, %v302
    %v864 = vmul.f32 %v842, %v302
    %v865 = vmul.f32 %v846, %v302
    %v866 = vmul.f32 %v850, %v302
    %v867 = vadd.f32 %v771, %v851
    %v868 = vadd.f32 %v772, %v852
    %v869 = vadd.f32 %v773, %v853
    %v870 = vadd.f32 %v774, %v854
    %v871 = vadd.f32 %v775, %v855
    %v872 = vadd.f32 %v776, %v856
    %v873 = vadd.f32 %v777, %v857
    %v874 = vadd.f32 %v778, %v858
    %v875 = vadd.f32 %v779, %v859
    %v876 = vadd.f32 %v780, %v860
    %v877 = vadd.f32 %v781, %v861
    %v878 = vadd.f32 %v782, %v862
    %v879 = vadd.f32 %v783, %v863
    %v880 = vadd.f32 %v784, %v864
    %v881 = vadd.f32 %v785, %v865
    %v882 = vadd.f32 %v786, %v866
    %v883 = vlaneseq
    %v884 = vshrl.u32 %v883, 7
    %v885 = vsub.s32 6, %v884
    %v886 = vrot.slane %v289, %v885
    %v887 = vlaneseq
    %v888 = vshrl.u32 %v887, 7
    %v889 = vsub.s32 6, %v888
    %v890 = vrot.slane %v290, %v889
    %v891 = vlaneseq
    %v892 = vshrl.u32 %v891, 7
    %v893 = vsub.s32 6, %v892
    %v894 = vrot.slane %v291, %v893
    %v895 = vlaneseq
    %v896 = vshrl.u32 %v895, 7
    %v897 = vsub.s32 6, %v896
    %v898 = vrot.slane %v292, %v897
    %v899 = vlaneseq
    %v900 = vshrl.u32 %v899, 7
    %v901 = vsub.s32 6, %v900
    %v902 = vrot.slane %v293, %v901
    %v903 = vlaneseq
    %v904 = vshrl.u32 %v903, 7
    %v905 = vsub.s32 6, %v904
    %v906 = vrot.slane %v294, %v905
    %v907 = vlaneseq
    %v908 = vshrl.u32 %v907, 7
    %v909 = vsub.s32 6, %v908
    %v910 = vrot.slane %v295, %v909
    %v911 = vlaneseq
    %v912 = vshrl.u32 %v911, 7
    %v913 = vsub.s32 6, %v912
    %v914 = vrot.slane %v296, %v913
    %v915 = vlaneseq
    %v916 = vshrl.u32 %v915, 7
    %v917 = vsub.s32 6, %v916
    %v918 = vrot.slane %v297, %v917
    %v919 = vlaneseq
    %v920 = vshrl.u32 %v919, 7
    %v921 = vsub.s32 6, %v920
    %v922 = vrot.slane %v298, %v921
    %v923 = vlaneseq
    %v924 = vshrl.u32 %v923, 7
    %v925 = vsub.s32 6, %v924
    %v926 = vrot.slane %v299, %v925
    %v927 = vlaneseq
    %v928 = vshrl.u32 %v927, 7
    %v929 = vsub.s32 6, %v928
    %v930 = vrot.slane %v300, %v929
    %v931 = vlaneseq
    %v932 = vshrl.u32 %v931, 7
    %v933 = vsub.s32 6, %v932
    %v934 = vrot.slane %v301, %v933
    %v935 = vlaneseq
    %v936 = vshrl.u32 %v935, 7
    %v937 = vsub.s32 6, %v936
    %v938 = vrot.slane %v302, %v937
    %v939 = vlaneseq
    %v940 = vshrl.u32 %v939, 7
    %v941 = vsub.s32 6, %v940
    %v942 = vrot.slane %v303, %v941
    %v943 = vlaneseq
    %v944 = vshrl.u32 %v943, 7
    %v945 = vsub.s32 6, %v944
    %v946 = vrot.slane %v304, %v945
    %v947 = vmul.f32 %v886, %v295
    %v948 = vmul.f32 %v890, %v295
    %v949 = vmul.f32 %v894, %v295
    %v950 = vmul.f32 %v898, %v295
    %v951 = vmul.f32 %v902, %v295
    %v952 = vmul.f32 %v906, %v295
    %v953 = vmul.f32 %v910, %v295
    %v954 = vmul.f32 %v914, %v295
    %v955 = vmul.f32 %v918, %v303
    %v956 = vmul.f32 %v922, %v303
    %v957 = vmul.f32 %v926, %v303
    %v958 = vmul.f32 %v930, %v303
    %v959 = vmul.f32 %v934, %v303
    %v960 = vmul.f32 %v938, %v303
    %v961 = vmul.f32 %v942, %v303
    %v962 = vmul.f32 %v946, %v303
    %v963 = vadd.f32 %v867, %v947
    %v964 = vadd.f32 %v868, %v948
    %v965 = vadd.f32 %v869, %v949
    %v966 = vadd.f32 %v870, %v950
    %v967 = vadd.f32 %v871, %v951
    %v968 = vadd.f32 %v872, %v952
    %v969 = vadd.f32 %v873, %v953
    %v970 = vadd.f32 %v874, %v954
    %v971 = vadd.f32 %v875, %v955
    %v972 = vadd.f32 %v876, %v956
    %v973 = vadd.f32 %v877, %v957
    %v974 = vadd.f32 %v878, %v958
    %v975 = vadd.f32 %v879, %v959
    %v976 = vadd.f32 %v880, %v960
    %v977 = vadd.f32 %v881, %v961
    %v978 = vadd.f32 %v882, %v962
    %v979 = vlaneseq
    %v980 = vshrl.u32 %v979, 7
    %v981 = vsub.s32 7, %v980
    %v982 = vrot.slane %v289, %v981
    %v983 = vlaneseq
    %v984 = vshrl.u32 %v983, 7
    %v985 = vsub.s32 7, %v984
    %v986 = vrot.slane %v290, %v985
    %v987 = vlaneseq
    %v988 = vshrl.u32 %v987, 7
    %v989 = vsub.s32 7, %v988
    %v990 = vrot.slane %v291, %v989
    %v991 = vlaneseq
    %v992 = vshrl.u32 %v991, 7
    %v993 = vsub.s32 7, %v992
    %v994 = vrot.slane %v292, %v993
    %v995 = vlaneseq
    %v996 = vshrl.u32 %v995, 7
    %v997 = vsub.s32 7, %v996
    %v998 = vrot.slane %v293, %v997
    %v999 = vlaneseq
    %v1000 = vshrl.u32 %v999, 7
    %v1001 = vsub.s32 7, %v1000
    %v1002 = vrot.slane %v294, %v1001
    %v1003 = vlaneseq
    %v1004 = vshrl.u32 %v1003, 7
    %v1005 = vsub.s32 7, %v1004
    %v1006 = vrot.slane %v295, %v1005
    %v1007 = vlaneseq
    %v1008 = vshrl.u32 %v1007, 7
    %v1009 = vsub.s32 7, %v1008
    %v1010 = vrot.slane %v296, %v1009
    %v1011 = vlaneseq
    %v1012 = vshrl.u32 %v1011, 7
    %v1013 = vsub.s32 7, %v1012
    %v1014 = vrot.slane %v297, %v1013
    %v1015 = vlaneseq
    %v1016 = vshrl.u32 %v1015, 7
    %v1017 = vsub.s32 7, %v1016
    %v1018 = vrot.slane %v298, %v1017
    %v1019 = vlaneseq
    %v1020 = vshrl.u32 %v1019, 7
    %v1021 = vsub.s32 7, %v1020
    %v1022 = vrot.slane %v299, %v1021
    %v1023 = vlaneseq
    %v1024 = vshrl.u32 %v1023, 7
    %v1025 = vsub.s32 7, %v1024
    %v1026 = vrot.slane %v300, %v1025
    %v1027 = vlaneseq
    %v1028 = vshrl.u32 %v1027, 7
    %v1029 = vsub.s32 7, %v1028
    %v1030 = vrot.slane %v301, %v1029
    %v1031 = vlaneseq
    %v1032 = vshrl.u32 %v1031, 7
    %v1033 = vsub.s32 7, %v1032
    %v1034 = vrot.slane %v302, %v1033
    %v1035 = vlaneseq
    %v1036 = vshrl.u32 %v1035, 7
    %v1037 = vsub.s32 7, %v1036
    %v1038 = vrot.slane %v303, %v1037
    %v1039 = vlaneseq
    %v1040 = vshrl.u32 %v1039, 7
    %v1041 = vsub.s32 7, %v1040
    %v1042 = vrot.slane %v304, %v1041
    %v1043 = vmul.f32 %v982, %v296
    %v1044 = vmul.f32 %v986, %v296
    %v1045 = vmul.f32 %v990, %v296
    %v1046 = vmul.f32 %v994, %v296
    %v1047 = vmul.f32 %v998, %v296
    %v1048 = vmul.f32 %v1002, %v296
    %v1049 = vmul.f32 %v1006, %v296
    %v1050 = vmul.f32 %v1010, %v296
    %v1051 = vmul.f32 %v1014, %v304
    %v1052 = vmul.f32 %v1018, %v304
    %v1053 = vmul.f32 %v1022, %v304
    %v1054 = vmul.f32 %v1026, %v304
    %v1055 = vmul.f32 %v1030, %v304
    %v1056 = vmul.f32 %v1034, %v304
    %v1057 = vmul.f32 %v1038, %v304
    %v1058 = vmul.f32 %v1042, %v304
    %v1059 = vadd.f32 %v963, %v1043
    %v1060 = vadd.f32 %v964, %v1044
    %v1061 = vadd.f32 %v965, %v1045
    %v1062 = vadd.f32 %v966, %v1046
    %v1063 = vadd.f32 %v967, %v1047
    %v1064 = vadd.f32 %v968, %v1048
    %v1065 = vadd.f32 %v969, %v1049
    %v1066 = vadd.f32 %v970, %v1050
    %v1067 = vadd.f32 %v971, %v1051
    %v1068 = vadd.f32 %v972, %v1052
    %v1069 = vadd.f32 %v973, %v1053
    %v1070 = vadd.f32 %v974, %v1054
    %v1071 = vadd.f32 %v975, %v1055
    %v1072 = vadd.f32 %v976, %v1056
    %v1073 = vadd.f32 %v977, %v1057
    %v1074 = vadd.f32 %v978, %v1058
    %v1075 = vlaneseq
    %v1076 = vshrl.u32 %v1075, 7
    %v1077 = vsub.s32 0, %v1076
    %v1078 = vrot.slane %v1059, %v1077
    %v1079 = vlaneseq
    %v1080 = vshrl.u32 %v1079, 7
    %v1081 = vsub.s32 0, %v1080
    %v1082 = vrot.slane %v1060, %v1081
    %v1083 = vlaneseq
    %v1084 = vshrl.u32 %v1083, 7
    %v1085 = vsub.s32 0, %v1084
    %v1086 = vrot.slane %v1061, %v1085
    %v1087 = vlaneseq
    %v1088 = vshrl.u32 %v1087, 7
    %v1089 = vsub.s32 0, %v1088
    %v1090 = vrot.slane %v1062, %v1089
    %v1091 = vlaneseq
    %v1092 = vshrl.u32 %v1091, 7
    %v1093 = vsub.s32 0, %v1092
    %v1094 = vrot.slane %v1063, %v1093
    %v1095 = vlaneseq
    %v1096 = vshrl.u32 %v1095, 7
    %v1097 = vsub.s32 0, %v1096
    %v1098 = vrot.slane %v1064, %v1097
    %v1099 = vlaneseq
    %v1100 = vshrl.u32 %v1099, 7
    %v1101 = vsub.s32 0, %v1100
    %v1102 = vrot.slane %v1065, %v1101
    %v1103 = vlaneseq
    %v1104 = vshrl.u32 %v1103, 7
    %v1105 = vsub.s32 0, %v1104
    %v1106 = vrot.slane %v1066, %v1105
    %v1107 = vlaneseq
    %v1108 = vshrl.u32 %v1107, 7
    %v1109 = vsub.s32 0, %v1108
    %v1110 = vrot.slane %v1067, %v1109
    %v1111 = vlaneseq
    %v1112 = vshrl.u32 %v1111, 7
    %v1113 = vsub.s32 0, %v1112
    %v1114 = vrot.slane %v1068, %v1113
    %v1115 = vlaneseq
    %v1116 = vshrl.u32 %v1115, 7
    %v1117 = vsub.s32 0, %v1116
    %v1118 = vrot.slane %v1069, %v1117
    %v1119 = vlaneseq
    %v1120 = vshrl.u32 %v1119, 7
    %v1121 = vsub.s32 0, %v1120
    %v1122 = vrot.slane %v1070, %v1121
    %v1123 = vlaneseq
    %v1124 = vshrl.u32 %v1123, 7
    %v1125 = vsub.s32 0, %v1124
    %v1126 = vrot.slane %v1071, %v1125
    %v1127 = vlaneseq
    %v1128 = vshrl.u32 %v1127, 7
    %v1129 = vsub.s32 0, %v1128
    %v1130 = vrot.slane %v1072, %v1129
    %v1131 = vlaneseq
    %v1132 = vshrl.u32 %v1131, 7
    %v1133 = vsub.s32 0, %v1132
    %v1134 = vrot.slane %v1073, %v1133
    %v1135 = vlaneseq
    %v1136 = vshrl.u32 %v1135, 7
    %v1137 = vsub.s32 0, %v1136
    %v1138 = vrot.slane %v1074, %v1137
    %v1139 = vmul.f32 %v1078, %v289
    %v1140 = vmul.f32 %v1082, %v289
    %v1141 = vmul.f32 %v1086, %v289
    %v1142 = vmul.f32 %v1090, %v289
    %v1143 = vmul.f32 %v1094, %v289
    %v1144 = vmul.f32 %v1098, %v289
    %v1145 = vmul.f32 %v1102, %v289
    %v1146 = vmul.f32 %v1106, %v289
    %v1147 = vmul.f32 %v1110, %v297
    %v1148 = vmul.f32 %v1114, %v297
    %v1149 = vmul.f32 %v1118, %v297
    %v1150 = vmul.f32 %v1122, %v297
    %v1151 = vmul.f32 %v1126, %v297
    %v1152 = vmul.f32 %v1130, %v297
    %v1153 = vmul.f32 %v1134, %v297
    %v1154 = vmul.f32 %v1138, %v297
    %v1155 = vlaneseq
    %v1156 = vshrl.u32 %v1155, 7
    %v1157 = vsub.s32 1, %v1156
    %v1158 = vrot.slane %v1059, %v1157
    %v1159 = vlaneseq
    %v1160 = vshrl.u32 %v1159, 7
    %v1161 = vsub.s32 1, %v1160
    %v1162 = vrot.slane %v1060, %v1161
    %v1163 = vlaneseq
    %v1164 = vshrl.u32 %v1163, 7
    %v1165 = vsub.s32 1, %v1164
    %v1166 = vrot.slane %v1061, %v1165
    %v1167 = vlaneseq
    %v1168 = vshrl.u32 %v1167, 7
    %v1169 = vsub.s32 1, %v1168
    %v1170 = vrot.slane %v1062, %v1169
    %v1171 = vlaneseq
    %v1172 = vshrl.u32 %v1171, 7
    %v1173 = vsub.s32 1, %v1172
    %v1174 = vrot.slane %v1063, %v1173
    %v1175 = vlaneseq
    %v1176 = vshrl.u32 %v1175, 7
    %v1177 = vsub.s32 1, %v1176
    %v1178 = vrot.slane %v1064, %v1177
    %v1179 = vlaneseq
    %v1180 = vshrl.u32 %v1179, 7
    %v1181 = vsub.s32 1, %v1180
    %v1182 = vrot.slane %v1065, %v1181
    %v1183 = vlaneseq
    %v1184 = vshrl.u32 %v1183, 7
    %v1185 = vsub.s32 1, %v1184
    %v1186 = vrot.slane %v1066, %v1185
    %v1187 = vlaneseq
    %v1188 = vshrl.u32 %v1187, 7
    %v1189 = vsub.s32 1, %v1188
    %v1190 = vrot.slane %v1067, %v1189
    %v1191 = vlaneseq
    %v1192 = vshrl.u32 %v1191, 7
    %v1193 = vsub.s32 1, %v1192
    %v1194 = vrot.slane %v1068, %v1193
    %v1195 = vlaneseq
    %v1196 = vshrl.u32 %v1195, 7
    %v1197 = vsub.s32 1, %v1196
    %v1198 = vrot.slane %v1069, %v1197
    %v1199 = vlaneseq
    %v1200 = vshrl.u32 %v1199, 7
    %v1201 = vsub.s32 1, %v1200
    %v1202 = vrot.slane %v1070, %v1201
    %v1203 = vlaneseq
    %v1204 = vshrl.u32 %v1203, 7
    %v1205 = vsub.s32 1, %v1204
    %v1206 = vrot.slane %v1071, %v1205
    %v1207 = vlaneseq
    %v1208 = vshrl.u32 %v1207, 7
    %v1209 = vsub.s32 1, %v1208
    %v1210 = vrot.slane %v1072, %v1209
    %v1211 = vlaneseq
    %v1212 = vshrl.u32 %v1211, 7
    %v1213 = vsub.s32 1, %v1212
    %v1214 = vrot.slane %v1073, %v1213
    %v1215 = vlaneseq
    %v1216 = vshrl.u32 %v1215, 7
    %v1217 = vsub.s32 1, %v1216
    %v1218 = vrot.slane %v1074, %v1217
    %v1219 = vmul.f32 %v1158, %v290
    %v1220 = vmul.f32 %v1162, %v290
    %v1221 = vmul.f32 %v1166, %v290
    %v1222 = vmul.f32 %v1170, %v290
    %v1223 = vmul.f32 %v1174, %v290
    %v1224 = vmul.f32 %v1178, %v290
    %v1225 = vmul.f32 %v1182, %v290
    %v1226 = vmul.f32 %v1186, %v290
    %v1227 = vmul.f32 %v1190, %v298
    %v1228 = vmul.f32 %v1194, %v298
    %v1229 = vmul.f32 %v1198, %v298
    %v1230 = vmul.f32 %v1202, %v298
    %v1231 = vmul.f32 %v1206, %v298
    %v1232 = vmul.f32 %v1210, %v298
    %v1233 = vmul.f32 %v1214, %v298
    %v1234 = vmul.f32 %v1218, %v298
    %v1235 = vadd.f32 %v1139, %v1219
    %v1236 = vadd.f32 %v1140, %v1220
    %v1237 = vadd.f32 %v1141, %v1221
    %v1238 = vadd.f32 %v1142, %v1222
    %v1239 = vadd.f32 %v1143, %v1223
    %v1240 = vadd.f32 %v1144, %v1224
    %v1241 = vadd.f32 %v1145, %v1225
    %v1242 = vadd.f32 %v1146, %v1226
    %v1243 = vadd.f32 %v1147, %v1227
    %v1244 = vadd.f32 %v1148, %v1228
    %v1245 = vadd.f32 %v1149, %v1229
    %v1246 = vadd.f32 %v1150, %v1230
    %v1247 = vadd.f32 %v1151, %v1231
    %v1248 = vadd.f32 %v1152, %v1232
    %v1249 = vadd.f32 %v1153, %v1233
    %v1250 = vadd.f32 %v1154, %v1234
    %v1251 = vlaneseq
    %v1252 = vshrl.u32 %v1251, 7
    %v1253 = vsub.s32 2, %v1252
    %v1254 = vrot.slane %v1059, %v1253
    %v1255 = vlaneseq
    %v1256 = vshrl.u32 %v1255, 7
    %v1257 = vsub.s32 2, %v1256
    %v1258 = vrot.slane %v1060, %v1257
    %v1259 = vlaneseq
    %v1260 = vshrl.u32 %v1259, 7
    %v1261 = vsub.s32 2, %v1260
    %v1262 = vrot.slane %v1061, %v1261
    %v1263 = vlaneseq
    %v1264 = vshrl.u32 %v1263, 7
    %v1265 = vsub.s32 2, %v1264
    %v1266 = vrot.slane %v1062, %v1265
    %v1267 = vlaneseq
    %v1268 = vshrl.u32 %v1267, 7
    %v1269 = vsub.s32 2, %v1268
    %v1270 = vrot.slane %v1063, %v1269
    %v1271 = vlaneseq
    %v1272 = vshrl.u32 %v1271, 7
    %v1273 = vsub.s32 2, %v1272
    %v1274 = vrot.slane %v1064, %v1273
    %v1275 = vlaneseq
    %v1276 = vshrl.u32 %v1275, 7
    %v1277 = vsub.s32 2, %v1276
    %v1278 = vrot.slane %v1065, %v1277
    %v1279 = vlaneseq
    %v1280 = vshrl.u32 %v1279, 7
    %v1281 = vsub.s32 2, %v1280
    %v1282 = vrot.slane %v1066, %v1281
    %v1283 = vlaneseq
    %v1284 = vshrl.u32 %v1283, 7
    %v1285 = vsub.s32 2, %v1284
    %v1286 = vrot.slane %v1067, %v1285
    %v1287 = vlaneseq
    %v1288 = vshrl.u32 %v1287, 7
    %v1289 = vsub.s32 2, %v1288
    %v1290 = vrot.slane %v1068, %v1289
    %v1291 = vlaneseq
    %v1292 = vshrl.u32 %v1291, 7
    %v1293 = vsub.s32 2, %v1292
    %v1294 = vrot.slane %v1069, %v1293
    %v1295 = vlaneseq
    %v1296 = vshrl.u32 %v1295, 7
    %v1297 = vsub.s32 2, %v1296
    %v1298 = vrot.slane %v1070, %v1297
    %v1299 = vlaneseq
    %v1300 = vshrl.u32 %v1299, 7
    %v1301 = vsub.s32 2, %v1300
    %v1302 = vrot.slane %v1071, %v1301
    %v1303 = vlaneseq
    %v1304 = vshrl.u32 %v1303, 7
    %v1305 = vsub.s32 2, %v1304
    %v1306 = vrot.slane %v1072, %v1305
    %v1307 = vlaneseq
    %v1308 = vshrl.u32 %v1307, 7
    %v1309 = vsub.s32 2, %v1308
    %v1310 = vrot.slane %v1073, %v1309
    %v1311 = vlaneseq
    %v1312 = vshrl.u32 %v1311, 7
    %v1313 = vsub.s32 2, %v1312
    %v1314 = vrot.slane %v1074, %v1313
    %v1315 = vmul.f32 %v1254, %v291
    %v1316 = vmul.f32 %v1258, %v291
    %v1317 = vmul.f32 %v1262, %v291
    %v1318 = vmul.f32 %v1266, %v291
    %v1319 = vmul.f32 %v1270, %v291
    %v1320 = vmul.f32 %v1274, %v291
    %v1321 = vmul.f32 %v1278, %v291
    %v1322 = vmul.f32 %v1282, %v291
    %v1323 = vmul.f32 %v1286, %v299
    %v1324 = vmul.f32 %v1290, %v299
    %v1325 = vmul.f32 %v1294, %v299
    %v1326 = vmul.f32 %v1298, %v299
    %v1327 = vmul.f32 %v1302, %v299
    %v1328 = vmul.f32 %v1306, %v299
    %v1329 = vmul.f32 %v1310, %v299
    %v1330 = vmul.f32 %v1314, %v299
    %v1331 = vadd.f32 %v1235, %v1315
    %v1332 = vadd.f32 %v1236, %v1316
    %v1333 = vadd.f32 %v1237, %v1317
    %v1334 = vadd.f32 %v1238, %v1318
    %v1335 = vadd.f32 %v1239, %v1319
    %v1336 = vadd.f32 %v1240, %v1320
    %v1337 = vadd.f32 %v1241, %v1321
    %v1338 = vadd.f32 %v1242, %v1322
    %v1339 = vadd.f32 %v1243, %v1323
    %v1340 = vadd.f32 %v1244, %v1324
    %v1341 = vadd.f32 %v1245, %v1325
    %v1342 = vadd.f32 %v1246, %v1326
    %v1343 = vadd.f32 %v1247, %v1327
    %v1344 = vadd.f32 %v1248, %v1328
    %v1345 = vadd.f32 %v1249, %v1329
    %v1346 = vadd.f32 %v1250, %v1330
    %v1347 = vlaneseq
    %v1348 = vshrl.u32 %v1347, 7
    %v1349 = vsub.s32 3, %v1348
    %v1350 = vrot.slane %v1059, %v1349
    %v1351 = vlaneseq
    %v1352 = vshrl.u32 %v1351, 7
    %v1353 = vsub.s32 3, %v1352
    %v1354 = vrot.slane %v1060, %v1353
    %v1355 = vlaneseq
    %v1356 = vshrl.u32 %v1355, 7
    %v1357 = vsub.s32 3, %v1356
    %v1358 = vrot.slane %v1061, %v1357
    %v1359 = vlaneseq
    %v1360 = vshrl.u32 %v1359, 7
    %v1361 = vsub.s32 3, %v1360
    %v1362 = vrot.slane %v1062, %v1361
    %v1363 = vlaneseq
    %v1364 = vshrl.u32 %v1363, 7
    %v1365 = vsub.s32 3, %v1364
    %v1366 = vrot.slane %v1063, %v1365
    %v1367 = vlaneseq
    %v1368 = vshrl.u32 %v1367, 7
    %v1369 = vsub.s32 3, %v1368
    %v1370 = vrot.slane %v1064, %v1369
    %v1371 = vlaneseq
    %v1372 = vshrl.u32 %v1371, 7
    %v1373 = vsub.s32 3, %v1372
    %v1374 = vrot.slane %v1065, %v1373
    %v1375 = vlaneseq
    %v1376 = vshrl.u32 %v1375, 7
    %v1377 = vsub.s32 3, %v1376
    %v1378 = vrot.slane %v1066, %v1377
    %v1379 = vlaneseq
    %v1380 = vshrl.u32 %v1379, 7
    %v1381 = vsub.s32 3, %v1380
    %v1382 = vrot.slane %v1067, %v1381
    %v1383 = vlaneseq
    %v1384 = vshrl.u32 %v1383, 7
    %v1385 = vsub.s32 3, %v1384
    %v1386 = vrot.slane %v1068, %v1385
    %v1387 = vlaneseq
    %v1388 = vshrl.u32 %v1387, 7
    %v1389 = vsub.s32 3, %v1388
    %v1390 = vrot.slane %v1069, %v1389
    %v1391 = vlaneseq
    %v1392 = vshrl.u32 %v1391, 7
    %v1393 = vsub.s32 3, %v1392
    %v1394 = vrot.slane %v1070, %v1393
    %v1395 = vlaneseq
    %v1396 = vshrl.u32 %v1395, 7
    %v1397 = vsub.s32 3, %v1396
    %v1398 = vrot.slane %v1071, %v1397
    %v1399 = vlaneseq
    %v1400 = vshrl.u32 %v1399, 7
    %v1401 = vsub.s32 3, %v1400
    %v1402 = vrot.slane %v1072, %v1401
    %v1403 = vlaneseq
    %v1404 = vshrl.u32 %v1403, 7
    %v1405 = vsub.s32 3, %v1404
    %v1406 = vrot.slane %v1073, %v1405
    %v1407 = vlaneseq
    %v1408 = vshrl.u32 %v1407, 7
    %v1409 = vsub.s32 3, %v1408
    %v1410 = vrot.slane %v1074, %v1409
    %v1411 = vmul.f32 %v1350, %v292
    %v1412 = vmul.f32 %v1354, %v292
    %v1413 = vmul.f32 %v1358, %v292
    %v1414 = vmul.f32 %v1362, %v292
    %v1415 = vmul.f32 %v1366, %v292
    %v1416 = vmul.f32 %v1370, %v292
    %v1417 = vmul.f32 %v1374, %v292
    %v1418 = vmul.f32 %v1378, %v292
    %v1419 = vmul.f32 %v1382, %v300
    %v1420 = vmul.f32 %v1386, %v300
    %v1421 = vmul.f32 %v1390, %v300
    %v1422 = vmul.f32 %v1394, %v300
    %v1423 = vmul.f32 %v1398, %v300
    %v1424 = vmul.f32 %v1402, %v300
    %v1425 = vmul.f32 %v1406, %v300
    %v1426 = vmul.f32 %v1410, %v300
    %v1427 = vadd.f32 %v1331, %v1411
    %v1428 = vadd.f32 %v1332, %v1412
    %v1429 = vadd.f32 %v1333, %v1413
    %v1430 = vadd.f32 %v1334, %v1414
    %v1431 = vadd.f32 %v1335, %v1415
    %v1432 = vadd.f32 %v1336, %v1416
    %v1433 = vadd.f32 %v1337, %v1417
    %v1434 = vadd.f32 %v1338, %v1418
    %v1435 = vadd.f32 %v1339, %v1419
    %v1436 = vadd.f32 %v1340, %v1420
    %v1437 = vadd.f32 %v1341, %v1421
    %v1438 = vadd.f32 %v1342, %v1422
    %v1439 = vadd.f32 %v1343, %v1423
    %v1440 = vadd.f32 %v1344, %v1424
    %v1441 = vadd.f32 %v1345, %v1425
    %v1442 = vadd.f32 %v1346, %v1426
    %v1443 = vlaneseq
    %v1444 = vshrl.u32 %v1443, 7
    %v1445 = vsub.s32 4, %v1444
    %v1446 = vrot.slane %v1059, %v1445
    %v1447 = vlaneseq
    %v1448 = vshrl.u32 %v1447, 7
    %v1449 = vsub.s32 4, %v1448
    %v1450 = vrot.slane %v1060, %v1449
    %v1451 = vlaneseq
    %v1452 = vshrl.u32 %v1451, 7
    %v1453 = vsub.s32 4, %v1452
    %v1454 = vrot.slane %v1061, %v1453
    %v1455 = vlaneseq
    %v1456 = vshrl.u32 %v1455, 7
    %v1457 = vsub.s32 4, %v1456
    %v1458 = vrot.slane %v1062, %v1457
    %v1459 = vlaneseq
    %v1460 = vshrl.u32 %v1459, 7
    %v1461 = vsub.s32 4, %v1460
    %v1462 = vrot.slane %v1063, %v1461
    %v1463 = vlaneseq
    %v1464 = vshrl.u32 %v1463, 7
    %v1465 = vsub.s32 4, %v1464
    %v1466 = vrot.slane %v1064, %v1465
    %v1467 = vlaneseq
    %v1468 = vshrl.u32 %v1467, 7
    %v1469 = vsub.s32 4, %v1468
    %v1470 = vrot.slane %v1065, %v1469
    %v1471 = vlaneseq
    %v1472 = vshrl.u32 %v1471, 7
    %v1473 = vsub.s32 4, %v1472
    %v1474 = vrot.slane %v1066, %v1473
    %v1475 = vlaneseq
    %v1476 = vshrl.u32 %v1475, 7
    %v1477 = vsub.s32 4, %v1476
    %v1478 = vrot.slane %v1067, %v1477
    %v1479 = vlaneseq
    %v1480 = vshrl.u32 %v1479, 7
    %v1481 = vsub.s32 4, %v1480
    %v1482 = vrot.slane %v1068, %v1481
    %v1483 = vlaneseq
    %v1484 = vshrl.u32 %v1483, 7
    %v1485 = vsub.s32 4, %v1484
    %v1486 = vrot.slane %v1069, %v1485
    %v1487 = vlaneseq
    %v1488 = vshrl.u32 %v1487, 7
    %v1489 = vsub.s32 4, %v1488
    %v1490 = vrot.slane %v1070, %v1489
    %v1491 = vlaneseq
    %v1492 = vshrl.u32 %v1491, 7
    %v1493 = vsub.s32 4, %v1492
    %v1494 = vrot.slane %v1071, %v1493
    %v1495 = vlaneseq
    %v1496 = vshrl.u32 %v1495, 7
    %v1497 = vsub.s32 4, %v1496
    %v1498 = vrot.slane %v1072, %v1497
    %v1499 = vlaneseq
    %v1500 = vshrl.u32 %v1499, 7
    %v1501 = vsub.s32 4, %v1500
    %v1502 = vrot.slane %v1073, %v1501
    %v1503 = vlaneseq
    %v1504 = vshrl.u32 %v1503, 7
    %v1505 = vsub.s32 4, %v1504
    %v1506 = vrot.slane %v1074, %v1505
    %v1507 = vmul.f32 %v1446, %v293
    %v1508 = vmul.f32 %v1450, %v293
    %v1509 = vmul.f32 %v1454, %v293
    %v1510 = vmul.f32 %v1458, %v293
    %v1511 = vmul.f32 %v1462, %v293
    %v1512 = vmul.f32 %v1466, %v293
    %v1513 = vmul.f32 %v1470, %v293
    %v1514 = vmul.f32 %v1474, %v293
    %v1515 = vmul.f32 %v1478, %v301
    %v1516 = vmul.f32 %v1482, %v301
    %v1517 = vmul.f32 %v1486, %v301
    %v1518 = vmul.f32 %v1490, %v301
    %v1519 = vmul.f32 %v1494, %v301
    %v1520 = vmul.f32 %v1498, %v301
    %v1521 = vmul.f32 %v1502, %v301
    %v1522 = vmul.f32 %v1506, %v301
    %v1523 = vadd.f32 %v1427, %v1507
    %v1524 = vadd.f32 %v1428, %v1508
    %v1525 = vadd.f32 %v1429, %v1509
    %v1526 = vadd.f32 %v1430, %v1510
    %v1527 = vadd.f32 %v1431, %v1511
    %v1528 = vadd.f32 %v1432, %v1512
    %v1529 = vadd.f32 %v1433, %v1513
    %v1530 = vadd.f32 %v1434, %v1514
    %v1531 = vadd.f32 %v1435, %v1515
    %v1532 = vadd.f32 %v1436, %v1516
    %v1533 = vadd.f32 %v1437, %v1517
    %v1534 = vadd.f32 %v1438, %v1518
    %v1535 = vadd.f32 %v1439, %v1519
    %v1536 = vadd.f32 %v1440, %v1520
    %v1537 = vadd.f32 %v1441, %v1521
    %v1538 = vadd.f32 %v1442, %v1522
    %v1539 = vlaneseq
    %v1540 = vshrl.u32 %v1539, 7
    %v1541 = vsub.s32 5, %v1540
    %v1542 = vrot.slane %v1059, %v1541
    %v1543 = vlaneseq
    %v1544 = vshrl.u32 %v1543, 7
    %v1545 = vsub.s32 5, %v1544
    %v1546 = vrot.slane %v1060, %v1545
    %v1547 = vlaneseq
    %v1548 = vshrl.u32 %v1547, 7
    %v1549 = vsub.s32 5, %v1548
    %v1550 = vrot.slane %v1061, %v1549
    %v1551 = vlaneseq
    %v1552 = vshrl.u32 %v1551, 7
    %v1553 = vsub.s32 5, %v1552
    %v1554 = vrot.slane %v1062, %v1553
    %v1555 = vlaneseq
    %v1556 = vshrl.u32 %v1555, 7
    %v1557 = vsub.s32 5, %v1556
    %v1558 = vrot.slane %v1063, %v1557
    %v1559 = vlaneseq
    %v1560 = vshrl.u32 %v1559, 7
    %v1561 = vsub.s32 5, %v1560
    %v1562 = vrot.slane %v1064, %v1561
    %v1563 = vlaneseq
    %v1564 = vshrl.u32 %v1563, 7
    %v1565 = vsub.s32 5, %v1564
    %v1566 = vrot.slane %v1065, %v1565
    %v1567 = vlaneseq
    %v1568 = vshrl.u32 %v1567, 7
    %v1569 = vsub.s32 5, %v1568
    %v1570 = vrot.slane %v1066, %v1569
    %v1571 = vlaneseq
    %v1572 = vshrl.u32 %v1571, 7
    %v1573 = vsub.s32 5, %v1572
    %v1574 = vrot.slane %v1067, %v1573
    %v1575 = vlaneseq
    %v1576 = vshrl.u32 %v1575, 7
    %v1577 = vsub.s32 5, %v1576
    %v1578 = vrot.slane %v1068, %v1577
    %v1579 = vlaneseq
    %v1580 = vshrl.u32 %v1579, 7
    %v1581 = vsub.s32 5, %v1580
    %v1582 = vrot.slane %v1069, %v1581
    %v1583 = vlaneseq
    %v1584 = vshrl.u32 %v1583, 7
    %v1585 = vsub.s32 5, %v1584
    %v1586 = vrot.slane %v1070, %v1585
    %v1587 = vlaneseq
    %v1588 = vshrl.u32 %v1587, 7
    %v1589 = vsub.s32 5, %v1588
    %v1590 = vrot.slane %v1071, %v1589
    %v1591 = vlaneseq
    %v1592 = vshrl.u32 %v1591, 7
    %v1593 = vsub.s32 5, %v1592
    %v1594 = vrot.slane %v1072, %v1593
    %v1595 = vlaneseq
    %v1596 = vshrl.u32 %v1595, 7
    %v1597 = vsub.s32 5, %v1596
    %v1598 = vrot.slane %v1073, %v1597
    %v1599 = vlaneseq
    %v1600 = vshrl.u32 %v1599, 7
    %v1601 = vsub.s32 5, %v1600
    %v1602 = vrot.slane %v1074, %v1601
    %v1603 = vmul.f32 %v1542, %v294
    %v1604 = vmul.f32 %v1546, %v294
    %v1605 = vmul.f32 %v1550, %v294
    %v1606 = vmul.f32 %v1554, %v294
    %v1607 = vmul.f32 %v1558, %v294
    %v1608 = vmul.f32 %v1562, %v294
    %v1609 = vmul.f32 %v1566, %v294
    %v1610 = vmul.f32 %v1570, %v294
    %v1611 = vmul.f32 %v1574, %v302
    %v1612 = vmul.f32 %v1578, %v302
    %v1613 = vmul.f32 %v1582, %v302
    %v1614 = vmul.f32 %v1586, %v302
    %v1615 = vmul.f32 %v1590, %v302
    %v1616 = vmul.f32 %v1594, %v302
    %v1617 = vmul.f32 %v1598, %v302
    %v1618 = vmul.f32 %v1602, %v302
    %v1619 = vadd.f32 %v1523, %v1603
    %v1620 = vadd.f32 %v1524, %v1604
    %v1621 = vadd.f32 %v1525, %v1605
    %v1622 = vadd.f32 %v1526, %v1606
    %v1623 = vadd.f32 %v1527, %v1607
    %v1624 = vadd.f32 %v1528, %v1608
    %v1625 = vadd.f32 %v1529, %v1609
    %v1626 = vadd.f32 %v1530, %v1610
    %v1627 = vadd.f32 %v1531, %v1611
    %v1628 = vadd.f32 %v1532, %v1612
    %v1629 = vadd.f32 %v1533, %v1613
    %v1630 = vadd.f32 %v1534, %v1614
    %v1631 = vadd.f32 %v1535, %v1615
    %v1632 = vadd.f32 %v1536, %v1616
    %v1633 = vadd.f32 %v1537, %v1617
    %v1634 = vadd.f32 %v1538, %v1618
    %v1635 = vlaneseq
    %v1636 = vshrl.u32 %v1635, 7
    %v1637 = vsub.s32 6, %v1636
    %v1638 = vrot.slane %v1059, %v1637
    %v1639 = vlaneseq
    %v1640 = vshrl.u32 %v1639, 7
    %v1641 = vsub.s32 6, %v1640
    %v1642 = vrot.slane %v1060, %v1641
    %v1643 = vlaneseq
    %v1644 = vshrl.u32 %v1643, 7
    %v1645 = vsub.s32 6, %v1644
    %v1646 = vrot.slane %v1061, %v1645
    %v1647 = vlaneseq
    %v1648 = vshrl.u32 %v1647, 7
    %v1649 = vsub.s32 6, %v1648
    %v1650 = vrot.slane %v1062, %v1649
    %v1651 = vlaneseq
    %v1652 = vshrl.u32 %v1651, 7
    %v1653 = vsub.s32 6, %v1652
    %v1654 = vrot.slane %v1063, %v1653
    %v1655 = vlaneseq
    %v1656 = vshrl.u32 %v1655, 7
    %v1657 = vsub.s32 6, %v1656
    %v1658 = vrot.slane %v1064, %v1657
    %v1659 = vlaneseq
    %v1660 = vshrl.u32 %v1659, 7
    %v1661 = vsub.s32 6, %v1660
    %v1662 = vrot.slane %v1065, %v1661
    %v1663 = vlaneseq
    %v1664 = vshrl.u32 %v1663, 7
    %v1665 = vsub.s32 6, %v1664
    %v1666 = vrot.slane %v1066, %v1665
    %v1667 = vlaneseq
    %v1668 = vshrl.u32 %v1667, 7
    %v1669 = vsub.s32 6, %v1668
    %v1670 = vrot.slane %v1067, %v1669
    %v1671 = vlaneseq
    %v1672 = vshrl.u32 %v1671, 7
    %v1673 = vsub.s32 6, %v1672
    %v1674 = vrot.slane %v1068, %v1673
    %v1675 = vlaneseq
    %v1676 = vshrl.u32 %v1675, 7
    %v1677 = vsub.s32 6, %v1676
    %v1678 = vrot.slane %v1069, %v1677
    %v1679 = vlaneseq
    %v1680 = vshrl.u32 %v1679, 7
    %v1681 = vsub.s32 6, %v1680
    %v1682 = vrot.slane %v1070, %v1681
    %v1683 = vlaneseq
    %v1684 = vshrl.u32 %v1683, 7
    %v1685 = vsub.s32 6, %v1684
    %v1686 = vrot.slane %v1071, %v1685
    %v1687 = vlaneseq
    %v1688 = vshrl.u32 %v1687, 7
    %v1689 = vsub.s32 6, %v1688
    %v1690 = vrot.slane %v1072, %v1689
    %v1691 = vlaneseq
    %v1692 = vshrl.u32 %v1691, 7
    %v1693 = vsub.s32 6, %v1692
    %v1694 = vrot.slane %v1073, %v1693
    %v1695 = vlaneseq
    %v1696 = vshrl.u32 %v1695, 7
    %v1697 = vsub.s32 6, %v1696
    %v1698 = vrot.slane %v1074, %v1697
    %v1699 = vmul.f32 %v1638, %v295
    %v1700 = vmul.f32 %v1642, %v295
    %v1701 = vmul.f32 %v1646, %v295
    %v1702 = vmul.f32 %v1650, %v295
    %v1703 = vmul.f32 %v1654, %v295
    %v1704 = vmul.f32 %v1658, %v295
    %v1705 = vmul.f32 %v1662, %v295
    %v1706 = vmul.f32 %v1666, %v295
    %v1707 = vmul.f32 %v1670, %v303
    %v1708 = vmul.f32 %v1674, %v303
    %v1709 = vmul.f32 %v1678, %v303
    %v1710 = vmul.f32 %v1682, %v303
    %v1711 = vmul.f32 %v1686, %v303
    %v1712 = vmul.f32 %v1690, %v303
    %v1713 = vmul.f32 %v1694, %v303
    %v1714 = vmul.f32 %v1698, %v303
    %v1715 = vadd.f32 %v1619, %v1699
    %v1716 = vadd.f32 %v1620, %v1700
    %v1717 = vadd.f32 %v1621, %v1701
    %v1718 = vadd.f32 %v1622, %v1702
    %v1719 = vadd.f32 %v1623, %v1703
    %v1720 = vadd.f32 %v1624, %v1704
    %v1721 = vadd.f32 %v1625, %v1705
    %v1722 = vadd.f32 %v1626, %v1706
    %v1723 = vadd.f32 %v1627, %v1707
    %v1724 = vadd.f32 %v1628, %v1708
    %v1725 = vadd.f32 %v1629, %v1709
    %v1726 = vadd.f32 %v1630, %v1710
    %v1727 = vadd.f32 %v1631, %v1711
    %v1728 = vadd.f32 %v1632, %v1712
    %v1729 = vadd.f32 %v1633, %v1713
    %v1730 = vadd.f32 %v1634, %v1714
    %v1731 = vlaneseq
    %v1732 = vshrl.u32 %v1731, 7
    %v1733 = vsub.s32 7, %v1732
    %v1734 = vrot.slane %v1059, %v1733
    %v1735 = vlaneseq
    %v1736 = vshrl.u32 %v1735, 7
    %v1737 = vsub.s32 7, %v1736
    %v1738 = vrot.slane %v1060, %v1737
    %v1739 = vlaneseq
    %v1740 = vshrl.u32 %v1739, 7
    %v1741 = vsub.s32 7, %v1740
    %v1742 = vrot.slane %v1061, %v1741
    %v1743 = vlaneseq
    %v1744 = vshrl.u32 %v1743, 7
    %v1745 = vsub.s32 7, %v1744
    %v1746 = vrot.slane %v1062, %v1745
    %v1747 = vlaneseq
    %v1748 = vshrl.u32 %v1747, 7
    %v1749 = vsub.s32 7, %v1748
    %v1750 = vrot.slane %v1063, %v1749
    %v1751 = vlaneseq
    %v1752 = vshrl.u32 %v1751, 7
    %v1753 = vsub.s32 7, %v1752
    %v1754 = vrot.slane %v1064, %v1753
    %v1755 = vlaneseq
    %v1756 = vshrl.u32 %v1755, 7
    %v1757 = vsub.s32 7, %v1756
    %v1758 = vrot.slane %v1065, %v1757
    %v1759 = vlaneseq
    %v1760 = vshrl.u32 %v1759, 7
    %v1761 = vsub.s32 7, %v1760
    %v1762 = vrot.slane %v1066, %v1761
    %v1763 = vlaneseq
    %v1764 = vshrl.u32 %v1763, 7
    %v1765 = vsub.s32 7, %v1764
    %v1766 = vrot.slane %v1067, %v1765
    %v1767 = vlaneseq
    %v1768 = vshrl.u32 %v1767, 7
    %v1769 = vsub.s32 7, %v1768
    %v1770 = vrot.slane %v1068, %v1769
    %v1771 = vlaneseq
    %v1772 = vshrl.u32 %v1771, 7
    %v1773 = vsub.s32 7, %v1772
    %v1774 = vrot.slane %v1069, %v1773
    %v1775 = vlaneseq
    %v1776 = vshrl.u32 %v1775, 7
    %v1777 = vsub.s32 7, %v1776
    %v1778 = vrot.slane %v1070, %v1777
    %v1779 = vlaneseq
    %v1780 = vshrl.u32 %v1779, 7
    %v1781 = vsub.s32 7, %v1780
    %v1782 = vrot.slane %v1071, %v1781
    %v1783 = vlaneseq
    %v1784 = vshrl.u32 %v1783, 7
    %v1785 = vsub.s32 7, %v1784
    %v1786 = vrot.slane %v1072, %v1785
    %v1787 = vlaneseq
    %v1788 = vshrl.u32 %v1787, 7
    %v1789 = vsub.s32 7, %v1788
    %v1790 = vrot.slane %v1073, %v1789
    %v1791 = vlaneseq
    %v1792 = vshrl.u32 %v1791, 7
    %v1793 = vsub.s32 7, %v1792
    %v1794 = vrot.slane %v1074, %v1793
    %v1795 = vmul.f32 %v1734, %v296
    %v1796 = vmul.f32 %v1738, %v296
    %v1797 = vmul.f32 %v1742, %v296
    %v1798 = vmul.f32 %v1746, %v296
    %v1799 = vmul.f32 %v1750, %v296
    %v1800 = vmul.f32 %v1754, %v296
    %v1801 = vmul.f32 %v1758, %v296
    %v1802 = vmul.f32 %v1762, %v296
    %v1803 = vmul.f32 %v1766, %v304
    %v1804 = vmul.f32 %v1770, %v304
    %v1805 = vmul.f32 %v1774, %v304
    %v1806 = vmul.f32 %v1778, %v304
    %v1807 = vmul.f32 %v1782, %v304
    %v1808 = vmul.f32 %v1786, %v304
    %v1809 = vmul.f32 %v1790, %v304
    %v1810 = vmul.f32 %v1794, %v304
    %v1811 = vadd.f32 %v1715, %v1795
    %v1812 = vadd.f32 %v1716, %v1796
    %v1813 = vadd.f32 %v1717, %v1797
    %v1814 = vadd.f32 %v1718, %v1798
    %v1815 = vadd.f32 %v1719, %v1799
    %v1816 = vadd.f32 %v1720, %v1800
    %v1817 = vadd.f32 %v1721, %v1801
    %v1818 = vadd.f32 %v1722, %v1802
    %v1819 = vadd.f32 %v1723, %v1803
    %v1820 = vadd.f32 %v1724, %v1804
    %v1821 = vadd.f32 %v1725, %v1805
    %v1822 = vadd.f32 %v1726, %v1806
    %v1823 = vadd.f32 %v1727, %v1807
    %v1824 = vadd.f32 %v1728, %v1808
    %v1825 = vadd.f32 %v1729, %v1809
    %v1826 = vadd.f32 %v1730, %v1810
    %v1827 = vmul.f32 %v1078, %v1059
    %v1828 = vmul.f32 %v1082, %v1059
    %v1829 = vmul.f32 %v1086, %v1059
    %v1830 = vmul.f32 %v1090, %v1059
    %v1831 = vmul.f32 %v1094, %v1059
    %v1832 = vmul.f32 %v1098, %v1059
    %v1833 = vmul.f32 %v1102, %v1059
    %v1834 = vmul.f32 %v1106, %v1059
    %v1835 = vmul.f32 %v1110, %v1067
    %v1836 = vmul.f32 %v1114, %v1067
    %v1837 = vmul.f32 %v1118, %v1067
    %v1838 = vmul.f32 %v1122, %v1067
    %v1839 = vmul.f32 %v1126, %v1067
    %v1840 = vmul.f32 %v1130, %v1067
    %v1841 = vmul.f32 %v1134, %v1067
    %v1842 = vmul.f32 %v1138, %v1067
    %v1843 = vmul.f32 %v1158, %v1060
    %v1844 = vmul.f32 %v1162, %v1060
    %v1845 = vmul.f32 %v1166, %v1060
    %v1846 = vmul.f32 %v1170, %v1060
    %v1847 = vmul.f32 %v1174, %v1060
    %v1848 = vmul.f32 %v1178, %v1060
    %v1849 = vmul.f32 %v1182, %v1060
    %v1850 = vmul.f32 %v1186, %v1060
    %v1851 = vmul.f32 %v1190, %v1068
    %v1852 = vmul.f32 %v1194, %v1068
    %v1853 = vmul.f32 %v1198, %v1068
    %v1854 = vmul.f32 %v1202, %v1068
    %v1855 = vmul.f32 %v1206, %v1068
    %v1856 = vmul.f32 %v1210, %v1068
    %v1857 = vmul.f32 %v1214, %v1068
    %v1858 = vmul.f32 %v1218, %v1068
    %v1859 = vadd.f32 %v1827, %v1843
    %v1860 = vadd.f32 %v1828, %v1844
    %v1861 = vadd.f32 %v1829, %v1845
    %v1862 = vadd.f32 %v1830, %v1846
    %v1863 = vadd.f32 %v1831, %v1847
    %v1864 = vadd.f32 %v1832, %v1848
    %v1865 = vadd.f32 %v1833, %v1849
    %v1866 = vadd.f32 %v1834, %v1850
    %v1867 = vadd.f32 %v1835, %v1851
    %v1868 = vadd.f32 %v1836, %v1852
    %v1869 = vadd.f32 %v1837, %v1853
    %v1870 = vadd.f32 %v1838, %v1854
    %v1871 = vadd.f32 %v1839, %v1855
    %v1872 = vadd.f32 %v1840, %v1856
    %v1873 = vadd.f32 %v1841, %v1857
    %v1874 = vadd.f32 %v1842, %v1858
    %v1875 = vmul.f32 %v1254, %v1061
    %v1876 = vmul.f32 %v1258, %v1061
    %v1877 = vmul.f32 %v1262, %v1061
    %v1878 = vmul.f32 %v1266, %v1061
    %v1879 = vmul.f32 %v1270, %v1061
    %v1880 = vmul.f32 %v1274, %v1061
    %v1881 = vmul.f32 %v1278, %v1061
    %v1882 = vmul.f32 %v1282, %v1061
    %v1883 = vmul.f32 %v1286, %v1069
    %v1884 = vmul.f32 %v1290, %v1069
    %v1885 = vmul.f32 %v1294, %v1069
    %v1886 = vmul.f32 %v1298, %v1069
    %v1887 = vmul.f32 %v1302, %v1069
    %v1888 = vmul.f32 %v1306, %v1069
    %v1889 = vmul.f32 %v1310, %v1069
    %v1890 = vmul.f32 %v1314, %v1069
    %v1891 = vadd.f32 %v1859, %v1875
    %v1892 = vadd.f32 %v1860, %v1876
    %v1893 = vadd.f32 %v1861, %v1877
    %v1894 = vadd.f32 %v1862, %v1878
    %v1895 = vadd.f32 %v1863, %v1879
    %v1896 = vadd.f32 %v1864, %v1880
    %v1897 = vadd.f32 %v1865, %v1881
    %v1898 = vadd.f32 %v1866, %v1882
    %v1899 = vadd.f32 %v1867, %v1883
    %v1900 = vadd.f32 %v1868, %v1884
    %v1901 = vadd.f32 %v1869, %v1885
    %v1902 = vadd.f32 %v1870, %v1886
    %v1903 = vadd.f32 %v1871, %v1887
    %v1904 = vadd.f32 %v1872, %v1888
    %v1905 = vadd.f32 %v1873, %v1889
    %v1906 = vadd.f32 %v1874, %v1890
    %v1907 = vmul.f32 %v1350, %v1062
    %v1908 = vmul.f32 %v1354, %v1062
    %v1909 = vmul.f32 %v1358, %v1062
    %v1910 = vmul.f32 %v1362, %v1062
    %v1911 = vmul.f32 %v1366, %v1062
    %v1912 = vmul.f32 %v1370, %v1062
    %v1913 = vmul.f32 %v1374, %v1062
    %v1914 = vmul.f32 %v1378, %v1062
    %v1915 = vmul.f32 %v1382, %v1070
    %v1916 = vmul.f32 %v1386, %v1070
    %v1917 = vmul.f32 %v1390, %v1070
    %v1918 = vmul.f32 %v1394, %v1070
    %v1919 = vmul.f32 %v1398, %v1070
    %v1920 = vmul.f32 %v1402, %v1070
    %v1921 = vmul.f32 %v1406, %v1070
    %v1922 = vmul.f32 %v1410, %v1070
    %v1923 = vadd.f32 %v1891, %v1907
    %v1924 = vadd.f32 %v1892, %v1908
    %v1925 = vadd.f32 %v1893, %v1909
    %v1926 = vadd.f32 %v1894, %v1910
    %v1927 = vadd.f32 %v1895, %v1911
    %v1928 = vadd.f32 %v1896, %v1912
    %v1929 = vadd.f32 %v1897, %v1913
    %v1930 = vadd.f32 %v1898, %v1914
    %v1931 = vadd.f32 %v1899, %v1915
    %v1932 = vadd.f32 %v1900, %v1916
    %v1933 = vadd.f32 %v1901, %v1917
    %v1934 = vadd.f32 %v1902, %v1918
    %v1935 = vadd.f32 %v1903, %v1919
    %v1936 = vadd.f32 %v1904, %v1920
    %v1937 = vadd.f32 %v1905, %v1921
    %v1938 = vadd.f32 %v1906, %v1922
    %v1939 = vmul.f32 %v1446, %v1063
    %v1940 = vmul.f32 %v1450, %v1063
    %v1941 = vmul.f32 %v1454, %v1063
    %v1942 = vmul.f32 %v1458, %v1063
    %v1943 = vmul.f32 %v1462, %v1063
    %v1944 = vmul.f32 %v1466, %v1063
    %v1945 = vmul.f32 %v1470, %v1063
    %v1946 = vmul.f32 %v1474, %v1063
    %v1947 = vmul.f32 %v1478, %v1071
    %v1948 = vmul.f32 %v1482, %v1071
    %v1949 = vmul.f32 %v1486, %v1071
    %v1950 = vmul.f32 %v1490, %v1071
    %v1951 = vmul.f32 %v1494, %v1071
    %v1952 = vmul.f32 %v1498, %v1071
    %v1953 = vmul.f32 %v1502, %v1071
    %v1954 = vmul.f32 %v1506, %v1071
    %v1955 = vadd.f32 %v1923, %v1939
    %v1956 = vadd.f32 %v1924, %v1940
    %v1957 = vadd.f32 %v1925, %v1941
    %v1958 = vadd.f32 %v1926, %v1942
    %v1959 = vadd.f32 %v1927, %v1943
    %v1960 = vadd.f32 %v1928, %v1944
    %v1961 = vadd.f32 %v1929, %v1945
    %v1962 = vadd.f32 %v1930, %v1946
    %v1963 = vadd.f32 %v1931, %v1947
    %v1964 = vadd.f32 %v1932, %v1948
    %v1965 = vadd.f32 %v1933, %v1949
    %v1966 = vadd.f32 %v1934, %v1950
    %v1967 = vadd.f32 %v1935, %v1951
    %v1968 = vadd.f32 %v1936, %v1952
    %v1969 = vadd.f32 %v1937, %v1953
    %v1970 = vadd.f32 %v1938, %v1954
    %v1971 = vmul.f32 %v1542, %v1064
    %v1972 = vmul.f32 %v1546, %v1064
    %v1973 = vmul.f32 %v1550, %v1064
    %v1974 = vmul.f32 %v1554, %v1064
    %v1975 = vmul.f32 %v1558, %v1064
    %v1976 = vmul.f32 %v1562, %v1064
    %v1977 = vmul.f32 %v1566, %v1064
    %v1978 = vmul.f32 %v1570, %v1064
    %v1979 = vmul.f32 %v1574, %v1072
    %v1980 = vmul.f32 %v1578, %v1072
    %v1981 = vmul.f32 %v1582, %v1072
    %v1982 = vmul.f32 %v1586, %v1072
    %v1983 = vmul.f32 %v1590, %v1072
    %v1984 = vmul.f32 %v1594, %v1072
    %v1985 = vmul.f32 %v1598, %v1072
    %v1986 = vmul.f32 %v1602, %v1072
    %v1987 = vadd.f32 %v1955, %v1971
    %v1988 = vadd.f32 %v1956, %v1972
    %v1989 = vadd.f32 %v1957, %v1973
    %v1990 = vadd.f32 %v1958, %v1974
    %v1991 = vadd.f32 %v1959, %v1975
    %v1992 = vadd.f32 %v1960, %v1976
    %v1993 = vadd.f32 %v1961, %v1977
    %v1994 = vadd.f32 %v1962, %v1978
    %v1995 = vadd.f32 %v1963, %v1979
    %v1996 = vadd.f32 %v1964, %v1980
    %v1997 = vadd.f32 %v1965, %v1981
    %v1998 = vadd.f32 %v1966, %v1982
    %v1999 = vadd.f32 %v1967, %v1983
    %v2000 = vadd.f32 %v1968, %v1984
    %v2001 = vadd.f32 %v1969, %v1985
    %v2002 = vadd.f32 %v1970, %v1986
    %v2003 = vmul.f32 %v1638, %v1065
    %v2004 = vmul.f32 %v1642, %v1065
    %v2005 = vmul.f32 %v1646, %v1065
    %v2006 = vmul.f32 %v1650, %v1065
    %v2007 = vmul.f32 %v1654, %v1065
    %v2008 = vmul.f32 %v1658, %v1065
    %v2009 = vmul.f32 %v1662, %v1065
    %v2010 = vmul.f32 %v1666, %v1065
    %v2011 = vmul.f32 %v1670, %v1073
    %v2012 = vmul.f32 %v1674, %v1073
    %v2013 = vmul.f32 %v1678, %v1073
    %v2014 = vmul.f32 %v1682, %v1073
    %v2015 = vmul.f32 %v1686, %v1073
    %v2016 = vmul.f32 %v1690, %v1073
    %v2017 = vmul.f32 %v1694, %v1073
    %v2018 = vmul.f32 %v1698, %v1073
    %v2019 = vadd.f32 %v1987, %v2003
    %v2020 = vadd.f32 %v1988, %v2004
    %v2021 = vadd.f32 %v1989, %v2005
    %v2022 = vadd.f32 %v1990, %v2006
    %v2023 = vadd.f32 %v1991, %v2007
    %v2024 = vadd.f32 %v1992, %v2008
    %v2025 = vadd.f32 %v1993, %v2009
    %v2026 = vadd.f32 %v1994, %v2010
    %v2027 = vadd.f32 %v1995, %v2011
    %v2028 = vadd.f32 %v1996, %v2012
    %v2029 = vadd.f32 %v1997, %v2013
    %v2030 = vadd.f32 %v1998, %v2014
    %v2031 = vadd.f32 %v1999, %v2015
    %v2032 = vadd.f32 %v2000, %v2016
    %v2033 = vadd.f32 %v2001, %v2017
    %v2034 = vadd.f32 %v2002, %v2018
    %v2035 = vmul.f32 %v1734, %v1066
    %v2036 = vmul.f32 %v1738, %v1066
    %v2037 = vmul.f32 %v1742, %v1066
    %v2038 = vmul.f32 %v1746, %v1066
    %v2039 = vmul.f32 %v1750, %v1066
    %v2040 = vmul.f32 %v1754, %v1066
    %v2041 = vmul.f32 %v1758, %v1066
    %v2042 = vmul.f32 %v1762, %v1066
    %v2043 = vmul.f32 %v1766, %v1074
    %v2044 = vmul.f32 %v1770, %v1074
    %v2045 = vmul.f32 %v1774, %v1074
    %v2046 = vmul.f32 %v1778, %v1074
    %v2047 = vmul.f32 %v1782, %v1074
    %v2048 = vmul.f32 %v1786, %v1074
    %v2049 = vmul.f32 %v1790, %v1074
    %v2050 = vmul.f32 %v1794, %v1074
    %v2051 = vadd.f32 %v2019, %v2035
    %v2052 = vadd.f32 %v2020, %v2036
    %v2053 = vadd.f32 %v2021, %v2037
    %v2054 = vadd.f32 %v2022, %v2038
    %v2055 = vadd.f32 %v2023, %v2039
    %v2056 = vadd.f32 %v2024, %v2040
    %v2057 = vadd.f32 %v2025, %v2041
    %v2058 = vadd.f32 %v2026, %v2042
    %v2059 = vadd.f32 %v2027, %v2043
    %v2060 = vadd.f32 %v2028, %v2044
    %v2061 = vadd.f32 %v2029, %v2045
    %v2062 = vadd.f32 %v2030, %v2046
    %v2063 = vadd.f32 %v2031, %v2047
    %v2064 = vadd.f32 %v2032, %v2048
    %v2065 = vadd.f32 %v2033, %v2049
    %v2066 = vadd.f32 %v2034, %v2050
    %v2067 = vadd.f32 %v315, %v289
    %v2068 = vadd.f32 %v316, %v290
    %v2069 = vadd.f32 %v317, %v291
    %v2070 = vadd.f32 %v318, %v292
    %v2071 = vadd.f32 %v319, %v293
    %v2072 = vadd.f32 %v320, %v294
    %v2073 = vadd.f32 %v321, %v295
    %v2074 = vadd.f32 %v322, %v296
    %v2075 = vadd.f32 %v315, %v297
    %v2076 = vadd.f32 %v316, %v298
    %v2077 = vadd.f32 %v317, %v299
    %v2078 = vadd.f32 %v318, %v300
    %v2079 = vadd.f32 %v319, %v301
    %v2080 = vadd.f32 %v320, %v302
    %v2081 = vadd.f32 %v321, %v303
    %v2082 = vadd.f32 %v322, %v304
    %v2083 = vmul.f32 %v1059, 0.5
    %v2084 = vmul.f32 %v1060, 0.5
    %v2085 = vmul.f32 %v1061, 0.5
    %v2086 = vmul.f32 %v1062, 0.5
    %v2087 = vmul.f32 %v1063, 0.5
    %v2088 = vmul.f32 %v1064, 0.5
    %v2089 = vmul.f32 %v1065, 0.5
    %v2090 = vmul.f32 %v1066, 0.5
    %v2091 = vmul.f32 %v1067, 0.5
    %v2092 = vmul.f32 %v1068, 0.5
    %v2093 = vmul.f32 %v1069, 0.5
    %v2094 = vmul.f32 %v1070, 0.5
    %v2095 = vmul.f32 %v1071, 0.5
    %v2096 = vmul.f32 %v1072, 0.5
    %v2097 = vmul.f32 %v1073, 0.5
    %v2098 = vmul.f32 %v1074, 0.5
    %v2099 = vadd.f32 %v2067, %v2083
    %v2100 = vadd.f32 %v2068, %v2084
    %v2101 = vadd.f32 %v2069, %v2085
    %v2102 = vadd.f32 %v2070, %v2086
    %v2103 = vadd.f32 %v2071, %v2087
    %v2104 = vadd.f32 %v2072, %v2088
    %v2105 = vadd.f32 %v2073, %v2089
    %v2106 = vadd.f32 %v2074, %v2090
    %v2107 = vadd.f32 %v2075, %v2091
    %v2108 = vadd.f32 %v2076, %v2092
    %v2109 = vadd.f32 %v2077, %v2093
    %v2110 = vadd.f32 %v2078, %v2094
    %v2111 = vadd.f32 %v2079, %v2095
    %v2112 = vadd.f32 %v2080, %v2096
    %v2113 = vadd.f32 %v2081, %v2097
    %v2114 = vadd.f32 %v2082, %v2098
    %v2115 = vmul.f32 %v1811, 0.16666667
    %v2116 = vmul.f32 %v1812, 0.16666667
    %v2117 = vmul.f32 %v1813, 0.16666667
    %v2118 = vmul.f32 %v1814, 0.16666667
    %v2119 = vmul.f32 %v1815, 0.16666667
    %v2120 = vmul.f32 %v1816, 0.16666667
    %v2121 = vmul.f32 %v1817, 0.16666667
    %v2122 = vmul.f32 %v1818, 0.16666667
    %v2123 = vmul.f32 %v1819, 0.16666667
    %v2124 = vmul.f32 %v1820, 0.16666667
    %v2125 = vmul.f32 %v1821, 0.16666667
    %v2126 = vmul.f32 %v1822, 0.16666667
    %v2127 = vmul.f32 %v1823, 0.16666667
    %v2128 = vmul.f32 %v1824, 0.16666667
    %v2129 = vmul.f32 %v1825, 0.16666667
    %v2130 = vmul.f32 %v1826, 0.16666667
    %v2131 = vadd.f32 %v2099, %v2115
    %v2132 = vadd.f32 %v2100, %v2116
    %v2133 = vadd.f32 %v2101, %v2117
    %v2134 = vadd.f32 %v2102, %v2118
    %v2135 = vadd.f32 %v2103, %v2119
    %v2136 = vadd.f32 %v2104, %v2120
    %v2137 = vadd.f32 %v2105, %v2121
    %v2138 = vadd.f32 %v2106, %v2122
    %v2139 = vadd.f32 %v2107, %v2123
    %v2140 = vadd.f32 %v2108, %v2124
    %v2141 = vadd.f32 %v2109, %v2125
    %v2142 = vadd.f32 %v2110, %v2126
    %v2143 = vadd.f32 %v2111, %v2127
    %v2144 = vadd.f32 %v2112, %v2128
    %v2145 = vadd.f32 %v2113, %v2129
    %v2146 = vadd.f32 %v2114, %v2130
    %v2147 = vmul.f32 %v315, 0.041666668
    %v2148 = vmul.f32 %v316, 0.041666668
    %v2149 = vmul.f32 %v317, 0.041666668
    %v2150 = vmul.f32 %v318, 0.041666668
    %v2151 = vmul.f32 %v319, 0.041666668
    %v2152 = vmul.f32 %v320, 0.041666668
    %v2153 = vmul.f32 %v321, 0.041666668
    %v2154 = vmul.f32 %v322, 0.041666668
    %v2155 = vmul.f32 %v289, 0.008333334
    %v2156 = vmul.f32 %v290, 0.008333334
    %v2157 = vmul.f32 %v291, 0.008333334
    %v2158 = vmul.f32 %v292, 0.008333334
    %v2159 = vmul.f32 %v293, 0.008333334
    %v2160 = vmul.f32 %v294, 0.008333334
    %v2161 = vmul.f32 %v295, 0.008333334
    %v2162 = vmul.f32 %v296, 0.008333334
    %v2163 = vmul.f32 %v297, 0.008333334
    %v2164 = vmul.f32 %v298, 0.008333334
    %v2165 = vmul.f32 %v299, 0.008333334
    %v2166 = vmul.f32 %v300, 0.008333334
    %v2167 = vmul.f32 %v301, 0.008333334
    %v2168 = vmul.f32 %v302, 0.008333334
    %v2169 = vmul.f32 %v303, 0.008333334
    %v2170 = vmul.f32 %v304, 0.008333334
    %v2171 = vadd.f32 %v2147, %v2155
    %v2172 = vadd.f32 %v2148, %v2156
    %v2173 = vadd.f32 %v2149, %v2157
    %v2174 = vadd.f32 %v2150, %v2158
    %v2175 = vadd.f32 %v2151, %v2159
    %v2176 = vadd.f32 %v2152, %v2160
    %v2177 = vadd.f32 %v2153, %v2161
    %v2178 = vadd.f32 %v2154, %v2162
    %v2179 = vadd.f32 %v2147, %v2163
    %v2180 = vadd.f32 %v2148, %v2164
    %v2181 = vadd.f32 %v2149, %v2165
    %v2182 = vadd.f32 %v2150, %v2166
    %v2183 = vadd.f32 %v2151, %v2167
    %v2184 = vadd.f32 %v2152, %v2168
    %v2185 = vadd.f32 %v2153, %v2169
    %v2186 = vadd.f32 %v2154, %v2170
    %v2187 = vmul.f32 %v1059, 0.0013888889
    %v2188 = vmul.f32 %v1060, 0.0013888889
    %v2189 = vmul.f32 %v1061, 0.0013888889
    %v2190 = vmul.f32 %v1062, 0.0013888889
    %v2191 = vmul.f32 %v1063, 0.0013888889
    %v2192 = vmul.f32 %v1064, 0.0013888889
    %v2193 = vmul.f32 %v1065, 0.0013888889
    %v2194 = vmul.f32 %v1066, 0.0013888889
    %v2195 = vmul.f32 %v1067, 0.0013888889
    %v2196 = vmul.f32 %v1068, 0.0013888889
    %v2197 = vmul.f32 %v1069, 0.0013888889
    %v2198 = vmul.f32 %v1070, 0.0013888889
    %v2199 = vmul.f32 %v1071, 0.0013888889
    %v2200 = vmul.f32 %v1072, 0.0013888889
    %v2201 = vmul.f32 %v1073, 0.0013888889
    %v2202 = vmul.f32 %v1074, 0.0013888889
    %v2203 = vadd.f32 %v2171, %v2187
    %v2204 = vadd.f32 %v2172, %v2188
    %v2205 = vadd.f32 %v2173, %v2189
    %v2206 = vadd.f32 %v2174, %v2190
    %v2207 = vadd.f32 %v2175, %v2191
    %v2208 = vadd.f32 %v2176, %v2192
    %v2209 = vadd.f32 %v2177, %v2193
    %v2210 = vadd.f32 %v2178, %v2194
    %v2211 = vadd.f32 %v2179, %v2195
    %v2212 = vadd.f32 %v2180, %v2196
    %v2213 = vadd.f32 %v2181, %v2197
    %v2214 = vadd.f32 %v2182, %v2198
    %v2215 = vadd.f32 %v2183, %v2199
    %v2216 = vadd.f32 %v2184, %v2200
    %v2217 = vadd.f32 %v2185, %v2201
    %v2218 = vadd.f32 %v2186, %v2202
    %v2219 = vmul.f32 %v1811, 0.0001984127
    %v2220 = vmul.f32 %v1812, 0.0001984127
    %v2221 = vmul.f32 %v1813, 0.0001984127
    %v2222 = vmul.f32 %v1814, 0.0001984127
    %v2223 = vmul.f32 %v1815, 0.0001984127
    %v2224 = vmul.f32 %v1816, 0.0001984127
    %v2225 = vmul.f32 %v1817, 0.0001984127
    %v2226 = vmul.f32 %v1818, 0.0001984127
    %v2227 = vmul.f32 %v1819, 0.0001984127
    %v2228 = vmul.f32 %v1820, 0.0001984127
    %v2229 = vmul.f32 %v1821, 0.0001984127
    %v2230 = vmul.f32 %v1822, 0.0001984127
    %v2231 = vmul.f32 %v1823, 0.0001984127
    %v2232 = vmul.f32 %v1824, 0.0001984127
    %v2233 = vmul.f32 %v1825, 0.0001984127
    %v2234 = vmul.f32 %v1826, 0.0001984127
    %v2235 = vadd.f32 %v2203, %v2219
    %v2236 = vadd.f32 %v2204, %v2220
    %v2237 = vadd.f32 %v2205, %v2221
    %v2238 = vadd.f32 %v2206, %v2222
    %v2239 = vadd.f32 %v2207, %v2223
    %v2240 = vadd.f32 %v2208, %v2224
    %v2241 = vadd.f32 %v2209, %v2225
    %v2242 = vadd.f32 %v2210, %v2226
    %v2243 = vadd.f32 %v2211, %v2227
    %v2244 = vadd.f32 %v2212, %v2228
    %v2245 = vadd.f32 %v2213, %v2229
    %v2246 = vadd.f32 %v2214, %v2230
    %v2247 = vadd.f32 %v2215, %v2231
    %v2248 = vadd.f32 %v2216, %v2232
    %v2249 = vadd.f32 %v2217, %v2233
    %v2250 = vadd.f32 %v2218, %v2234
    %v2251 = vmul.f32 %v315, 2.4801588e-05
    %v2252 = vmul.f32 %v316, 2.4801588e-05
    %v2253 = vmul.f32 %v317, 2.4801588e-05
    %v2254 = vmul.f32 %v318, 2.4801588e-05
    %v2255 = vmul.f32 %v319, 2.4801588e-05
    %v2256 = vmul.f32 %v320, 2.4801588e-05
    %v2257 = vmul.f32 %v321, 2.4801588e-05
    %v2258 = vmul.f32 %v322, 2.4801588e-05
    %v2259 = vmul.f32 %v289, 2.7557319e-06
    %v2260 = vmul.f32 %v290, 2.7557319e-06
    %v2261 = vmul.f32 %v291, 2.7557319e-06
    %v2262 = vmul.f32 %v292, 2.7557319e-06
    %v2263 = vmul.f32 %v293, 2.7557319e-06
    %v2264 = vmul.f32 %v294, 2.7557319e-06
    %v2265 = vmul.f32 %v295, 2.7557319e-06
    %v2266 = vmul.f32 %v296, 2.7557319e-06
    %v2267 = vmul.f32 %v297, 2.7557319e-06
    %v2268 = vmul.f32 %v298, 2.7557319e-06
    %v2269 = vmul.f32 %v299, 2.7557319e-06
    %v2270 = vmul.f32 %v300, 2.7557319e-06
    %v2271 = vmul.f32 %v301, 2.7557319e-06
    %v2272 = vmul.f32 %v302, 2.7557319e-06
    %v2273 = vmul.f32 %v303, 2.7557319e-06
    %v2274 = vmul.f32 %v304, 2.7557319e-06
    %v2275 = vadd.f32 %v2251, %v2259
    %v2276 = vadd.f32 %v2252, %v2260
    %v2277 = vadd.f32 %v2253, %v2261
    %v2278 = vadd.f32 %v2254, %v2262
    %v2279 = vadd.f32 %v2255, %v2263
    %v2280 = vadd.f32 %v2256, %v2264
    %v2281 = vadd.f32 %v2257, %v2265
    %v2282 = vadd.f32 %v2258, %v2266
    %v2283 = vadd.f32 %v2251, %v2267
    %v2284 = vadd.f32 %v2252, %v2268
    %v2285 = vadd.f32 %v2253, %v2269
    %v2286 = vadd.f32 %v2254, %v2270
    %v2287 = vadd.f32 %v2255, %v2271
    %v2288 = vadd.f32 %v2256, %v2272
    %v2289 = vadd.f32 %v2257, %v2273
    %v2290 = vadd.f32 %v2258, %v2274
    %v2291 = vmul.f32 %v1059, 2.755732e-07
    %v2292 = vmul.f32 %v1060, 2.755732e-07
    %v2293 = vmul.f32 %v1061, 2.755732e-07
    %v2294 = vmul.f32 %v1062, 2.755732e-07
    %v2295 = vmul.f32 %v1063, 2.755732e-07
    %v2296 = vmul.f32 %v1064, 2.755732e-07
    %v2297 = vmul.f32 %v1065, 2.755732e-07
    %v2298 = vmul.f32 %v1066, 2.755732e-07
    %v2299 = vmul.f32 %v1067, 2.755732e-07
    %v2300 = vmul.f32 %v1068, 2.755732e-07
    %v2301 = vmul.f32 %v1069, 2.755732e-07
    %v2302 = vmul.f32 %v1070, 2.755732e-07
    %v2303 = vmul.f32 %v1071, 2.755732e-07
    %v2304 = vmul.f32 %v1072, 2.755732e-07
    %v2305 = vmul.f32 %v1073, 2.755732e-07
    %v2306 = vmul.f32 %v1074, 2.755732e-07
    %v2307 = vadd.f32 %v2275, %v2291
    %v2308 = vadd.f32 %v2276, %v2292
    %v2309 = vadd.f32 %v2277, %v2293
    %v2310 = vadd.f32 %v2278, %v2294
    %v2311 = vadd.f32 %v2279, %v2295
    %v2312 = vadd.f32 %v2280, %v2296
    %v2313 = vadd.f32 %v2281, %v2297
    %v2314 = vadd.f32 %v2282, %v2298
    %v2315 = vadd.f32 %v2283, %v2299
    %v2316 = vadd.f32 %v2284, %v2300
    %v2317 = vadd.f32 %v2285, %v2301
    %v2318 = vadd.f32 %v2286, %v2302
    %v2319 = vadd.f32 %v2287, %v2303
    %v2320 = vadd.f32 %v2288, %v2304
    %v2321 = vadd.f32 %v2289, %v2305
    %v2322 = vadd.f32 %v2290, %v2306
    %v2323 = vmul.f32 %v1811, 2.5052108e-08
    %v2324 = vmul.f32 %v1812, 2.5052108e-08
    %v2325 = vmul.f32 %v1813, 2.5052108e-08
    %v2326 = vmul.f32 %v1814, 2.5052108e-08
    %v2327 = vmul.f32 %v1815, 2.5052108e-08
    %v2328 = vmul.f32 %v1816, 2.5052108e-08
    %v2329 = vmul.f32 %v1817, 2.5052108e-08
    %v2330 = vmul.f32 %v1818, 2.5052108e-08
    %v2331 = vmul.f32 %v1819, 2.5052108e-08
    %v2332 = vmul.f32 %v1820, 2.5052108e-08
    %v2333 = vmul.f32 %v1821, 2.5052108e-08
    %v2334 = vmul.f32 %v1822, 2.5052108e-08
    %v2335 = vmul.f32 %v1823, 2.5052108e-08
    %v2336 = vmul.f32 %v1824, 2.5052108e-08
    %v2337 = vmul.f32 %v1825, 2.5052108e-08
    %v2338 = vmul.f32 %v1826, 2.5052108e-08
    %v2339 = vadd.f32 %v2307, %v2323
    %v2340 = vadd.f32 %v2308, %v2324
    %v2341 = vadd.f32 %v2309, %v2325
    %v2342 = vadd.f32 %v2310, %v2326
    %v2343 = vadd.f32 %v2311, %v2327
    %v2344 = vadd.f32 %v2312, %v2328
    %v2345 = vadd.f32 %v2313, %v2329
    %v2346 = vadd.f32 %v2314, %v2330
    %v2347 = vadd.f32 %v2315, %v2331
    %v2348 = vadd.f32 %v2316, %v2332
    %v2349 = vadd.f32 %v2317, %v2333
    %v2350 = vadd.f32 %v2318, %v2334
    %v2351 = vadd.f32 %v2319, %v2335
    %v2352 = vadd.f32 %v2320, %v2336
    %v2353 = vadd.f32 %v2321, %v2337
    %v2354 = vadd.f32 %v2322, %v2338
    %v2355 = vmul.f32 %v2051, 2.0876756e-09
    %v2356 = vmul.f32 %v2052, 2.0876756e-09
    %v2357 = vmul.f32 %v2053, 2.0876756e-09
    %v2358 = vmul.f32 %v2054, 2.0876756e-09
    %v2359 = vmul.f32 %v2055, 2.0876756e-09
    %v2360 = vmul.f32 %v2056, 2.0876756e-09
    %v2361 = vmul.f32 %v2057, 2.0876756e-09
    %v2362 = vmul.f32 %v2058, 2.0876756e-09
    %v2363 = vmul.f32 %v2059, 2.0876756e-09
    %v2364 = vmul.f32 %v2060, 2.0876756e-09
    %v2365 = vmul.f32 %v2061, 2.0876756e-09
    %v2366 = vmul.f32 %v2062, 2.0876756e-09
    %v2367 = vmul.f32 %v2063, 2.0876756e-09
    %v2368 = vmul.f32 %v2064, 2.0876756e-09
    %v2369 = vmul.f32 %v2065, 2.0876756e-09
    %v2370 = vmul.f32 %v2066, 2.0876756e-09
    %v2371 = vadd.f32 %v2339, %v2355
    %v2372 = vadd.f32 %v2340, %v2356
    %v2373 = vadd.f32 %v2341, %v2357
    %v2374 = vadd.f32 %v2342, %v2358
    %v2375 = vadd.f32 %v2343, %v2359
    %v2376 = vadd.f32 %v2344, %v2360
    %v2377 = vadd.f32 %v2345, %v2361
    %v2378 = vadd.f32 %v2346, %v2362
    %v2379 = vadd.f32 %v2347, %v2363
    %v2380 = vadd.f32 %v2348, %v2364
    %v2381 = vadd.f32 %v2349, %v2365
    %v2382 = vadd.f32 %v2350, %v2366
    %v2383 = vadd.f32 %v2351, %v2367
    %v2384 = vadd.f32 %v2352, %v2368
    %v2385 = vadd.f32 %v2353, %v2369
    %v2386 = vadd.f32 %v2354, %v2370
    %v2387 = vlaneseq
    %v2388 = vshrl.u32 %v2387, 7
    %v2389 = vsub.s32 0, %v2388
    %v2390 = vrot.slane %v2051, %v2389
    %v2391 = vlaneseq
    %v2392 = vshrl.u32 %v2391, 7
    %v2393 = vsub.s32 0, %v2392
    %v2394 = vrot.slane %v2052, %v2393
    %v2395 = vlaneseq
    %v2396 = vshrl.u32 %v2395, 7
    %v2397 = vsub.s32 0, %v2396
    %v2398 = vrot.slane %v2053, %v2397
    %v2399 = vlaneseq
    %v2400 = vshrl.u32 %v2399, 7
    %v2401 = vsub.s32 0, %v2400
    %v2402 = vrot.slane %v2054, %v2401
    %v2403 = vlaneseq
    %v2404 = vshrl.u32 %v2403, 7
    %v2405 = vsub.s32 0, %v2404
    %v2406 = vrot.slane %v2055, %v2405
    %v2407 = vlaneseq
    %v2408 = vshrl.u32 %v2407, 7
    %v2409 = vsub.s32 0, %v2408
    %v2410 = vrot.slane %v2056, %v2409
    %v2411 = vlaneseq
    %v2412 = vshrl.u32 %v2411, 7
    %v2413 = vsub.s32 0, %v2412
    %v2414 = vrot.slane %v2057, %v2413
    %v2415 = vlaneseq
    %v2416 = vshrl.u32 %v2415, 7
    %v2417 = vsub.s32 0, %v2416
    %v2418 = vrot.slane %v2058, %v2417
    %v2419 = vlaneseq
    %v2420 = vshrl.u32 %v2419, 7
    %v2421 = vsub.s32 0, %v2420
    %v2422 = vrot.slane %v2059, %v2421
    %v2423 = vlaneseq
    %v2424 = vshrl.u32 %v2423, 7
    %v2425 = vsub.s32 0, %v2424
    %v2426 = vrot.slane %v2060, %v2425
    %v2427 = vlaneseq
    %v2428 = vshrl.u32 %v2427, 7
    %v2429 = vsub.s32 0, %v2428
    %v2430 = vrot.slane %v2061, %v2429
    %v2431 = vlaneseq
    %v2432 = vshrl.u32 %v2431, 7
    %v2433 = vsub.s32 0, %v2432
    %v2434 = vrot.slane %v2062, %v2433
    %v2435 = vlaneseq
    %v2436 = vshrl.u32 %v2435, 7
    %v2437 = vsub.s32 0, %v2436
    %v2438 = vrot.slane %v2063, %v2437
    %v2439 = vlaneseq
    %v2440 = vshrl.u32 %v2439, 7
    %v2441 = vsub.s32 0, %v2440
    %v2442 = vrot.slane %v2064, %v2441
    %v2443 = vlaneseq
    %v2444 = vshrl.u32 %v2443, 7
    %v2445 = vsub.s32 0, %v2444
    %v2446 = vrot.slane %v2065, %v2445
    %v2447 = vlaneseq
    %v2448 = vshrl.u32 %v2447, 7
    %v2449 = vsub.s32 0, %v2448
    %v2450 = vrot.slane %v2066, %v2449
    %v2451 = vmul.f32 %v2390, %v2371
    %v2452 = vmul.f32 %v2394, %v2371
    %v2453 = vmul.f32 %v2398, %v2371
    %v2454 = vmul.f32 %v2402, %v2371
    %v2455 = vmul.f32 %v2406, %v2371
    %v2456 = vmul.f32 %v2410, %v2371
    %v2457 = vmul.f32 %v2414, %v2371
    %v2458 = vmul.f32 %v2418, %v2371
    %v2459 = vmul.f32 %v2422, %v2379
    %v2460 = vmul.f32 %v2426, %v2379
    %v2461 = vmul.f32 %v2430, %v2379
    %v2462 = vmul.f32 %v2434, %v2379
    %v2463 = vmul.f32 %v2438, %v2379
    %v2464 = vmul.f32 %v2442, %v2379
    %v2465 = vmul.f32 %v2446, %v2379
    %v2466 = vmul.f32 %v2450, %v2379
    %v2467 = vlaneseq
    %v2468 = vshrl.u32 %v2467, 7
    %v2469 = vsub.s32 1, %v2468
    %v2470 = vrot.slane %v2051, %v2469
    %v2471 = vlaneseq
    %v2472 = vshrl.u32 %v2471, 7
    %v2473 = vsub.s32 1, %v2472
    %v2474 = vrot.slane %v2052, %v2473
    %v2475 = vlaneseq
    %v2476 = vshrl.u32 %v2475, 7
    %v2477 = vsub.s32 1, %v2476
    %v2478 = vrot.slane %v2053, %v2477
    %v2479 = vlaneseq
    %v2480 = vshrl.u32 %v2479, 7
    %v2481 = vsub.s32 1, %v2480
    %v2482 = vrot.slane %v2054, %v2481
    %v2483 = vlaneseq
    %v2484 = vshrl.u32 %v2483, 7
    %v2485 = vsub.s32 1, %v2484
    %v2486 = vrot.slane %v2055, %v2485
    %v2487 = vlaneseq
    %v2488 = vshrl.u32 %v2487, 7
    %v2489 = vsub.s32 1, %v2488
    %v2490 = vrot.slane %v2056, %v2489
    %v2491 = vlaneseq
    %v2492 = vshrl.u32 %v2491, 7
    %v2493 = vsub.s32 1, %v2492
    %v2494 = vrot.slane %v2057, %v2493
    %v2495 = vlaneseq
    %v2496 = vshrl.u32 %v2495, 7
    %v2497 = vsub.s32 1, %v2496
    %v2498 = vrot.slane %v2058, %v2497
    %v2499 = vlaneseq
    %v2500 = vshrl.u32 %v2499, 7
    %v2501 = vsub.s32 1, %v2500
    %v2502 = vrot.slane %v2059, %v2501
    %v2503 = vlaneseq
    %v2504 = vshrl.u32 %v2503, 7
    %v2505 = vsub.s32 1, %v2504
    %v2506 = vrot.slane %v2060, %v2505
    %v2507 = vlaneseq
    %v2508 = vshrl.u32 %v2507, 7
    %v2509 = vsub.s32 1, %v2508
    %v2510 = vrot.slane %v2061, %v2509
    %v2511 = vlaneseq
    %v2512 = vshrl.u32 %v2511, 7
    %v2513 = vsub.s32 1, %v2512
    %v2514 = vrot.slane %v2062, %v2513
    %v2515 = vlaneseq
    %v2516 = vshrl.u32 %v2515, 7
    %v2517 = vsub.s32 1, %v2516
    %v2518 = vrot.slane %v2063, %v2517
    %v2519 = vlaneseq
    %v2520 = vshrl.u32 %v2519, 7
    %v2521 = vsub.s32 1, %v2520
    %v2522 = vrot.slane %v2064, %v2521
    %v2523 = vlaneseq
    %v2524 = vshrl.u32 %v2523, 7
    %v2525 = vsub.s32 1, %v2524
    %v2526 = vrot.slane %v2065, %v2525
    %v2527 = vlaneseq
    %v2528 = vshrl.u32 %v2527, 7
    %v2529 = vsub.s32 1, %v2528
    %v2530 = vrot.slane %v2066, %v2529
    %v2531 = vmul.f32 %v2470, %v2372
    %v2532 = vmul.f32 %v2474, %v2372
    %v2533 = vmul.f32 %v2478, %v2372
    %v2534 = vmul.f32 %v2482, %v2372
    %v2535 = vmul.f32 %v2486, %v2372
    %v2536 = vmul.f32 %v2490, %v2372
    %v2537 = vmul.f32 %v2494, %v2372
    %v2538 = vmul.f32 %v2498, %v2372
    %v2539 = vmul.f32 %v2502, %v2380
    %v2540 = vmul.f32 %v2506, %v2380
    %v2541 = vmul.f32 %v2510, %v2380
    %v2542 = vmul.f32 %v2514, %v2380
    %v2543 = vmul.f32 %v2518, %v2380
    %v2544 = vmul.f32 %v2522, %v2380
    %v2545 = vmul.f32 %v2526, %v2380
    %v2546 = vmul.f32 %v2530, %v2380
    %v2547 = vadd.f32 %v2451, %v2531
    %v2548 = vadd.f32 %v2452, %v2532
    %v2549 = vadd.f32 %v2453, %v2533
    %v2550 = vadd.f32 %v2454, %v2534
    %v2551 = vadd.f32 %v2455, %v2535
    %v2552 = vadd.f32 %v2456, %v2536
    %v2553 = vadd.f32 %v2457, %v2537
    %v2554 = vadd.f32 %v2458, %v2538
    %v2555 = vadd.f32 %v2459, %v2539
    %v2556 = vadd.f32 %v2460, %v2540
    %v2557 = vadd.f32 %v2461, %v2541
    %v2558 = vadd.f32 %v2462, %v2542
    %v2559 = vadd.f32 %v2463, %v2543
    %v2560 = vadd.f32 %v2464, %v2544
    %v2561 = vadd.f32 %v2465, %v2545
    %v2562 = vadd.f32 %v2466, %v2546
    %v2563 = vlaneseq
    %v2564 = vshrl.u32 %v2563, 7
    %v2565 = vsub.s32 2, %v2564
    %v2566 = vrot.slane %v2051, %v2565
    %v2567 = vlaneseq
    %v2568 = vshrl.u32 %v2567, 7
    %v2569 = vsub.s32 2, %v2568
    %v2570 = vrot.slane %v2052, %v2569
    %v2571 = vlaneseq
    %v2572 = vshrl.u32 %v2571, 7
    %v2573 = vsub.s32 2, %v2572
    %v2574 = vrot.slane %v2053, %v2573
    %v2575 = vlaneseq
    %v2576 = vshrl.u32 %v2575, 7
    %v2577 = vsub.s32 2, %v2576
    %v2578 = vrot.slane %v2054, %v2577
    %v2579 = vlaneseq
    %v2580 = vshrl.u32 %v2579, 7
    %v2581 = vsub.s32 2, %v2580
    %v2582 = vrot.slane %v2055, %v2581
    %v2583 = vlaneseq
    %v2584 = vshrl.u32 %v2583, 7
    %v2585 = vsub.s32 2, %v2584
    %v2586 = vrot.slane %v2056, %v2585
    %v2587 = vlaneseq
    %v2588 = vshrl.u32 %v2587, 7
    %v2589 = vsub.s32 2, %v2588
    %v2590 = vrot.slane %v2057, %v2589
    %v2591 = vlaneseq
    %v2592 = vshrl.u32 %v2591, 7
    %v2593 = vsub.s32 2, %v2592
    %v2594 = vrot.slane %v2058, %v2593
    %v2595 = vlaneseq
    %v2596 = vshrl.u32 %v2595, 7
    %v2597 = vsub.s32 2, %v2596
    %v2598 = vrot.slane %v2059, %v2597
    %v2599 = vlaneseq
    %v2600 = vshrl.u32 %v2599, 7
    %v2601 = vsub.s32 2, %v2600
    %v2602 = vrot.slane %v2060, %v2601
    %v2603 = vlaneseq
    %v2604 = vshrl.u32 %v2603, 7
    %v2605 = vsub.s32 2, %v2604
    %v2606 = vrot.slane %v2061, %v2605
    %v2607 = vlaneseq
    %v2608 = vshrl.u32 %v2607, 7
    %v2609 = vsub.s32 2, %v2608
    %v2610 = vrot.slane %v2062, %v2609
    %v2611 = vlaneseq
    %v2612 = vshrl.u32 %v2611, 7
    %v2613 = vsub.s32 2, %v2612
    %v2614 = vrot.slane %v2063, %v2613
    %v2615 = vlaneseq
    %v2616 = vshrl.u32 %v2615, 7
    %v2617 = vsub.s32 2, %v2616
    %v2618 = vrot.slane %v2064, %v2617
    %v2619 = vlaneseq
    %v2620 = vshrl.u32 %v2619, 7
    %v2621 = vsub.s32 2, %v2620
    %v2622 = vrot.slane %v2065, %v2621
    %v2623 = vlaneseq
    %v2624 = vshrl.u32 %v2623, 7
    %v2625 = vsub.s32 2, %v2624
    %v2626 = vrot.slane %v2066, %v2625
    %v2627 = vmul.f32 %v2566, %v2373
    %v2628 = vmul.f32 %v2570, %v2373
    %v2629 = vmul.f32 %v2574, %v2373
    %v2630 = vmul.f32 %v2578, %v2373
    %v2631 = vmul.f32 %v2582, %v2373
    %v2632 = vmul.f32 %v2586, %v2373
    %v2633 = vmul.f32 %v2590, %v2373
    %v2634 = vmul.f32 %v2594, %v2373
    %v2635 = vmul.f32 %v2598, %v2381
    %v2636 = vmul.f32 %v2602, %v2381
    %v2637 = vmul.f32 %v2606, %v2381
    %v2638 = vmul.f32 %v2610, %v2381
    %v2639 = vmul.f32 %v2614, %v2381
    %v2640 = vmul.f32 %v2618, %v2381
    %v2641 = vmul.f32 %v2622, %v2381
    %v2642 = vmul.f32 %v2626, %v2381
    %v2643 = vadd.f32 %v2547, %v2627
    %v2644 = vadd.f32 %v2548, %v2628
    %v2645 = vadd.f32 %v2549, %v2629
    %v2646 = vadd.f32 %v2550, %v2630
    %v2647 = vadd.f32 %v2551, %v2631
    %v2648 = vadd.f32 %v2552, %v2632
    %v2649 = vadd.f32 %v2553, %v2633
    %v2650 = vadd.f32 %v2554, %v2634
    %v2651 = vadd.f32 %v2555, %v2635
    %v2652 = vadd.f32 %v2556, %v2636
    %v2653 = vadd.f32 %v2557, %v2637
    %v2654 = vadd.f32 %v2558, %v2638
    %v2655 = vadd.f32 %v2559, %v2639
    %v2656 = vadd.f32 %v2560, %v2640
    %v2657 = vadd.f32 %v2561, %v2641
    %v2658 = vadd.f32 %v2562, %v2642
    %v2659 = vlaneseq
    %v2660 = vshrl.u32 %v2659, 7
    %v2661 = vsub.s32 3, %v2660
    %v2662 = vrot.slane %v2051, %v2661
    %v2663 = vlaneseq
    %v2664 = vshrl.u32 %v2663, 7
    %v2665 = vsub.s32 3, %v2664
    %v2666 = vrot.slane %v2052, %v2665
    %v2667 = vlaneseq
    %v2668 = vshrl.u32 %v2667, 7
    %v2669 = vsub.s32 3, %v2668
    %v2670 = vrot.slane %v2053, %v2669
    %v2671 = vlaneseq
    %v2672 = vshrl.u32 %v2671, 7
    %v2673 = vsub.s32 3, %v2672
    %v2674 = vrot.slane %v2054, %v2673
    %v2675 = vlaneseq
    %v2676 = vshrl.u32 %v2675, 7
    %v2677 = vsub.s32 3, %v2676
    %v2678 = vrot.slane %v2055, %v2677
    %v2679 = vlaneseq
    %v2680 = vshrl.u32 %v2679, 7
    %v2681 = vsub.s32 3, %v2680
    %v2682 = vrot.slane %v2056, %v2681
    %v2683 = vlaneseq
    %v2684 = vshrl.u32 %v2683, 7
    %v2685 = vsub.s32 3, %v2684
    %v2686 = vrot.slane %v2057, %v2685
    %v2687 = vlaneseq
    %v2688 = vshrl.u32 %v2687, 7
    %v2689 = vsub.s32 3, %v2688
    %v2690 = vrot.slane %v2058, %v2689
    %v2691 = vlaneseq
    %v2692 = vshrl.u32 %v2691, 7
    %v2693 = vsub.s32 3, %v2692
    %v2694 = vrot.slane %v2059, %v2693
    %v2695 = vlaneseq
    %v2696 = vshrl.u32 %v2695, 7
    %v2697 = vsub.s32 3, %v2696
    %v2698 = vrot.slane %v2060, %v2697
    %v2699 = vlaneseq
    %v2700 = vshrl.u32 %v2699, 7
    %v2701 = vsub.s32 3, %v2700
    %v2702 = vrot.slane %v2061, %v2701
    %v2703 = vlaneseq
    %v2704 = vshrl.u32 %v2703, 7
    %v2705 = vsub.s32 3, %v2704
    %v2706 = vrot.slane %v2062, %v2705
    %v2707 = vlaneseq
    %v2708 = vshrl.u32 %v2707, 7
    %v2709 = vsub.s32 3, %v2708
    %v2710 = vrot.slane %v2063, %v2709
    %v2711 = vlaneseq
    %v2712 = vshrl.u32 %v2711, 7
    %v2713 = vsub.s32 3, %v2712
    %v2714 = vrot.slane %v2064, %v2713
    %v2715 = vlaneseq
    %v2716 = vshrl.u32 %v2715, 7
    %v2717 = vsub.s32 3, %v2716
    %v2718 = vrot.slane %v2065, %v2717
    %v2719 = vlaneseq
    %v2720 = vshrl.u32 %v2719, 7
    %v2721 = vsub.s32 3, %v2720
    %v2722 = vrot.slane %v2066, %v2721
    %v2723 = vmul.f32 %v2662, %v2374
    %v2724 = vmul.f32 %v2666, %v2374
    %v2725 = vmul.f32 %v2670, %v2374
    %v2726 = vmul.f32 %v2674, %v2374
    %v2727 = vmul.f32 %v2678, %v2374
    %v2728 = vmul.f32 %v2682, %v2374
    %v2729 = vmul.f32 %v2686, %v2374
    %v2730 = vmul.f32 %v2690, %v2374
    %v2731 = vmul.f32 %v2694, %v2382
    %v2732 = vmul.f32 %v2698, %v2382
    %v2733 = vmul.f32 %v2702, %v2382
    %v2734 = vmul.f32 %v2706, %v2382
    %v2735 = vmul.f32 %v2710, %v2382
    %v2736 = vmul.f32 %v2714, %v2382
    %v2737 = vmul.f32 %v2718, %v2382
    %v2738 = vmul.f32 %v2722, %v2382
    %v2739 = vadd.f32 %v2643, %v2723
    %v2740 = vadd.f32 %v2644, %v2724
    %v2741 = vadd.f32 %v2645, %v2725
    %v2742 = vadd.f32 %v2646, %v2726
    %v2743 = vadd.f32 %v2647, %v2727
    %v2744 = vadd.f32 %v2648, %v2728
    %v2745 = vadd.f32 %v2649, %v2729
    %v2746 = vadd.f32 %v2650, %v2730
    %v2747 = vadd.f32 %v2651, %v2731
    %v2748 = vadd.f32 %v2652, %v2732
    %v2749 = vadd.f32 %v2653, %v2733
    %v2750 = vadd.f32 %v2654, %v2734
    %v2751 = vadd.f32 %v2655, %v2735
    %v2752 = vadd.f32 %v2656, %v2736
    %v2753 = vadd.f32 %v2657, %v2737
    %v2754 = vadd.f32 %v2658, %v2738
    %v2755 = vlaneseq
    %v2756 = vshrl.u32 %v2755, 7
    %v2757 = vsub.s32 4, %v2756
    %v2758 = vrot.slane %v2051, %v2757
    %v2759 = vlaneseq
    %v2760 = vshrl.u32 %v2759, 7
    %v2761 = vsub.s32 4, %v2760
    %v2762 = vrot.slane %v2052, %v2761
    %v2763 = vlaneseq
    %v2764 = vshrl.u32 %v2763, 7
    %v2765 = vsub.s32 4, %v2764
    %v2766 = vrot.slane %v2053, %v2765
    %v2767 = vlaneseq
    %v2768 = vshrl.u32 %v2767, 7
    %v2769 = vsub.s32 4, %v2768
    %v2770 = vrot.slane %v2054, %v2769
    %v2771 = vlaneseq
    %v2772 = vshrl.u32 %v2771, 7
    %v2773 = vsub.s32 4, %v2772
    %v2774 = vrot.slane %v2055, %v2773
    %v2775 = vlaneseq
    %v2776 = vshrl.u32 %v2775, 7
    %v2777 = vsub.s32 4, %v2776
    %v2778 = vrot.slane %v2056, %v2777
    %v2779 = vlaneseq
    %v2780 = vshrl.u32 %v2779, 7
    %v2781 = vsub.s32 4, %v2780
    %v2782 = vrot.slane %v2057, %v2781
    %v2783 = vlaneseq
    %v2784 = vshrl.u32 %v2783, 7
    %v2785 = vsub.s32 4, %v2784
    %v2786 = vrot.slane %v2058, %v2785
    %v2787 = vlaneseq
    %v2788 = vshrl.u32 %v2787, 7
    %v2789 = vsub.s32 4, %v2788
    %v2790 = vrot.slane %v2059, %v2789
    %v2791 = vlaneseq
    %v2792 = vshrl.u32 %v2791, 7
    %v2793 = vsub.s32 4, %v2792
    %v2794 = vrot.slane %v2060, %v2793
    %v2795 = vlaneseq
    %v2796 = vshrl.u32 %v2795, 7
    %v2797 = vsub.s32 4, %v2796
    %v2798 = vrot.slane %v2061, %v2797
    %v2799 = vlaneseq
    %v2800 = vshrl.u32 %v2799, 7
    %v2801 = vsub.s32 4, %v2800
    %v2802 = vrot.slane %v2062, %v2801
    %v2803 = vlaneseq
    %v2804 = vshrl.u32 %v2803, 7
    %v2805 = vsub.s32 4, %v2804
    %v2806 = vrot.slane %v2063, %v2805
    %v2807 = vlaneseq
    %v2808 = vshrl.u32 %v2807, 7
    %v2809 = vsub.s32 4, %v2808
    %v2810 = vrot.slane %v2064, %v2809
    %v2811 = vlaneseq
    %v2812 = vshrl.u32 %v2811, 7
    %v2813 = vsub.s32 4, %v2812
    %v2814 = vrot.slane %v2065, %v2813
    %v2815 = vlaneseq
    %v2816 = vshrl.u32 %v2815, 7
    %v2817 = vsub.s32 4, %v2816
    %v2818 = vrot.slane %v2066, %v2817
    %v2819 = vmul.f32 %v2758, %v2375
    %v2820 = vmul.f32 %v2762, %v2375
    %v2821 = vmul.f32 %v2766, %v2375
    %v2822 = vmul.f32 %v2770, %v2375
    %v2823 = vmul.f32 %v2774, %v2375
    %v2824 = vmul.f32 %v2778, %v2375
    %v2825 = vmul.f32 %v2782, %v2375
    %v2826 = vmul.f32 %v2786, %v2375
    %v2827 = vmul.f32 %v2790, %v2383
    %v2828 = vmul.f32 %v2794, %v2383
    %v2829 = vmul.f32 %v2798, %v2383
    %v2830 = vmul.f32 %v2802, %v2383
    %v2831 = vmul.f32 %v2806, %v2383
    %v2832 = vmul.f32 %v2810, %v2383
    %v2833 = vmul.f32 %v2814, %v2383
    %v2834 = vmul.f32 %v2818, %v2383
    %v2835 = vadd.f32 %v2739, %v2819
    %v2836 = vadd.f32 %v2740, %v2820
    %v2837 = vadd.f32 %v2741, %v2821
    %v2838 = vadd.f32 %v2742, %v2822
    %v2839 = vadd.f32 %v2743, %v2823
    %v2840 = vadd.f32 %v2744, %v2824
    %v2841 = vadd.f32 %v2745, %v2825
    %v2842 = vadd.f32 %v2746, %v2826
    %v2843 = vadd.f32 %v2747, %v2827
    %v2844 = vadd.f32 %v2748, %v2828
    %v2845 = vadd.f32 %v2749, %v2829
    %v2846 = vadd.f32 %v2750, %v2830
    %v2847 = vadd.f32 %v2751, %v2831
    %v2848 = vadd.f32 %v2752, %v2832
    %v2849 = vadd.f32 %v2753, %v2833
    %v2850 = vadd.f32 %v2754, %v2834
    %v2851 = vlaneseq
    %v2852 = vshrl.u32 %v2851, 7
    %v2853 = vsub.s32 5, %v2852
    %v2854 = vrot.slane %v2051, %v2853
    %v2855 = vlaneseq
    %v2856 = vshrl.u32 %v2855, 7
    %v2857 = vsub.s32 5, %v2856
    %v2858 = vrot.slane %v2052, %v2857
    %v2859 = vlaneseq
    %v2860 = vshrl.u32 %v2859, 7
    %v2861 = vsub.s32 5, %v2860
    %v2862 = vrot.slane %v2053, %v2861
    %v2863 = vlaneseq
    %v2864 = vshrl.u32 %v2863, 7
    %v2865 = vsub.s32 5, %v2864
    %v2866 = vrot.slane %v2054, %v2865
    %v2867 = vlaneseq
    %v2868 = vshrl.u32 %v2867, 7
    %v2869 = vsub.s32 5, %v2868
    %v2870 = vrot.slane %v2055, %v2869
    %v2871 = vlaneseq
    %v2872 = vshrl.u32 %v2871, 7
    %v2873 = vsub.s32 5, %v2872
    %v2874 = vrot.slane %v2056, %v2873
    %v2875 = vlaneseq
    %v2876 = vshrl.u32 %v2875, 7
    %v2877 = vsub.s32 5, %v2876
    %v2878 = vrot.slane %v2057, %v2877
    %v2879 = vlaneseq
    %v2880 = vshrl.u32 %v2879, 7
    %v2881 = vsub.s32 5, %v2880
    %v2882 = vrot.slane %v2058, %v2881
    %v2883 = vlaneseq
    %v2884 = vshrl.u32 %v2883, 7
    %v2885 = vsub.s32 5, %v2884
    %v2886 = vrot.slane %v2059, %v2885
    %v2887 = vlaneseq
    %v2888 = vshrl.u32 %v2887, 7
    %v2889 = vsub.s32 5, %v2888
    %v2890 = vrot.slane %v2060, %v2889
    %v2891 = vlaneseq
    %v2892 = vshrl.u32 %v2891, 7
    %v2893 = vsub.s32 5, %v2892
    %v2894 = vrot.slane %v2061, %v2893
    %v2895 = vlaneseq
    %v2896 = vshrl.u32 %v2895, 7
    %v2897 = vsub.s32 5, %v2896
    %v2898 = vrot.slane %v2062, %v2897
    %v2899 = vlaneseq
    %v2900 = vshrl.u32 %v2899, 7
    %v2901 = vsub.s32 5, %v2900
    %v2902 = vrot.slane %v2063, %v2901
    %v2903 = vlaneseq
    %v2904 = vshrl.u32 %v2903, 7
    %v2905 = vsub.s32 5, %v2904
    %v2906 = vrot.slane %v2064, %v2905
    %v2907 = vlaneseq
    %v2908 = vshrl.u32 %v2907, 7
    %v2909 = vsub.s32 5, %v2908
    %v2910 = vrot.slane %v2065, %v2909
    %v2911 = vlaneseq
    %v2912 = vshrl.u32 %v2911, 7
    %v2913 = vsub.s32 5, %v2912
    %v2914 = vrot.slane %v2066, %v2913
    %v2915 = vmul.f32 %v2854, %v2376
    %v2916 = vmul.f32 %v2858, %v2376
    %v2917 = vmul.f32 %v2862, %v2376
    %v2918 = vmul.f32 %v2866, %v2376
    %v2919 = vmul.f32 %v2870, %v2376
    %v2920 = vmul.f32 %v2874, %v2376
    %v2921 = vmul.f32 %v2878, %v2376
    %v2922 = vmul.f32 %v2882, %v2376
    %v2923 = vmul.f32 %v2886, %v2384
    %v2924 = vmul.f32 %v2890, %v2384
    %v2925 = vmul.f32 %v2894, %v2384
    %v2926 = vmul.f32 %v2898, %v2384
    %v2927 = vmul.f32 %v2902, %v2384
    %v2928 = vmul.f32 %v2906, %v2384
    %v2929 = vmul.f32 %v2910, %v2384
    %v2930 = vmul.f32 %v2914, %v2384
    %v2931 = vadd.f32 %v2835, %v2915
    %v2932 = vadd.f32 %v2836, %v2916
    %v2933 = vadd.f32 %v2837, %v2917
    %v2934 = vadd.f32 %v2838, %v2918
    %v2935 = vadd.f32 %v2839, %v2919
    %v2936 = vadd.f32 %v2840, %v2920
    %v2937 = vadd.f32 %v2841, %v2921
    %v2938 = vadd.f32 %v2842, %v2922
    %v2939 = vadd.f32 %v2843, %v2923
    %v2940 = vadd.f32 %v2844, %v2924
    %v2941 = vadd.f32 %v2845, %v2925
    %v2942 = vadd.f32 %v2846, %v2926
    %v2943 = vadd.f32 %v2847, %v2927
    %v2944 = vadd.f32 %v2848, %v2928
    %v2945 = vadd.f32 %v2849, %v2929
    %v2946 = vadd.f32 %v2850, %v2930
    %v2947 = vlaneseq
    %v2948 = vshrl.u32 %v2947, 7
    %v2949 = vsub.s32 6, %v2948
    %v2950 = vrot.slane %v2051, %v2949
    %v2951 = vlaneseq
    %v2952 = vshrl.u32 %v2951, 7
    %v2953 = vsub.s32 6, %v2952
    %v2954 = vrot.slane %v2052, %v2953
    %v2955 = vlaneseq
    %v2956 = vshrl.u32 %v2955, 7
    %v2957 = vsub.s32 6, %v2956
    %v2958 = vrot.slane %v2053, %v2957
    %v2959 = vlaneseq
    %v2960 = vshrl.u32 %v2959, 7
    %v2961 = vsub.s32 6, %v2960
    %v2962 = vrot.slane %v2054, %v2961
    %v2963 = vlaneseq
    %v2964 = vshrl.u32 %v2963, 7
    %v2965 = vsub.s32 6, %v2964
    %v2966 = vrot.slane %v2055, %v2965
    %v2967 = vlaneseq
    %v2968 = vshrl.u32 %v2967, 7
    %v2969 = vsub.s32 6, %v2968
    %v2970 = vrot.slane %v2056, %v2969
    %v2971 = vlaneseq
    %v2972 = vshrl.u32 %v2971, 7
    %v2973 = vsub.s32 6, %v2972
    %v2974 = vrot.slane %v2057, %v2973
    %v2975 = vlaneseq
    %v2976 = vshrl.u32 %v2975, 7
    %v2977 = vsub.s32 6, %v2976
    %v2978 = vrot.slane %v2058, %v2977
    %v2979 = vlaneseq
    %v2980 = vshrl.u32 %v2979, 7
    %v2981 = vsub.s32 6, %v2980
    %v2982 = vrot.slane %v2059, %v2981
    %v2983 = vlaneseq
    %v2984 = vshrl.u32 %v2983, 7
    %v2985 = vsub.s32 6, %v2984
    %v2986 = vrot.slane %v2060, %v2985
    %v2987 = vlaneseq
    %v2988 = vshrl.u32 %v2987, 7
    %v2989 = vsub.s32 6, %v2988
    %v2990 = vrot.slane %v2061, %v2989
    %v2991 = vlaneseq
    %v2992 = vshrl.u32 %v2991, 7
    %v2993 = vsub.s32 6, %v2992
    %v2994 = vrot.slane %v2062, %v2993
    %v2995 = vlaneseq
    %v2996 = vshrl.u32 %v2995, 7
    %v2997 = vsub.s32 6, %v2996
    %v2998 = vrot.slane %v2063, %v2997
    %v2999 = vlaneseq
    %v3000 = vshrl.u32 %v2999, 7
    %v3001 = vsub.s32 6, %v3000
    %v3002 = vrot.slane %v2064, %v3001
    %v3003 = vlaneseq
    %v3004 = vshrl.u32 %v3003, 7
    %v3005 = vsub.s32 6, %v3004
    %v3006 = vrot.slane %v2065, %v3005
    %v3007 = vlaneseq
    %v3008 = vshrl.u32 %v3007, 7
    %v3009 = vsub.s32 6, %v3008
    %v3010 = vrot.slane %v2066, %v3009
    %v3011 = vmul.f32 %v2950, %v2377
    %v3012 = vmul.f32 %v2954, %v2377
    %v3013 = vmul.f32 %v2958, %v2377
    %v3014 = vmul.f32 %v2962, %v2377
    %v3015 = vmul.f32 %v2966, %v2377
    %v3016 = vmul.f32 %v2970, %v2377
    %v3017 = vmul.f32 %v2974, %v2377
    %v3018 = vmul.f32 %v2978, %v2377
    %v3019 = vmul.f32 %v2982, %v2385
    %v3020 = vmul.f32 %v2986, %v2385
    %v3021 = vmul.f32 %v2990, %v2385
    %v3022 = vmul.f32 %v2994, %v2385
    %v3023 = vmul.f32 %v2998, %v2385
    %v3024 = vmul.f32 %v3002, %v2385
    %v3025 = vmul.f32 %v3006, %v2385
    %v3026 = vmul.f32 %v3010, %v2385
    %v3027 = vadd.f32 %v2931, %v3011
    %v3028 = vadd.f32 %v2932, %v3012
    %v3029 = vadd.f32 %v2933, %v3013
    %v3030 = vadd.f32 %v2934, %v3014
    %v3031 = vadd.f32 %v2935, %v3015
    %v3032 = vadd.f32 %v2936, %v3016
    %v3033 = vadd.f32 %v2937, %v3017
    %v3034 = vadd.f32 %v2938, %v3018
    %v3035 = vadd.f32 %v2939, %v3019
    %v3036 = vadd.f32 %v2940, %v3020
    %v3037 = vadd.f32 %v2941, %v3021
    %v3038 = vadd.f32 %v2942, %v3022
    %v3039 = vadd.f32 %v2943, %v3023
    %v3040 = vadd.f32 %v2944, %v3024
    %v3041 = vadd.f32 %v2945, %v3025
    %v3042 = vadd.f32 %v2946, %v3026
    %v3043 = vlaneseq
    %v3044 = vshrl.u32 %v3043, 7
    %v3045 = vsub.s32 7, %v3044
    %v3046 = vrot.slane %v2051, %v3045
    %v3047 = vlaneseq
    %v3048 = vshrl.u32 %v3047, 7
    %v3049 = vsub.s32 7, %v3048
    %v3050 = vrot.slane %v2052, %v3049
    %v3051 = vlaneseq
    %v3052 = vshrl.u32 %v3051, 7
    %v3053 = vsub.s32 7, %v3052
    %v3054 = vrot.slane %v2053, %v3053
    %v3055 = vlaneseq
    %v3056 = vshrl.u32 %v3055, 7
    %v3057 = vsub.s32 7, %v3056
    %v3058 = vrot.slane %v2054, %v3057
    %v3059 = vlaneseq
    %v3060 = vshrl.u32 %v3059, 7
    %v3061 = vsub.s32 7, %v3060
    %v3062 = vrot.slane %v2055, %v3061
    %v3063 = vlaneseq
    %v3064 = vshrl.u32 %v3063, 7
    %v3065 = vsub.s32 7, %v3064
    %v3066 = vrot.slane %v2056, %v3065
    %v3067 = vlaneseq
    %v3068 = vshrl.u32 %v3067, 7
    %v3069 = vsub.s32 7, %v3068
    %v3070 = vrot.slane %v2057, %v3069
    %v3071 = vlaneseq
    %v3072 = vshrl.u32 %v3071, 7
    %v3073 = vsub.s32 7, %v3072
    %v3074 = vrot.slane %v2058, %v3073
    %v3075 = vlaneseq
    %v3076 = vshrl.u32 %v3075, 7
    %v3077 = vsub.s32 7, %v3076
    %v3078 = vrot.slane %v2059, %v3077
    %v3079 = vlaneseq
    %v3080 = vshrl.u32 %v3079, 7
    %v3081 = vsub.s32 7, %v3080
    %v3082 = vrot.slane %v2060, %v3081
    %v3083 = vlaneseq
    %v3084 = vshrl.u32 %v3083, 7
    %v3085 = vsub.s32 7, %v3084
    %v3086 = vrot.slane %v2061, %v3085
    %v3087 = vlaneseq
    %v3088 = vshrl.u32 %v3087, 7
    %v3089 = vsub.s32 7, %v3088
    %v3090 = vrot.slane %v2062, %v3089
    %v3091 = vlaneseq
    %v3092 = vshrl.u32 %v3091, 7
    %v3093 = vsub.s32 7, %v3092
    %v3094 = vrot.slane %v2063, %v3093
    %v3095 = vlaneseq
    %v3096 = vshrl.u32 %v3095, 7
    %v3097 = vsub.s32 7, %v3096
    %v3098 = vrot.slane %v2064, %v3097
    %v3099 = vlaneseq
    %v3100 = vshrl.u32 %v3099, 7
    %v3101 = vsub.s32 7, %v3100
    %v3102 = vrot.slane %v2065, %v3101
    %v3103 = vlaneseq
    %v3104 = vshrl.u32 %v3103, 7
    %v3105 = vsub.s32 7, %v3104
    %v3106 = vrot.slane %v2066, %v3105
    %v3107 = vmul.f32 %v3046, %v2378
    %v3108 = vmul.f32 %v3050, %v2378
    %v3109 = vmul.f32 %v3054, %v2378
    %v3110 = vmul.f32 %v3058, %v2378
    %v3111 = vmul.f32 %v3062, %v2378
    %v3112 = vmul.f32 %v3066, %v2378
    %v3113 = vmul.f32 %v3070, %v2378
    %v3114 = vmul.f32 %v3074, %v2378
    %v3115 = vmul.f32 %v3078, %v2386
    %v3116 = vmul.f32 %v3082, %v2386
    %v3117 = vmul.f32 %v3086, %v2386
    %v3118 = vmul.f32 %v3090, %v2386
    %v3119 = vmul.f32 %v3094, %v2386
    %v3120 = vmul.f32 %v3098, %v2386
    %v3121 = vmul.f32 %v3102, %v2386
    %v3122 = vmul.f32 %v3106, %v2386
    %v3123 = vadd.f32 %v3027, %v3107
    %v3124 = vadd.f32 %v3028, %v3108
    %v3125 = vadd.f32 %v3029, %v3109
    %v3126 = vadd.f32 %v3030, %v3110
    %v3127 = vadd.f32 %v3031, %v3111
    %v3128 = vadd.f32 %v3032, %v3112
    %v3129 = vadd.f32 %v3033, %v3113
    %v3130 = vadd.f32 %v3034, %v3114
    %v3131 = vadd.f32 %v3035, %v3115
    %v3132 = vadd.f32 %v3036, %v3116
    %v3133 = vadd.f32 %v3037, %v3117
    %v3134 = vadd.f32 %v3038, %v3118
    %v3135 = vadd.f32 %v3039, %v3119
    %v3136 = vadd.f32 %v3040, %v3120
    %v3137 = vadd.f32 %v3041, %v3121
    %v3138 = vadd.f32 %v3042, %v3122
    %v3139 = vadd.f32 %v2235, %v3123
    %v3140 = vadd.f32 %v2236, %v3124
    %v3141 = vadd.f32 %v2237, %v3125
    %v3142 = vadd.f32 %v2238, %v3126
    %v3143 = vadd.f32 %v2239, %v3127
    %v3144 = vadd.f32 %v2240, %v3128
    %v3145 = vadd.f32 %v2241, %v3129
    %v3146 = vadd.f32 %v2242, %v3130
    %v3147 = vadd.f32 %v2243, %v3131
    %v3148 = vadd.f32 %v2244, %v3132
    %v3149 = vadd.f32 %v2245, %v3133
    %v3150 = vadd.f32 %v2246, %v3134
    %v3151 = vadd.f32 %v2247, %v3135
    %v3152 = vadd.f32 %v2248, %v3136
    %v3153 = vadd.f32 %v2249, %v3137
    %v3154 = vadd.f32 %v2250, %v3138
    %v3155 = vmul.f32 %v2390, %v3139
    %v3156 = vmul.f32 %v2394, %v3139
    %v3157 = vmul.f32 %v2398, %v3139
    %v3158 = vmul.f32 %v2402, %v3139
    %v3159 = vmul.f32 %v2406, %v3139
    %v3160 = vmul.f32 %v2410, %v3139
    %v3161 = vmul.f32 %v2414, %v3139
    %v3162 = vmul.f32 %v2418, %v3139
    %v3163 = vmul.f32 %v2422, %v3147
    %v3164 = vmul.f32 %v2426, %v3147
    %v3165 = vmul.f32 %v2430, %v3147
    %v3166 = vmul.f32 %v2434, %v3147
    %v3167 = vmul.f32 %v2438, %v3147
    %v3168 = vmul.f32 %v2442, %v3147
    %v3169 = vmul.f32 %v2446, %v3147
    %v3170 = vmul.f32 %v2450, %v3147
    %v3171 = vmul.f32 %v2470, %v3140
    %v3172 = vmul.f32 %v2474, %v3140
    %v3173 = vmul.f32 %v2478, %v3140
    %v3174 = vmul.f32 %v2482, %v3140
    %v3175 = vmul.f32 %v2486, %v3140
    %v3176 = vmul.f32 %v2490, %v3140
    %v3177 = vmul.f32 %v2494, %v3140
    %v3178 = vmul.f32 %v2498, %v3140
    %v3179 = vmul.f32 %v2502, %v3148
    %v3180 = vmul.f32 %v2506, %v3148
    %v3181 = vmul.f32 %v2510, %v3148
    %v3182 = vmul.f32 %v2514, %v3148
    %v3183 = vmul.f32 %v2518, %v3148
    %v3184 = vmul.f32 %v2522, %v3148
    %v3185 = vmul.f32 %v2526, %v3148
    %v3186 = vmul.f32 %v2530, %v3148
    %v3187 = vadd.f32 %v3155, %v3171
    %v3188 = vadd.f32 %v3156, %v3172
    %v3189 = vadd.f32 %v3157, %v3173
    %v3190 = vadd.f32 %v3158, %v3174
    %v3191 = vadd.f32 %v3159, %v3175
    %v3192 = vadd.f32 %v3160, %v3176
    %v3193 = vadd.f32 %v3161, %v3177
    %v3194 = vadd.f32 %v3162, %v3178
    %v3195 = vadd.f32 %v3163, %v3179
    %v3196 = vadd.f32 %v3164, %v3180
    %v3197 = vadd.f32 %v3165, %v3181
    %v3198 = vadd.f32 %v3166, %v3182
    %v3199 = vadd.f32 %v3167, %v3183
    %v3200 = vadd.f32 %v3168, %v3184
    %v3201 = vadd.f32 %v3169, %v3185
    %v3202 = vadd.f32 %v3170, %v3186
    %v3203 = vmul.f32 %v2566, %v3141
    %v3204 = vmul.f32 %v2570, %v3141
    %v3205 = vmul.f32 %v2574, %v3141
    %v3206 = vmul.f32 %v2578, %v3141
    %v3207 = vmul.f32 %v2582, %v3141
    %v3208 = vmul.f32 %v2586, %v3141
    %v3209 = vmul.f32 %v2590, %v3141
    %v3210 = vmul.f32 %v2594, %v3141
    %v3211 = vmul.f32 %v2598, %v3149
    %v3212 = vmul.f32 %v2602, %v3149
    %v3213 = vmul.f32 %v2606, %v3149
    %v3214 = vmul.f32 %v2610, %v3149
    %v3215 = vmul.f32 %v2614, %v3149
    %v3216 = vmul.f32 %v2618, %v3149
    %v3217 = vmul.f32 %v2622, %v3149
    %v3218 = vmul.f32 %v2626, %v3149
    %v3219 = vadd.f32 %v3187, %v3203
    %v3220 = vadd.f32 %v3188, %v3204
    %v3221 = vadd.f32 %v3189, %v3205
    %v3222 = vadd.f32 %v3190, %v3206
    %v3223 = vadd.f32 %v3191, %v3207
    %v3224 = vadd.f32 %v3192, %v3208
    %v3225 = vadd.f32 %v3193, %v3209
    %v3226 = vadd.f32 %v3194, %v3210
    %v3227 = vadd.f32 %v3195, %v3211
    %v3228 = vadd.f32 %v3196, %v3212
    %v3229 = vadd.f32 %v3197, %v3213
    %v3230 = vadd.f32 %v3198, %v3214
    %v3231 = vadd.f32 %v3199, %v3215
    %v3232 = vadd.f32 %v3200, %v3216
    %v3233 = vadd.f32 %v3201, %v3217
    %v3234 = vadd.f32 %v3202, %v3218
    %v3235 = vmul.f32 %v2662, %v3142
    %v3236 = vmul.f32 %v2666, %v3142
    %v3237 = vmul.f32 %v2670, %v3142
    %v3238 = vmul.f32 %v2674, %v3142
    %v3239 = vmul.f32 %v2678, %v3142
    %v3240 = vmul.f32 %v2682, %v3142
    %v3241 = vmul.f32 %v2686, %v3142
    %v3242 = vmul.f32 %v2690, %v3142
    %v3243 = vmul.f32 %v2694, %v3150
    %v3244 = vmul.f32 %v2698, %v3150
    %v3245 = vmul.f32 %v2702, %v3150
    %v3246 = vmul.f32 %v2706, %v3150
    %v3247 = vmul.f32 %v2710, %v3150
    %v3248 = vmul.f32 %v2714, %v3150
    %v3249 = vmul.f32 %v2718, %v3150
    %v3250 = vmul.f32 %v2722, %v3150
    %v3251 = vadd.f32 %v3219, %v3235
    %v3252 = vadd.f32 %v3220, %v3236
    %v3253 = vadd.f32 %v3221, %v3237
    %v3254 = vadd.f32 %v3222, %v3238
    %v3255 = vadd.f32 %v3223, %v3239
    %v3256 = vadd.f32 %v3224, %v3240
    %v3257 = vadd.f32 %v3225, %v3241
    %v3258 = vadd.f32 %v3226, %v3242
    %v3259 = vadd.f32 %v3227, %v3243
    %v3260 = vadd.f32 %v3228, %v3244
    %v3261 = vadd.f32 %v3229, %v3245
    %v3262 = vadd.f32 %v3230, %v3246
    %v3263 = vadd.f32 %v3231, %v3247
    %v3264 = vadd.f32 %v3232, %v3248
    %v3265 = vadd.f32 %v3233, %v3249
    %v3266 = vadd.f32 %v3234, %v3250
    %v3267 = vmul.f32 %v2758, %v3143
    %v3268 = vmul.f32 %v2762, %v3143
    %v3269 = vmul.f32 %v2766, %v3143
    %v3270 = vmul.f32 %v2770, %v3143
    %v3271 = vmul.f32 %v2774, %v3143
    %v3272 = vmul.f32 %v2778, %v3143
    %v3273 = vmul.f32 %v2782, %v3143
    %v3274 = vmul.f32 %v2786, %v3143
    %v3275 = vmul.f32 %v2790, %v3151
    %v3276 = vmul.f32 %v2794, %v3151
    %v3277 = vmul.f32 %v2798, %v3151
    %v3278 = vmul.f32 %v2802, %v3151
    %v3279 = vmul.f32 %v2806, %v3151
    %v3280 = vmul.f32 %v2810, %v3151
    %v3281 = vmul.f32 %v2814, %v3151
    %v3282 = vmul.f32 %v2818, %v3151
    %v3283 = vadd.f32 %v3251, %v3267
    %v3284 = vadd.f32 %v3252, %v3268
    %v3285 = vadd.f32 %v3253, %v3269
    %v3286 = vadd.f32 %v3254, %v3270
    %v3287 = vadd.f32 %v3255, %v3271
    %v3288 = vadd.f32 %v3256, %v3272
    %v3289 = vadd.f32 %v3257, %v3273
    %v3290 = vadd.f32 %v3258, %v3274
    %v3291 = vadd.f32 %v3259, %v3275
    %v3292 = vadd.f32 %v3260, %v3276
    %v3293 = vadd.f32 %v3261, %v3277
    %v3294 = vadd.f32 %v3262, %v3278
    %v3295 = vadd.f32 %v3263, %v3279
    %v3296 = vadd.f32 %v3264, %v3280
    %v3297 = vadd.f32 %v3265, %v3281
    %v3298 = vadd.f32 %v3266, %v3282
    %v3299 = vmul.f32 %v2854, %v3144
    %v3300 = vmul.f32 %v2858, %v3144
    %v3301 = vmul.f32 %v2862, %v3144
    %v3302 = vmul.f32 %v2866, %v3144
    %v3303 = vmul.f32 %v2870, %v3144
    %v3304 = vmul.f32 %v2874, %v3144
    %v3305 = vmul.f32 %v2878, %v3144
    %v3306 = vmul.f32 %v2882, %v3144
    %v3307 = vmul.f32 %v2886, %v3152
    %v3308 = vmul.f32 %v2890, %v3152
    %v3309 = vmul.f32 %v2894, %v3152
    %v3310 = vmul.f32 %v2898, %v3152
    %v3311 = vmul.f32 %v2902, %v3152
    %v3312 = vmul.f32 %v2906, %v3152
    %v3313 = vmul.f32 %v2910, %v3152
    %v3314 = vmul.f32 %v2914, %v3152
    %v3315 = vadd.f32 %v3283, %v3299
    %v3316 = vadd.f32 %v3284, %v3300
    %v3317 = vadd.f32 %v3285, %v3301
    %v3318 = vadd.f32 %v3286, %v3302
    %v3319 = vadd.f32 %v3287, %v3303
    %v3320 = vadd.f32 %v3288, %v3304
    %v3321 = vadd.f32 %v3289, %v3305
    %v3322 = vadd.f32 %v3290, %v3306
    %v3323 = vadd.f32 %v3291, %v3307
    %v3324 = vadd.f32 %v3292, %v3308
    %v3325 = vadd.f32 %v3293, %v3309
    %v3326 = vadd.f32 %v3294, %v3310
    %v3327 = vadd.f32 %v3295, %v3311
    %v3328 = vadd.f32 %v3296, %v3312
    %v3329 = vadd.f32 %v3297, %v3313
    %v3330 = vadd.f32 %v3298, %v3314
    %v3331 = vmul.f32 %v2950, %v3145
    %v3332 = vmul.f32 %v2954, %v3145
    %v3333 = vmul.f32 %v2958, %v3145
    %v3334 = vmul.f32 %v2962, %v3145
    %v3335 = vmul.f32 %v2966, %v3145
    %v3336 = vmul.f32 %v2970, %v3145
    %v3337 = vmul.f32 %v2974, %v3145
    %v3338 = vmul.f32 %v2978, %v3145
    %v3339 = vmul.f32 %v2982, %v3153
    %v3340 = vmul.f32 %v2986, %v3153
    %v3341 = vmul.f32 %v2990, %v3153
    %v3342 = vmul.f32 %v2994, %v3153
    %v3343 = vmul.f32 %v2998, %v3153
    %v3344 = vmul.f32 %v3002, %v3153
    %v3345 = vmul.f32 %v3006, %v3153
    %v3346 = vmul.f32 %v3010, %v3153
    %v3347 = vadd.f32 %v3315, %v3331
    %v3348 = vadd.f32 %v3316, %v3332
    %v3349 = vadd.f32 %v3317, %v3333
    %v3350 = vadd.f32 %v3318, %v3334
    %v3351 = vadd.f32 %v3319, %v3335
    %v3352 = vadd.f32 %v3320, %v3336
    %v3353 = vadd.f32 %v3321, %v3337
    %v3354 = vadd.f32 %v3322, %v3338
    %v3355 = vadd.f32 %v3323, %v3339
    %v3356 = vadd.f32 %v3324, %v3340
    %v3357 = vadd.f32 %v3325, %v3341
    %v3358 = vadd.f32 %v3326, %v3342
    %v3359 = vadd.f32 %v3327, %v3343
    %v3360 = vadd.f32 %v3328, %v3344
    %v3361 = vadd.f32 %v3329, %v3345
    %v3362 = vadd.f32 %v3330, %v3346
    %v3363 = vmul.f32 %v3046, %v3146
    %v3364 = vmul.f32 %v3050, %v3146
    %v3365 = vmul.f32 %v3054, %v3146
    %v3366 = vmul.f32 %v3058, %v3146
    %v3367 = vmul.f32 %v3062, %v3146
    %v3368 = vmul.f32 %v3066, %v3146
    %v3369 = vmul.f32 %v3070, %v3146
    %v3370 = vmul.f32 %v3074, %v3146
    %v3371 = vmul.f32 %v3078, %v3154
    %v3372 = vmul.f32 %v3082, %v3154
    %v3373 = vmul.f32 %v3086, %v3154
    %v3374 = vmul.f32 %v3090, %v3154
    %v3375 = vmul.f32 %v3094, %v3154
    %v3376 = vmul.f32 %v3098, %v3154
    %v3377 = vmul.f32 %v3102, %v3154
    %v3378 = vmul.f32 %v3106, %v3154
    %v3379 = vadd.f32 %v3347, %v3363
    %v3380 = vadd.f32 %v3348, %v3364
    %v3381 = vadd.f32 %v3349, %v3365
    %v3382 = vadd.f32 %v3350, %v3366
    %v3383 = vadd.f32 %v3351, %v3367
    %v3384 = vadd.f32 %v3352, %v3368
    %v3385 = vadd.f32 %v3353, %v3369
    %v3386 = vadd.f32 %v3354, %v3370
    %v3387 = vadd.f32 %v3355, %v3371
    %v3388 = vadd.f32 %v3356, %v3372
    %v3389 = vadd.f32 %v3357, %v3373
    %v3390 = vadd.f32 %v3358, %v3374
    %v3391 = vadd.f32 %v3359, %v3375
    %v3392 = vadd.f32 %v3360, %v3376
    %v3393 = vadd.f32 %v3361, %v3377
    %v3394 = vadd.f32 %v3362, %v3378
    %v3395 = vadd.f32 %v2131, %v3379
    %v3396 = vadd.f32 %v2132, %v3380
    %v3397 = vadd.f32 %v2133, %v3381
    %v3398 = vadd.f32 %v2134, %v3382
    %v3399 = vadd.f32 %v2135, %v3383
    %v3400 = vadd.f32 %v2136, %v3384
    %v3401 = vadd.f32 %v2137, %v3385
    %v3402 = vadd.f32 %v2138, %v3386
    %v3403 = vadd.f32 %v2139, %v3387
    %v3404 = vadd.f32 %v2140, %v3388
    %v3405 = vadd.f32 %v2141, %v3389
    %v3406 = vadd.f32 %v2142, %v3390
    %v3407 = vadd.f32 %v2143, %v3391
    %v3408 = vadd.f32 %v2144, %v3392
    %v3409 = vadd.f32 %v2145, %v3393
    %v3410 = vadd.f32 %v2146, %v3394
    %s3411 = sld [smem:[#allocation3]]
    // While loop
    $region10: #{tpu_custom_call.1} parent=1 // loop_pre_header
      _
    $region11: #{tpu_custom_call.1} parent=1 // loop_header
      %s3413 = sphi 0, %s3415
      %p3414 = scmp.ge.s32.totalorder %s3413, %s3411
      %v3418 = vphi %v3395, %v4193
      %v3419 = vphi %v3396, %v4194
      %v3420 = vphi %v3397, %v4195
      %v3421 = vphi %v3398, %v4196
      %v3422 = vphi %v3399, %v4197
      %v3423 = vphi %v3400, %v4198
      %v3424 = vphi %v3401, %v4199
      %v3425 = vphi %v3402, %v4200
      %v3426 = vphi %v3403, %v4201
      %v3427 = vphi %v3404, %v4202
      %v3428 = vphi %v3405, %v4203
      %v3429 = vphi %v3406, %v4204
      %v3430 = vphi %v3407, %v4205
      %v3431 = vphi %v3408, %v4206
      %v3432 = vphi %v3409, %v4207
      %v3433 = vphi %v3410, %v4208
    $region12: #{tpu_custom_call.1} parent=1 // loop_header_branch
      %3417 = sbr.rel (%p3414) target = $region16
    $region13: #{tpu_custom_call.1} parent=1 // loop_body
      %v3434 = vlaneseq
      %v3435 = vshrl.u32 %v3434, 7
      %v3436 = vsub.s32 0, %v3435
      %v3437 = vrot.slane %v3418, %v3436
      %v3438 = vlaneseq
      %v3439 = vshrl.u32 %v3438, 7
      %v3440 = vsub.s32 0, %v3439
      %v3441 = vrot.slane %v3419, %v3440
      %v3442 = vlaneseq
      %v3443 = vshrl.u32 %v3442, 7
      %v3444 = vsub.s32 0, %v3443
      %v3445 = vrot.slane %v3420, %v3444
      %v3446 = vlaneseq
      %v3447 = vshrl.u32 %v3446, 7
      %v3448 = vsub.s32 0, %v3447
      %v3449 = vrot.slane %v3421, %v3448
      %v3450 = vlaneseq
      %v3451 = vshrl.u32 %v3450, 7
      %v3452 = vsub.s32 0, %v3451
      %v3453 = vrot.slane %v3422, %v3452
      %v3454 = vlaneseq
      %v3455 = vshrl.u32 %v3454, 7
      %v3456 = vsub.s32 0, %v3455
      %v3457 = vrot.slane %v3423, %v3456
      %v3458 = vlaneseq
      %v3459 = vshrl.u32 %v3458, 7
      %v3460 = vsub.s32 0, %v3459
      %v3461 = vrot.slane %v3424, %v3460
      %v3462 = vlaneseq
      %v3463 = vshrl.u32 %v3462, 7
      %v3464 = vsub.s32 0, %v3463
      %v3465 = vrot.slane %v3425, %v3464
      %v3466 = vlaneseq
      %v3467 = vshrl.u32 %v3466, 7
      %v3468 = vsub.s32 0, %v3467
      %v3469 = vrot.slane %v3426, %v3468
      %v3470 = vlaneseq
      %v3471 = vshrl.u32 %v3470, 7
      %v3472 = vsub.s32 0, %v3471
      %v3473 = vrot.slane %v3427, %v3472
      %v3474 = vlaneseq
      %v3475 = vshrl.u32 %v3474, 7
      %v3476 = vsub.s32 0, %v3475
      %v3477 = vrot.slane %v3428, %v3476
      %v3478 = vlaneseq
      %v3479 = vshrl.u32 %v3478, 7
      %v3480 = vsub.s32 0, %v3479
      %v3481 = vrot.slane %v3429, %v3480
      %v3482 = vlaneseq
      %v3483 = vshrl.u32 %v3482, 7
      %v3484 = vsub.s32 0, %v3483
      %v3485 = vrot.slane %v3430, %v3484
      %v3486 = vlaneseq
      %v3487 = vshrl.u32 %v3486, 7
      %v3488 = vsub.s32 0, %v3487
      %v3489 = vrot.slane %v3431, %v3488
      %v3490 = vlaneseq
      %v3491 = vshrl.u32 %v3490, 7
      %v3492 = vsub.s32 0, %v3491
      %v3493 = vrot.slane %v3432, %v3492
      %v3494 = vlaneseq
      %v3495 = vshrl.u32 %v3494, 7
      %v3496 = vsub.s32 0, %v3495
      %v3497 = vrot.slane %v3433, %v3496
      %v3498 = vmul.f32 %v3437, %v3418
      %v3499 = vmul.f32 %v3441, %v3418
      %v3500 = vmul.f32 %v3445, %v3418
      %v3501 = vmul.f32 %v3449, %v3418
      %v3502 = vmul.f32 %v3453, %v3418
      %v3503 = vmul.f32 %v3457, %v3418
      %v3504 = vmul.f32 %v3461, %v3418
      %v3505 = vmul.f32 %v3465, %v3418
      %v3506 = vmul.f32 %v3469, %v3426
      %v3507 = vmul.f32 %v3473, %v3426
      %v3508 = vmul.f32 %v3477, %v3426
      %v3509 = vmul.f32 %v3481, %v3426
      %v3510 = vmul.f32 %v3485, %v3426
      %v3511 = vmul.f32 %v3489, %v3426
      %v3512 = vmul.f32 %v3493, %v3426
      %v3513 = vmul.f32 %v3497, %v3426
      %v3514 = vlaneseq
      %v3515 = vshrl.u32 %v3514, 7
      %v3516 = vsub.s32 1, %v3515
      %v3517 = vrot.slane %v3418, %v3516
      %v3518 = vlaneseq
      %v3519 = vshrl.u32 %v3518, 7
      %v3520 = vsub.s32 1, %v3519
      %v3521 = vrot.slane %v3419, %v3520
      %v3522 = vlaneseq
      %v3523 = vshrl.u32 %v3522, 7
      %v3524 = vsub.s32 1, %v3523
      %v3525 = vrot.slane %v3420, %v3524
      %v3526 = vlaneseq
      %v3527 = vshrl.u32 %v3526, 7
      %v3528 = vsub.s32 1, %v3527
      %v3529 = vrot.slane %v3421, %v3528
      %v3530 = vlaneseq
      %v3531 = vshrl.u32 %v3530, 7
      %v3532 = vsub.s32 1, %v3531
      %v3533 = vrot.slane %v3422, %v3532
      %v3534 = vlaneseq
      %v3535 = vshrl.u32 %v3534, 7
      %v3536 = vsub.s32 1, %v3535
      %v3537 = vrot.slane %v3423, %v3536
      %v3538 = vlaneseq
      %v3539 = vshrl.u32 %v3538, 7
      %v3540 = vsub.s32 1, %v3539
      %v3541 = vrot.slane %v3424, %v3540
      %v3542 = vlaneseq
      %v3543 = vshrl.u32 %v3542, 7
      %v3544 = vsub.s32 1, %v3543
      %v3545 = vrot.slane %v3425, %v3544
      %v3546 = vlaneseq
      %v3547 = vshrl.u32 %v3546, 7
      %v3548 = vsub.s32 1, %v3547
      %v3549 = vrot.slane %v3426, %v3548
      %v3550 = vlaneseq
      %v3551 = vshrl.u32 %v3550, 7
      %v3552 = vsub.s32 1, %v3551
      %v3553 = vrot.slane %v3427, %v3552
      %v3554 = vlaneseq
      %v3555 = vshrl.u32 %v3554, 7
      %v3556 = vsub.s32 1, %v3555
      %v3557 = vrot.slane %v3428, %v3556
      %v3558 = vlaneseq
      %v3559 = vshrl.u32 %v3558, 7
      %v3560 = vsub.s32 1, %v3559
      %v3561 = vrot.slane %v3429, %v3560
      %v3562 = vlaneseq
      %v3563 = vshrl.u32 %v3562, 7
      %v3564 = vsub.s32 1, %v3563
      %v3565 = vrot.slane %v3430, %v3564
      %v3566 = vlaneseq
      %v3567 = vshrl.u32 %v3566, 7
      %v3568 = vsub.s32 1, %v3567
      %v3569 = vrot.slane %v3431, %v3568
      %v3570 = vlaneseq
      %v3571 = vshrl.u32 %v3570, 7
      %v3572 = vsub.s32 1, %v3571
      %v3573 = vrot.slane %v3432, %v3572
      %v3574 = vlaneseq
      %v3575 = vshrl.u32 %v3574, 7
      %v3576 = vsub.s32 1, %v3575
      %v3577 = vrot.slane %v3433, %v3576
      %v3578 = vmul.f32 %v3517, %v3419
      %v3579 = vmul.f32 %v3521, %v3419
      %v3580 = vmul.f32 %v3525, %v3419
      %v3581 = vmul.f32 %v3529, %v3419
      %v3582 = vmul.f32 %v3533, %v3419
      %v3583 = vmul.f32 %v3537, %v3419
      %v3584 = vmul.f32 %v3541, %v3419
      %v3585 = vmul.f32 %v3545, %v3419
      %v3586 = vmul.f32 %v3549, %v3427
      %v3587 = vmul.f32 %v3553, %v3427
      %v3588 = vmul.f32 %v3557, %v3427
      %v3589 = vmul.f32 %v3561, %v3427
      %v3590 = vmul.f32 %v3565, %v3427
      %v3591 = vmul.f32 %v3569, %v3427
      %v3592 = vmul.f32 %v3573, %v3427
      %v3593 = vmul.f32 %v3577, %v3427
      %v3594 = vadd.f32 %v3498, %v3578
      %v3595 = vadd.f32 %v3499, %v3579
      %v3596 = vadd.f32 %v3500, %v3580
      %v3597 = vadd.f32 %v3501, %v3581
      %v3598 = vadd.f32 %v3502, %v3582
      %v3599 = vadd.f32 %v3503, %v3583
      %v3600 = vadd.f32 %v3504, %v3584
      %v3601 = vadd.f32 %v3505, %v3585
      %v3602 = vadd.f32 %v3506, %v3586
      %v3603 = vadd.f32 %v3507, %v3587
      %v3604 = vadd.f32 %v3508, %v3588
      %v3605 = vadd.f32 %v3509, %v3589
      %v3606 = vadd.f32 %v3510, %v3590
      %v3607 = vadd.f32 %v3511, %v3591
      %v3608 = vadd.f32 %v3512, %v3592
      %v3609 = vadd.f32 %v3513, %v3593
      %v3610 = vlaneseq
      %v3611 = vshrl.u32 %v3610, 7
      %v3612 = vsub.s32 2, %v3611
      %v3613 = vrot.slane %v3418, %v3612
      %v3614 = vlaneseq
      %v3615 = vshrl.u32 %v3614, 7
      %v3616 = vsub.s32 2, %v3615
      %v3617 = vrot.slane %v3419, %v3616
      %v3618 = vlaneseq
      %v3619 = vshrl.u32 %v3618, 7
      %v3620 = vsub.s32 2, %v3619
      %v3621 = vrot.slane %v3420, %v3620
      %v3622 = vlaneseq
      %v3623 = vshrl.u32 %v3622, 7
      %v3624 = vsub.s32 2, %v3623
      %v3625 = vrot.slane %v3421, %v3624
      %v3626 = vlaneseq
      %v3627 = vshrl.u32 %v3626, 7
      %v3628 = vsub.s32 2, %v3627
      %v3629 = vrot.slane %v3422, %v3628
      %v3630 = vlaneseq
      %v3631 = vshrl.u32 %v3630, 7
      %v3632 = vsub.s32 2, %v3631
      %v3633 = vrot.slane %v3423, %v3632
      %v3634 = vlaneseq
      %v3635 = vshrl.u32 %v3634, 7
      %v3636 = vsub.s32 2, %v3635
      %v3637 = vrot.slane %v3424, %v3636
      %v3638 = vlaneseq
      %v3639 = vshrl.u32 %v3638, 7
      %v3640 = vsub.s32 2, %v3639
      %v3641 = vrot.slane %v3425, %v3640
      %v3642 = vlaneseq
      %v3643 = vshrl.u32 %v3642, 7
      %v3644 = vsub.s32 2, %v3643
      %v3645 = vrot.slane %v3426, %v3644
      %v3646 = vlaneseq
      %v3647 = vshrl.u32 %v3646, 7
      %v3648 = vsub.s32 2, %v3647
      %v3649 = vrot.slane %v3427, %v3648
      %v3650 = vlaneseq
      %v3651 = vshrl.u32 %v3650, 7
      %v3652 = vsub.s32 2, %v3651
      %v3653 = vrot.slane %v3428, %v3652
      %v3654 = vlaneseq
      %v3655 = vshrl.u32 %v3654, 7
      %v3656 = vsub.s32 2, %v3655
      %v3657 = vrot.slane %v3429, %v3656
      %v3658 = vlaneseq
      %v3659 = vshrl.u32 %v3658, 7
      %v3660 = vsub.s32 2, %v3659
      %v3661 = vrot.slane %v3430, %v3660
      %v3662 = vlaneseq
      %v3663 = vshrl.u32 %v3662, 7
      %v3664 = vsub.s32 2, %v3663
      %v3665 = vrot.slane %v3431, %v3664
      %v3666 = vlaneseq
      %v3667 = vshrl.u32 %v3666, 7
      %v3668 = vsub.s32 2, %v3667
      %v3669 = vrot.slane %v3432, %v3668
      %v3670 = vlaneseq
      %v3671 = vshrl.u32 %v3670, 7
      %v3672 = vsub.s32 2, %v3671
      %v3673 = vrot.slane %v3433, %v3672
      %v3674 = vmul.f32 %v3613, %v3420
      %v3675 = vmul.f32 %v3617, %v3420
      %v3676 = vmul.f32 %v3621, %v3420
      %v3677 = vmul.f32 %v3625, %v3420
      %v3678 = vmul.f32 %v3629, %v3420
      %v3679 = vmul.f32 %v3633, %v3420
      %v3680 = vmul.f32 %v3637, %v3420
      %v3681 = vmul.f32 %v3641, %v3420
      %v3682 = vmul.f32 %v3645, %v3428
      %v3683 = vmul.f32 %v3649, %v3428
      %v3684 = vmul.f32 %v3653, %v3428
      %v3685 = vmul.f32 %v3657, %v3428
      %v3686 = vmul.f32 %v3661, %v3428
      %v3687 = vmul.f32 %v3665, %v3428
      %v3688 = vmul.f32 %v3669, %v3428
      %v3689 = vmul.f32 %v3673, %v3428
      %v3690 = vadd.f32 %v3594, %v3674
      %v3691 = vadd.f32 %v3595, %v3675
      %v3692 = vadd.f32 %v3596, %v3676
      %v3693 = vadd.f32 %v3597, %v3677
      %v3694 = vadd.f32 %v3598, %v3678
      %v3695 = vadd.f32 %v3599, %v3679
      %v3696 = vadd.f32 %v3600, %v3680
      %v3697 = vadd.f32 %v3601, %v3681
      %v3698 = vadd.f32 %v3602, %v3682
      %v3699 = vadd.f32 %v3603, %v3683
      %v3700 = vadd.f32 %v3604, %v3684
      %v3701 = vadd.f32 %v3605, %v3685
      %v3702 = vadd.f32 %v3606, %v3686
      %v3703 = vadd.f32 %v3607, %v3687
      %v3704 = vadd.f32 %v3608, %v3688
      %v3705 = vadd.f32 %v3609, %v3689
      %v3706 = vlaneseq
      %v3707 = vshrl.u32 %v3706, 7
      %v3708 = vsub.s32 3, %v3707
      %v3709 = vrot.slane %v3418, %v3708
      %v3710 = vlaneseq
      %v3711 = vshrl.u32 %v3710, 7
      %v3712 = vsub.s32 3, %v3711
      %v3713 = vrot.slane %v3419, %v3712
      %v3714 = vlaneseq
      %v3715 = vshrl.u32 %v3714, 7
      %v3716 = vsub.s32 3, %v3715
      %v3717 = vrot.slane %v3420, %v3716
      %v3718 = vlaneseq
      %v3719 = vshrl.u32 %v3718, 7
      %v3720 = vsub.s32 3, %v3719
      %v3721 = vrot.slane %v3421, %v3720
      %v3722 = vlaneseq
      %v3723 = vshrl.u32 %v3722, 7
      %v3724 = vsub.s32 3, %v3723
      %v3725 = vrot.slane %v3422, %v3724
      %v3726 = vlaneseq
      %v3727 = vshrl.u32 %v3726, 7
      %v3728 = vsub.s32 3, %v3727
      %v3729 = vrot.slane %v3423, %v3728
      %v3730 = vlaneseq
      %v3731 = vshrl.u32 %v3730, 7
      %v3732 = vsub.s32 3, %v3731
      %v3733 = vrot.slane %v3424, %v3732
      %v3734 = vlaneseq
      %v3735 = vshrl.u32 %v3734, 7
      %v3736 = vsub.s32 3, %v3735
      %v3737 = vrot.slane %v3425, %v3736
      %v3738 = vlaneseq
      %v3739 = vshrl.u32 %v3738, 7
      %v3740 = vsub.s32 3, %v3739
      %v3741 = vrot.slane %v3426, %v3740
      %v3742 = vlaneseq
      %v3743 = vshrl.u32 %v3742, 7
      %v3744 = vsub.s32 3, %v3743
      %v3745 = vrot.slane %v3427, %v3744
      %v3746 = vlaneseq
      %v3747 = vshrl.u32 %v3746, 7
      %v3748 = vsub.s32 3, %v3747
      %v3749 = vrot.slane %v3428, %v3748
      %v3750 = vlaneseq
      %v3751 = vshrl.u32 %v3750, 7
      %v3752 = vsub.s32 3, %v3751
      %v3753 = vrot.slane %v3429, %v3752
      %v3754 = vlaneseq
      %v3755 = vshrl.u32 %v3754, 7
      %v3756 = vsub.s32 3, %v3755
      %v3757 = vrot.slane %v3430, %v3756
      %v3758 = vlaneseq
      %v3759 = vshrl.u32 %v3758, 7
      %v3760 = vsub.s32 3, %v3759
      %v3761 = vrot.slane %v3431, %v3760
      %v3762 = vlaneseq
      %v3763 = vshrl.u32 %v3762, 7
      %v3764 = vsub.s32 3, %v3763
      %v3765 = vrot.slane %v3432, %v3764
      %v3766 = vlaneseq
      %v3767 = vshrl.u32 %v3766, 7
      %v3768 = vsub.s32 3, %v3767
      %v3769 = vrot.slane %v3433, %v3768
      %v3770 = vmul.f32 %v3709, %v3421
      %v3771 = vmul.f32 %v3713, %v3421
      %v3772 = vmul.f32 %v3717, %v3421
      %v3773 = vmul.f32 %v3721, %v3421
      %v3774 = vmul.f32 %v3725, %v3421
      %v3775 = vmul.f32 %v3729, %v3421
      %v3776 = vmul.f32 %v3733, %v3421
      %v3777 = vmul.f32 %v3737, %v3421
      %v3778 = vmul.f32 %v3741, %v3429
      %v3779 = vmul.f32 %v3745, %v3429
      %v3780 = vmul.f32 %v3749, %v3429
      %v3781 = vmul.f32 %v3753, %v3429
      %v3782 = vmul.f32 %v3757, %v3429
      %v3783 = vmul.f32 %v3761, %v3429
      %v3784 = vmul.f32 %v3765, %v3429
      %v3785 = vmul.f32 %v3769, %v3429
      %v3786 = vadd.f32 %v3690, %v3770
      %v3787 = vadd.f32 %v3691, %v3771
      %v3788 = vadd.f32 %v3692, %v3772
      %v3789 = vadd.f32 %v3693, %v3773
      %v3790 = vadd.f32 %v3694, %v3774
      %v3791 = vadd.f32 %v3695, %v3775
      %v3792 = vadd.f32 %v3696, %v3776
      %v3793 = vadd.f32 %v3697, %v3777
      %v3794 = vadd.f32 %v3698, %v3778
      %v3795 = vadd.f32 %v3699, %v3779
      %v3796 = vadd.f32 %v3700, %v3780
      %v3797 = vadd.f32 %v3701, %v3781
      %v3798 = vadd.f32 %v3702, %v3782
      %v3799 = vadd.f32 %v3703, %v3783
      %v3800 = vadd.f32 %v3704, %v3784
      %v3801 = vadd.f32 %v3705, %v3785
      %v3802 = vlaneseq
      %v3803 = vshrl.u32 %v3802, 7
      %v3804 = vsub.s32 4, %v3803
      %v3805 = vrot.slane %v3418, %v3804
      %v3806 = vlaneseq
      %v3807 = vshrl.u32 %v3806, 7
      %v3808 = vsub.s32 4, %v3807
      %v3809 = vrot.slane %v3419, %v3808
      %v3810 = vlaneseq
      %v3811 = vshrl.u32 %v3810, 7
      %v3812 = vsub.s32 4, %v3811
      %v3813 = vrot.slane %v3420, %v3812
      %v3814 = vlaneseq
      %v3815 = vshrl.u32 %v3814, 7
      %v3816 = vsub.s32 4, %v3815
      %v3817 = vrot.slane %v3421, %v3816
      %v3818 = vlaneseq
      %v3819 = vshrl.u32 %v3818, 7
      %v3820 = vsub.s32 4, %v3819
      %v3821 = vrot.slane %v3422, %v3820
      %v3822 = vlaneseq
      %v3823 = vshrl.u32 %v3822, 7
      %v3824 = vsub.s32 4, %v3823
      %v3825 = vrot.slane %v3423, %v3824
      %v3826 = vlaneseq
      %v3827 = vshrl.u32 %v3826, 7
      %v3828 = vsub.s32 4, %v3827
      %v3829 = vrot.slane %v3424, %v3828
      %v3830 = vlaneseq
      %v3831 = vshrl.u32 %v3830, 7
      %v3832 = vsub.s32 4, %v3831
      %v3833 = vrot.slane %v3425, %v3832
      %v3834 = vlaneseq
      %v3835 = vshrl.u32 %v3834, 7
      %v3836 = vsub.s32 4, %v3835
      %v3837 = vrot.slane %v3426, %v3836
      %v3838 = vlaneseq
      %v3839 = vshrl.u32 %v3838, 7
      %v3840 = vsub.s32 4, %v3839
      %v3841 = vrot.slane %v3427, %v3840
      %v3842 = vlaneseq
      %v3843 = vshrl.u32 %v3842, 7
      %v3844 = vsub.s32 4, %v3843
      %v3845 = vrot.slane %v3428, %v3844
      %v3846 = vlaneseq
      %v3847 = vshrl.u32 %v3846, 7
      %v3848 = vsub.s32 4, %v3847
      %v3849 = vrot.slane %v3429, %v3848
      %v3850 = vlaneseq
      %v3851 = vshrl.u32 %v3850, 7
      %v3852 = vsub.s32 4, %v3851
      %v3853 = vrot.slane %v3430, %v3852
      %v3854 = vlaneseq
      %v3855 = vshrl.u32 %v3854, 7
      %v3856 = vsub.s32 4, %v3855
      %v3857 = vrot.slane %v3431, %v3856
      %v3858 = vlaneseq
      %v3859 = vshrl.u32 %v3858, 7
      %v3860 = vsub.s32 4, %v3859
      %v3861 = vrot.slane %v3432, %v3860
      %v3862 = vlaneseq
      %v3863 = vshrl.u32 %v3862, 7
      %v3864 = vsub.s32 4, %v3863
      %v3865 = vrot.slane %v3433, %v3864
      %v3866 = vmul.f32 %v3805, %v3422
      %v3867 = vmul.f32 %v3809, %v3422
      %v3868 = vmul.f32 %v3813, %v3422
      %v3869 = vmul.f32 %v3817, %v3422
      %v3870 = vmul.f32 %v3821, %v3422
      %v3871 = vmul.f32 %v3825, %v3422
      %v3872 = vmul.f32 %v3829, %v3422
      %v3873 = vmul.f32 %v3833, %v3422
      %v3874 = vmul.f32 %v3837, %v3430
      %v3875 = vmul.f32 %v3841, %v3430
      %v3876 = vmul.f32 %v3845, %v3430
      %v3877 = vmul.f32 %v3849, %v3430
      %v3878 = vmul.f32 %v3853, %v3430
      %v3879 = vmul.f32 %v3857, %v3430
      %v3880 = vmul.f32 %v3861, %v3430
      %v3881 = vmul.f32 %v3865, %v3430
      %v3882 = vadd.f32 %v3786, %v3866
      %v3883 = vadd.f32 %v3787, %v3867
      %v3884 = vadd.f32 %v3788, %v3868
      %v3885 = vadd.f32 %v3789, %v3869
      %v3886 = vadd.f32 %v3790, %v3870
      %v3887 = vadd.f32 %v3791, %v3871
      %v3888 = vadd.f32 %v3792, %v3872
      %v3889 = vadd.f32 %v3793, %v3873
      %v3890 = vadd.f32 %v3794, %v3874
      %v3891 = vadd.f32 %v3795, %v3875
      %v3892 = vadd.f32 %v3796, %v3876
      %v3893 = vadd.f32 %v3797, %v3877
      %v3894 = vadd.f32 %v3798, %v3878
      %v3895 = vadd.f32 %v3799, %v3879
      %v3896 = vadd.f32 %v3800, %v3880
      %v3897 = vadd.f32 %v3801, %v3881
      %v3898 = vlaneseq
      %v3899 = vshrl.u32 %v3898, 7
      %v3900 = vsub.s32 5, %v3899
      %v3901 = vrot.slane %v3418, %v3900
      %v3902 = vlaneseq
      %v3903 = vshrl.u32 %v3902, 7
      %v3904 = vsub.s32 5, %v3903
      %v3905 = vrot.slane %v3419, %v3904
      %v3906 = vlaneseq
      %v3907 = vshrl.u32 %v3906, 7
      %v3908 = vsub.s32 5, %v3907
      %v3909 = vrot.slane %v3420, %v3908
      %v3910 = vlaneseq
      %v3911 = vshrl.u32 %v3910, 7
      %v3912 = vsub.s32 5, %v3911
      %v3913 = vrot.slane %v3421, %v3912
      %v3914 = vlaneseq
      %v3915 = vshrl.u32 %v3914, 7
      %v3916 = vsub.s32 5, %v3915
      %v3917 = vrot.slane %v3422, %v3916
      %v3918 = vlaneseq
      %v3919 = vshrl.u32 %v3918, 7
      %v3920 = vsub.s32 5, %v3919
      %v3921 = vrot.slane %v3423, %v3920
      %v3922 = vlaneseq
      %v3923 = vshrl.u32 %v3922, 7
      %v3924 = vsub.s32 5, %v3923
      %v3925 = vrot.slane %v3424, %v3924
      %v3926 = vlaneseq
      %v3927 = vshrl.u32 %v3926, 7
      %v3928 = vsub.s32 5, %v3927
      %v3929 = vrot.slane %v3425, %v3928
      %v3930 = vlaneseq
      %v3931 = vshrl.u32 %v3930, 7
      %v3932 = vsub.s32 5, %v3931
      %v3933 = vrot.slane %v3426, %v3932
      %v3934 = vlaneseq
      %v3935 = vshrl.u32 %v3934, 7
      %v3936 = vsub.s32 5, %v3935
      %v3937 = vrot.slane %v3427, %v3936
      %v3938 = vlaneseq
      %v3939 = vshrl.u32 %v3938, 7
      %v3940 = vsub.s32 5, %v3939
      %v3941 = vrot.slane %v3428, %v3940
      %v3942 = vlaneseq
      %v3943 = vshrl.u32 %v3942, 7
      %v3944 = vsub.s32 5, %v3943
      %v3945 = vrot.slane %v3429, %v3944
      %v3946 = vlaneseq
      %v3947 = vshrl.u32 %v3946, 7
      %v3948 = vsub.s32 5, %v3947
      %v3949 = vrot.slane %v3430, %v3948
      %v3950 = vlaneseq
      %v3951 = vshrl.u32 %v3950, 7
      %v3952 = vsub.s32 5, %v3951
      %v3953 = vrot.slane %v3431, %v3952
      %v3954 = vlaneseq
      %v3955 = vshrl.u32 %v3954, 7
      %v3956 = vsub.s32 5, %v3955
      %v3957 = vrot.slane %v3432, %v3956
      %v3958 = vlaneseq
      %v3959 = vshrl.u32 %v3958, 7
      %v3960 = vsub.s32 5, %v3959
      %v3961 = vrot.slane %v3433, %v3960
      %v3962 = vmul.f32 %v3901, %v3423
      %v3963 = vmul.f32 %v3905, %v3423
      %v3964 = vmul.f32 %v3909, %v3423
      %v3965 = vmul.f32 %v3913, %v3423
      %v3966 = vmul.f32 %v3917, %v3423
      %v3967 = vmul.f32 %v3921, %v3423
      %v3968 = vmul.f32 %v3925, %v3423
      %v3969 = vmul.f32 %v3929, %v3423
      %v3970 = vmul.f32 %v3933, %v3431
      %v3971 = vmul.f32 %v3937, %v3431
      %v3972 = vmul.f32 %v3941, %v3431
      %v3973 = vmul.f32 %v3945, %v3431
      %v3974 = vmul.f32 %v3949, %v3431
      %v3975 = vmul.f32 %v3953, %v3431
      %v3976 = vmul.f32 %v3957, %v3431
      %v3977 = vmul.f32 %v3961, %v3431
      %v3978 = vadd.f32 %v3882, %v3962
      %v3979 = vadd.f32 %v3883, %v3963
      %v3980 = vadd.f32 %v3884, %v3964
      %v3981 = vadd.f32 %v3885, %v3965
      %v3982 = vadd.f32 %v3886, %v3966
      %v3983 = vadd.f32 %v3887, %v3967
      %v3984 = vadd.f32 %v3888, %v3968
      %v3985 = vadd.f32 %v3889, %v3969
      %v3986 = vadd.f32 %v3890, %v3970
      %v3987 = vadd.f32 %v3891, %v3971
      %v3988 = vadd.f32 %v3892, %v3972
      %v3989 = vadd.f32 %v3893, %v3973
      %v3990 = vadd.f32 %v3894, %v3974
      %v3991 = vadd.f32 %v3895, %v3975
      %v3992 = vadd.f32 %v3896, %v3976
      %v3993 = vadd.f32 %v3897, %v3977
      %v3994 = vlaneseq
      %v3995 = vshrl.u32 %v3994, 7
      %v3996 = vsub.s32 6, %v3995
      %v3997 = vrot.slane %v3418, %v3996
      %v3998 = vlaneseq
      %v3999 = vshrl.u32 %v3998, 7
      %v4000 = vsub.s32 6, %v3999
      %v4001 = vrot.slane %v3419, %v4000
      %v4002 = vlaneseq
      %v4003 = vshrl.u32 %v4002, 7
      %v4004 = vsub.s32 6, %v4003
      %v4005 = vrot.slane %v3420, %v4004
      %v4006 = vlaneseq
      %v4007 = vshrl.u32 %v4006, 7
      %v4008 = vsub.s32 6, %v4007
      %v4009 = vrot.slane %v3421, %v4008
      %v4010 = vlaneseq
      %v4011 = vshrl.u32 %v4010, 7
      %v4012 = vsub.s32 6, %v4011
      %v4013 = vrot.slane %v3422, %v4012
      %v4014 = vlaneseq
      %v4015 = vshrl.u32 %v4014, 7
      %v4016 = vsub.s32 6, %v4015
      %v4017 = vrot.slane %v3423, %v4016
      %v4018 = vlaneseq
      %v4019 = vshrl.u32 %v4018, 7
      %v4020 = vsub.s32 6, %v4019
      %v4021 = vrot.slane %v3424, %v4020
      %v4022 = vlaneseq
      %v4023 = vshrl.u32 %v4022, 7
      %v4024 = vsub.s32 6, %v4023
      %v4025 = vrot.slane %v3425, %v4024
      %v4026 = vlaneseq
      %v4027 = vshrl.u32 %v4026, 7
      %v4028 = vsub.s32 6, %v4027
      %v4029 = vrot.slane %v3426, %v4028
      %v4030 = vlaneseq
      %v4031 = vshrl.u32 %v4030, 7
      %v4032 = vsub.s32 6, %v4031
      %v4033 = vrot.slane %v3427, %v4032
      %v4034 = vlaneseq
      %v4035 = vshrl.u32 %v4034, 7
      %v4036 = vsub.s32 6, %v4035
      %v4037 = vrot.slane %v3428, %v4036
      %v4038 = vlaneseq
      %v4039 = vshrl.u32 %v4038, 7
      %v4040 = vsub.s32 6, %v4039
      %v4041 = vrot.slane %v3429, %v4040
      %v4042 = vlaneseq
      %v4043 = vshrl.u32 %v4042, 7
      %v4044 = vsub.s32 6, %v4043
      %v4045 = vrot.slane %v3430, %v4044
      %v4046 = vlaneseq
      %v4047 = vshrl.u32 %v4046, 7
      %v4048 = vsub.s32 6, %v4047
      %v4049 = vrot.slane %v3431, %v4048
      %v4050 = vlaneseq
      %v4051 = vshrl.u32 %v4050, 7
      %v4052 = vsub.s32 6, %v4051
      %v4053 = vrot.slane %v3432, %v4052
      %v4054 = vlaneseq
      %v4055 = vshrl.u32 %v4054, 7
      %v4056 = vsub.s32 6, %v4055
      %v4057 = vrot.slane %v3433, %v4056
      %v4058 = vmul.f32 %v3997, %v3424
      %v4059 = vmul.f32 %v4001, %v3424
      %v4060 = vmul.f32 %v4005, %v3424
      %v4061 = vmul.f32 %v4009, %v3424
      %v4062 = vmul.f32 %v4013, %v3424
      %v4063 = vmul.f32 %v4017, %v3424
      %v4064 = vmul.f32 %v4021, %v3424
      %v4065 = vmul.f32 %v4025, %v3424
      %v4066 = vmul.f32 %v4029, %v3432
      %v4067 = vmul.f32 %v4033, %v3432
      %v4068 = vmul.f32 %v4037, %v3432
      %v4069 = vmul.f32 %v4041, %v3432
      %v4070 = vmul.f32 %v4045, %v3432
      %v4071 = vmul.f32 %v4049, %v3432
      %v4072 = vmul.f32 %v4053, %v3432
      %v4073 = vmul.f32 %v4057, %v3432
      %v4074 = vadd.f32 %v3978, %v4058
      %v4075 = vadd.f32 %v3979, %v4059
      %v4076 = vadd.f32 %v3980, %v4060
      %v4077 = vadd.f32 %v3981, %v4061
      %v4078 = vadd.f32 %v3982, %v4062
      %v4079 = vadd.f32 %v3983, %v4063
      %v4080 = vadd.f32 %v3984, %v4064
      %v4081 = vadd.f32 %v3985, %v4065
      %v4082 = vadd.f32 %v3986, %v4066
      %v4083 = vadd.f32 %v3987, %v4067
      %v4084 = vadd.f32 %v3988, %v4068
      %v4085 = vadd.f32 %v3989, %v4069
      %v4086 = vadd.f32 %v3990, %v4070
      %v4087 = vadd.f32 %v3991, %v4071
      %v4088 = vadd.f32 %v3992, %v4072
      %v4089 = vadd.f32 %v3993, %v4073
      %v4090 = vlaneseq
      %v4091 = vshrl.u32 %v4090, 7
      %v4092 = vsub.s32 7, %v4091
      %v4093 = vrot.slane %v3418, %v4092
      %v4094 = vlaneseq
      %v4095 = vshrl.u32 %v4094, 7
      %v4096 = vsub.s32 7, %v4095
      %v4097 = vrot.slane %v3419, %v4096
      %v4098 = vlaneseq
      %v4099 = vshrl.u32 %v4098, 7
      %v4100 = vsub.s32 7, %v4099
      %v4101 = vrot.slane %v3420, %v4100
      %v4102 = vlaneseq
      %v4103 = vshrl.u32 %v4102, 7
      %v4104 = vsub.s32 7, %v4103
      %v4105 = vrot.slane %v3421, %v4104
      %v4106 = vlaneseq
      %v4107 = vshrl.u32 %v4106, 7
      %v4108 = vsub.s32 7, %v4107
      %v4109 = vrot.slane %v3422, %v4108
      %v4110 = vlaneseq
      %v4111 = vshrl.u32 %v4110, 7
      %v4112 = vsub.s32 7, %v4111
      %v4113 = vrot.slane %v3423, %v4112
      %v4114 = vlaneseq
      %v4115 = vshrl.u32 %v4114, 7
      %v4116 = vsub.s32 7, %v4115
      %v4117 = vrot.slane %v3424, %v4116
      %v4118 = vlaneseq
      %v4119 = vshrl.u32 %v4118, 7
      %v4120 = vsub.s32 7, %v4119
      %v4121 = vrot.slane %v3425, %v4120
      %v4122 = vlaneseq
      %v4123 = vshrl.u32 %v4122, 7
      %v4124 = vsub.s32 7, %v4123
      %v4125 = vrot.slane %v3426, %v4124
      %v4126 = vlaneseq
      %v4127 = vshrl.u32 %v4126, 7
      %v4128 = vsub.s32 7, %v4127
      %v4129 = vrot.slane %v3427, %v4128
      %v4130 = vlaneseq
      %v4131 = vshrl.u32 %v4130, 7
      %v4132 = vsub.s32 7, %v4131
      %v4133 = vrot.slane %v3428, %v4132
      %v4134 = vlaneseq
      %v4135 = vshrl.u32 %v4134, 7
      %v4136 = vsub.s32 7, %v4135
      %v4137 = vrot.slane %v3429, %v4136
      %v4138 = vlaneseq
      %v4139 = vshrl.u32 %v4138, 7
      %v4140 = vsub.s32 7, %v4139
      %v4141 = vrot.slane %v3430, %v4140
      %v4142 = vlaneseq
      %v4143 = vshrl.u32 %v4142, 7
      %v4144 = vsub.s32 7, %v4143
      %v4145 = vrot.slane %v3431, %v4144
      %v4146 = vlaneseq
      %v4147 = vshrl.u32 %v4146, 7
      %v4148 = vsub.s32 7, %v4147
      %v4149 = vrot.slane %v3432, %v4148
      %v4150 = vlaneseq
      %v4151 = vshrl.u32 %v4150, 7
      %v4152 = vsub.s32 7, %v4151
      %v4153 = vrot.slane %v3433, %v4152
      %v4154 = vmul.f32 %v4093, %v3425
      %v4155 = vmul.f32 %v4097, %v3425
      %v4156 = vmul.f32 %v4101, %v3425
      %v4157 = vmul.f32 %v4105, %v3425
      %v4158 = vmul.f32 %v4109, %v3425
      %v4159 = vmul.f32 %v4113, %v3425
      %v4160 = vmul.f32 %v4117, %v3425
      %v4161 = vmul.f32 %v4121, %v3425
      %v4162 = vmul.f32 %v4125, %v3433
      %v4163 = vmul.f32 %v4129, %v3433
      %v4164 = vmul.f32 %v4133, %v3433
      %v4165 = vmul.f32 %v4137, %v3433
      %v4166 = vmul.f32 %v4141, %v3433
      %v4167 = vmul.f32 %v4145, %v3433
      %v4168 = vmul.f32 %v4149, %v3433
      %v4169 = vmul.f32 %v4153, %v3433
      %v4170 = vadd.f32 %v4074, %v4154
      %v4171 = vadd.f32 %v4075, %v4155
      %v4172 = vadd.f32 %v4076, %v4156
      %v4173 = vadd.f32 %v4077, %v4157
      %v4174 = vadd.f32 %v4078, %v4158
      %v4175 = vadd.f32 %v4079, %v4159
      %v4176 = vadd.f32 %v4080, %v4160
      %v4177 = vadd.f32 %v4081, %v4161
      %v4178 = vadd.f32 %v4082, %v4162
      %v4179 = vadd.f32 %v4083, %v4163
      %v4180 = vadd.f32 %v4084, %v4164
      %v4181 = vadd.f32 %v4085, %v4165
      %v4182 = vadd.f32 %v4086, %v4166
      %v4183 = vadd.f32 %v4087, %v4167
      %v4184 = vadd.f32 %v4088, %v4168
      %v4185 = vadd.f32 %v4089, %v4169
      %v4186 = vstv %s3413
      %vm4187 = vcmp.lt.s32.totalorder %v4186, %v281
      %vm4188 = vcmp.lt.s32.totalorder %v4186, %v282
      %v4189 = vsel %vm4187, 1, 0
      %v4190 = vsel %vm4188, 1, 0
      %vm4191 = vcmp.eq.s32.totalorder %v4189, 1
      %vm4192 = vcmp.eq.s32.totalorder %v4190, 1
      %v4193 = vsel %vm4191, %v4170, %v3418
      %v4194 = vsel %vm4191, %v4171, %v3419
      %v4195 = vsel %vm4191, %v4172, %v3420
      %v4196 = vsel %vm4191, %v4173, %v3421
      %v4197 = vsel %vm4191, %v4174, %v3422
      %v4198 = vsel %vm4191, %v4175, %v3423
      %v4199 = vsel %vm4191, %v4176, %v3424
      %v4200 = vsel %vm4191, %v4177, %v3425
      %v4201 = vsel %vm4192, %v4178, %v3426
      %v4202 = vsel %vm4192, %v4179, %v3427
      %v4203 = vsel %vm4192, %v4180, %v3428
      %v4204 = vsel %vm4192, %v4181, %v3429
      %v4205 = vsel %vm4192, %v4182, %v3430
      %v4206 = vsel %vm4192, %v4183, %v3431
      %v4207 = vsel %vm4192, %v4184, %v3432
      %v4208 = vsel %vm4192, %v4185, %v3433
    $region14: #{tpu_custom_call.1} parent=1 // loop_footer
      %s3415 = sadd.s32 %s3413, 1
    $region15: #{tpu_custom_call.1} parent=1 // loop_footer_branch
      %3412 = sbr.rel target = $region11
    $region16: #{tpu_custom_call.1} parent=1 // loop_exit
      _
    %4209 = vst [vmem:[#allocation4] sm:$0xff] %v3418
    %4210 = vst [vmem:[#allocation4 + $0x8] sm:$0xff] %v3419
    %4211 = vst [vmem:[#allocation4 + $0x10] sm:$0xff] %v3420
    %4212 = vst [vmem:[#allocation4 + $0x18] sm:$0xff] %v3421
    %4213 = vst [vmem:[#allocation4 + $0x20] sm:$0xff] %v3422
    %4214 = vst [vmem:[#allocation4 + $0x28] sm:$0xff] %v3423
    %4215 = vst [vmem:[#allocation4 + $0x30] sm:$0xff] %v3424
    %4216 = vst [vmem:[#allocation4 + $0x38] sm:$0xff] %v3425
    %4217 = vst [vmem:[#allocation4 + $0x40] sm:$0xff] %v3426
    %4218 = vst [vmem:[#allocation4 + $0x48] sm:$0xff] %v3427
    %4219 = vst [vmem:[#allocation4 + $0x50] sm:$0xff] %v3428
    %4220 = vst [vmem:[#allocation4 + $0x58] sm:$0xff] %v3429
    %4221 = vst [vmem:[#allocation4 + $0x60] sm:$0xff] %v3430
    %4222 = vst [vmem:[#allocation4 + $0x68] sm:$0xff] %v3431
    %4223 = vst [vmem:[#allocation4 + $0x70] sm:$0xff] %v3432
    %4224 = vst [vmem:[#allocation4 + $0x78] sm:$0xff] %v3433
    // Predicated region
    $region17: #{tpu_custom_call.1} parent=1 // pred_check
      _
    $region18: #{tpu_custom_call.1} parent=1 // pred_check_branch
      %4226 = sbr.rel (0) target = $region20
    $region19: #{tpu_custom_call.1} parent=1 // pred_region
      %s4228 = ssub.s32 2048, 2048
      %4229 = vsyncadd [#allocation5], %s4228
      %s4230 = sshll.u32 [#allocation4], 4
      %s4231 = int_to_ptr.vmem [resolvable:$true] %s4230
      %4236 = dma.vmem_to_hbm [thread:$0]  %s4231, 2048, %s3, [#allocation5], 128, 128, 8
    $region20: #{tpu_custom_call.1} parent=1 // pred_fallthru
      _
    // Predicated region
    $region21: #{tpu_custom_call.1} parent=1 // pred_check
      _
    $region22: #{tpu_custom_call.1} parent=1 // pred_check_branch
      %4238 = sbr.rel (0) target = $region24
    $region23: #{tpu_custom_call.1} parent=1 // pred_region
      %4239 = dma.done [#allocation5], 2048
    $region24: #{tpu_custom_call.1} parent=1 // pred_fallthru
      _
    %4240 = vsyncpa [#allocation5], 1

</llo_original>
